<compile_context>
chip_gen: v7x
topology: tpu7x:2x2x1
jax: 0.10.0
libtpu: 0.0.40
codegen_flags: <defaults>
</compile_context>

<pallas_src>
import functools

import jax
import jax.numpy as jnp
from jax.experimental import pallas as pl
from jax.experimental.pallas import tpu as pltpu

BN_EPS = 1e-5
LANE = 128
VMEM_LIMIT = 32 * 1024 * 1024   # explicit scoped-VMEM budget (fits v5e/v6e/v7x)


def _round_up(x, m):
    return ((x + m - 1) // m) * m


# --------------------------------------------------------------------------
# Fused kernel: all GIN layers + ReLU + BatchNorm1d + global_add_pool + concat
# --------------------------------------------------------------------------
def gconv_fused_kernel(adj_ref, x_ref, pool_ref, *refs,
                       num_layers, hidden_dim, num_graphs, out_lanes):
    n_par = 6 * num_layers
    param_refs = refs[:n_par]
    z_out_ref, g_out_ref = refs[n_par], refs[n_par + 1]

    adj = adj_ref[...]                    # bf16 (N, N); loaded once, reused by all layers
    z = x_ref[...]                        # f32 (N, F) -> (N, H) after layer 1
    n = z.shape[0]
    inv_n = 1.0 / n

    z_cols = []
    g_cols = []
    for l in range(num_layers):           # static unroll: layer count is trace-time
        w1 = param_refs[6 * l + 0][...]
        b1 = param_refs[6 * l + 1][...]
        w2 = param_refs[6 * l + 2][...]
        b2 = param_refs[6 * l + 3][...]
        gamma = param_refs[6 * l + 4][...]
        beta = param_refs[6 * l + 5][...]

        # GIN aggregation with the first Linear hoisted out of the neighbor sum:
        #   (adj_hat @ z) @ w1 == adj_hat @ (z @ w1)
        # so the big N x N matmul has H output columns and runs natively in
        # bf16 on the MXU (adj_hat entries are exact in bf16), f32 accumulate.
        u = jnp.dot(z, w1, preferred_element_type=jnp.float32)            # (N, H) f32
        agg = jnp.dot(adj, u.astype(jnp.bfloat16),
                      preferred_element_type=jnp.float32)                 # (N, H) f32

        # GIN MLP tail (inner ReLU, second Linear) + outer ReLU.
        y1 = jnp.maximum(agg + b1, 0.0)
        y2 = jnp.dot(y1, w2, preferred_element_type=jnp.float32) + b2
        y = jnp.maximum(y2, 0.0)

        # BatchNorm1d, training-mode batch statistics, biased variance,
        # two-pass (mean, then centered sum of squares) to avoid cancellation.
        mean = jnp.sum(y, axis=0, keepdims=True) * inv_n
        d = y - mean
        var = jnp.sum(d * d, axis=0, keepdims=True) * inv_n
        zn = d * (gamma * jax.lax.rsqrt(var + BN_EPS)) + beta
        z = zn
        z_cols.append(zn)

        # global_add_pool as masked VPU/XLU reductions (no MXU, no dtype cast):
        # pool[:, g] is the 0/1 membership column of graph g (static loop, B small).
        layer_g = [
            jnp.sum(zn * pool_ref[:, g:g + 1], axis=0, keepdims=True)     # (1, H)
            for g in range(num_graphs)
        ]
        g_cols.append(jnp.concatenate(layer_g, axis=0))                   # (B, H)

    # Assemble lane-dense (multiple-of-128-lane) slabs in VMEM and store once.
    pad = out_lanes - num_layers * hidden_dim
    if pad:
        z_cols = z_cols + [jnp.zeros((n, pad), jnp.float32)]
        g_cols = g_cols + [jnp.zeros((num_graphs, pad), jnp.float32)]
    z_out_ref[...] = jnp.concatenate(z_cols, axis=1)
    g_out_ref[...] = jnp.concatenate(g_cols, axis=1)


def gconv_forward(x, adj_hat, pool, params):
    """Fused GConv forward. adj_hat = A + I in bf16, pool = one-hot (N, B)."""
    n, _ = x.shape
    num_graphs = pool.shape[1]
    num_layers = len(params)
    hidden_dim = params[0][2].shape[0]            # w2 is (H, H)
    out_dim = num_layers * hidden_dim
    out_lanes = _round_up(out_dim, LANE)

    def full_spec(shape):
        nd = len(shape)
        return pl.BlockSpec(shape, lambda i: (0,) * nd)

    flat_params = [p for layer in params for p in layer]
    in_specs = [full_spec(adj_hat.shape), full_spec(x.shape), full_spec(pool.shape)]
    in_specs += [full_spec(p.shape) for p in flat_params]

    kernel = functools.partial(
        gconv_fused_kernel, num_layers=num_layers, hidden_dim=hidden_dim,
        num_graphs=num_graphs, out_lanes=out_lanes)

    z_pad, g_pad = pl.pallas_call(
        kernel,
        grid=(1,),
        in_specs=in_specs,
        out_specs=(full_spec((n, out_lanes)),
                   full_spec((num_graphs, out_lanes))),
        out_shape=(jax.ShapeDtypeStruct((n, out_lanes), jnp.float32),
                   jax.ShapeDtypeStruct((num_graphs, out_lanes), jnp.float32)),
        compiler_params=pltpu.CompilerParams(
            dimension_semantics=("arbitrary",),
            vmem_limit_bytes=VMEM_LIMIT),
    )(adj_hat, x, pool, *flat_params)

    return z_pad[:, :out_dim], g_pad[:, :out_dim]


# --------------------------------------------------------------------------
# Pure-JAX f32 reference matching the PyTorch forward (training-mode BN)
# --------------------------------------------------------------------------
def gconv_reference(x, adj, pool, params):
    zs, gs = [], []
    z = x
    a_hat = adj + jnp.eye(adj.shape[0], dtype=jnp.float32)
    for (w1, b1, w2, b2, gamma, beta) in params:
        h = a_hat @ z                                   # x_i + sum_{j->i} x_j
        y1 = jnp.maximum(h @ w1 + b1, 0.0)
        y = jnp.maximum(y1 @ w2 + b2, 0.0)
        mean = jnp.mean(y, axis=0, keepdims=True)
        var = jnp.mean((y - mean) ** 2, axis=0, keepdims=True)
        z = (y - mean) * jax.lax.rsqrt(var + BN_EPS) * gamma + beta
        zs.append(z)
        gs.append(pool.T @ z)
    return jnp.concatenate(zs, axis=1), jnp.concatenate(gs, axis=1)


def make_params(key, input_dim, hidden_dim, num_layers):
    params = []
    din = input_dim
    for _ in range(num_layers):
        key, k1, k2, k3, k4, k5, k6 = jax.random.split(key, 7)
        w1 = jax.random.normal(k1, (din, hidden_dim), jnp.float32) * 0.1
        b1 = jax.random.normal(k2, (1, hidden_dim), jnp.float32) * 0.1
        w2 = jax.random.normal(k3, (hidden_dim, hidden_dim), jnp.float32) * 0.1
        b2 = jax.random.normal(k4, (1, hidden_dim), jnp.float32) * 0.1
        gamma = 1.0 + 0.1 * jax.random.normal(k5, (1, hidden_dim), jnp.float32)
        beta = 0.1 * jax.random.normal(k6, (1, hidden_dim), jnp.float32)
        params.append((w1, b1, w2, b2, gamma, beta))
        din = hidden_dim
    return params


if __name__ == "__main__":
    key = jax.random.PRNGKey(0)

    nodes_per_graph = 128
    num_graphs = 2
    num_nodes = nodes_per_graph * num_graphs      # 256
    input_dim = 8
    hidden_dim = 32
    num_layers = 3

    # Node features.
    key, kx = jax.random.split(key)
    x = jax.random.normal(kx, (num_nodes, input_dim), jnp.float32)

    # edge_index: undirected ring within each graph (source, target).
    src_list, dst_list = [], []
    for gi in range(num_graphs):
        base = gi * nodes_per_graph
        for i in range(nodes_per_graph):
            s, t = base + i, base + (i + 1) % nodes_per_graph
            src_list += [s, t]
            dst_list += [t, s]
    src = jnp.array(src_list, jnp.int32)
    dst = jnp.array(dst_list, jnp.int32)

    # Dense adjacency (reference) and adj_hat = A + I (GIN self-term folded in),
    # stored in bf16 (entries are exact small integers in bf16).
    adj = jnp.zeros((num_nodes, num_nodes), jnp.float32).at[dst, src].add(1.0)
    adj_hat = (adj + jnp.eye(num_nodes, dtype=jnp.float32)).astype(jnp.bfloat16)

    # batch vector -> one-hot membership matrix pool[num_nodes, num_graphs].
    batch = jnp.repeat(jnp.arange(num_graphs, dtype=jnp.int32), nodes_per_graph)
    pool = jax.nn.one_hot(batch, num_graphs, dtype=jnp.float32)

    params = make_params(key, input_dim, hidden_dim, num_layers)

    fwd = jax.jit(gconv_forward)
    z, g = fwd(x, adj_hat, pool, params)
    jax.block_until_ready((z, g))

    z_ref, g_ref = gconv_reference(x, adj, pool, params)
    assert z.shape == (num_nodes, hidden_dim * num_layers)
    assert g.shape == (num_graphs, hidden_dim * num_layers)

    # The aggregation matmul runs in bf16 on the MXU, so the kernel matches the
    # pure-f32 reference to bf16-level accuracy (BN amplifies small absolute
    # errors); verify with a relative Frobenius-norm check.
    def rel_err(a, b):
        return float(jnp.linalg.norm(a - b) / jnp.linalg.norm(b))

    assert rel_err(z, z_ref) < 3e-2
    assert rel_err(g, g_ref) < 3e-2

    print("KERNEL_OK")
</pallas_src>

<mosaic_0001>
module attributes {stable_mosaic.version = 11 : i64} {
  func.func @gconv_fused_kernel(%arg0: i32, %arg1: memref<256x256xbf16, #tpu.memory_space<vmem>>, %arg2: memref<256x8xf32, #tpu.memory_space<vmem>>, %arg3: memref<256x2xf32, #tpu.memory_space<vmem>>, %arg4: memref<8x32xf32, #tpu.memory_space<vmem>>, %arg5: memref<1x32xf32, #tpu.memory_space<vmem>>, %arg6: memref<32x32xf32, #tpu.memory_space<vmem>>, %arg7: memref<1x32xf32, #tpu.memory_space<vmem>>, %arg8: memref<1x32xf32, #tpu.memory_space<vmem>>, %arg9: memref<1x32xf32, #tpu.memory_space<vmem>>, %arg10: memref<32x32xf32, #tpu.memory_space<vmem>>, %arg11: memref<1x32xf32, #tpu.memory_space<vmem>>, %arg12: memref<32x32xf32, #tpu.memory_space<vmem>>, %arg13: memref<1x32xf32, #tpu.memory_space<vmem>>, %arg14: memref<1x32xf32, #tpu.memory_space<vmem>>, %arg15: memref<1x32xf32, #tpu.memory_space<vmem>>, %arg16: memref<32x32xf32, #tpu.memory_space<vmem>>, %arg17: memref<1x32xf32, #tpu.memory_space<vmem>>, %arg18: memref<32x32xf32, #tpu.memory_space<vmem>>, %arg19: memref<1x32xf32, #tpu.memory_space<vmem>>, %arg20: memref<1x32xf32, #tpu.memory_space<vmem>>, %arg21: memref<1x32xf32, #tpu.memory_space<vmem>>, %arg22: memref<256x128xf32, #tpu.memory_space<vmem>>, %arg23: memref<2x128xf32, #tpu.memory_space<vmem>>) attributes {dimension_semantics = [#tpu.dimension_semantics<arbitrary>], iteration_bounds = array<i64: 1>, scalar_prefetch = 0 : i64, scratch_operands = 0 : i64, tpu.core_type = #tpu.core_type<tc>, window_params = [{pipeline_mode = #tpu.pipeline_mode<synchronous>, transform_indices = @transform_0, window_bounds = array<i64: 256, 256>}, {pipeline_mode = #tpu.pipeline_mode<synchronous>, transform_indices = @transform_1, window_bounds = array<i64: 256, 8>}, {pipeline_mode = #tpu.pipeline_mode<synchronous>, transform_indices = @transform_2, window_bounds = array<i64: 256, 2>}, {pipeline_mode = #tpu.pipeline_mode<synchronous>, transform_indices = @transform_3, window_bounds = array<i64: 8, 32>}, {pipeline_mode = #tpu.pipeline_mode<synchronous>, transform_indices = @transform_4, window_bounds = array<i64: 1, 32>}, {pipeline_mode = #tpu.pipeline_mode<synchronous>, transform_indices = @transform_5, window_bounds = array<i64: 32, 32>}, {pipeline_mode = #tpu.pipeline_mode<synchronous>, transform_indices = @transform_6, window_bounds = array<i64: 1, 32>}, {pipeline_mode = #tpu.pipeline_mode<synchronous>, transform_indices = @transform_7, window_bounds = array<i64: 1, 32>}, {pipeline_mode = #tpu.pipeline_mode<synchronous>, transform_indices = @transform_8, window_bounds = array<i64: 1, 32>}, {pipeline_mode = #tpu.pipeline_mode<synchronous>, transform_indices = @transform_9, window_bounds = array<i64: 32, 32>}, {pipeline_mode = #tpu.pipeline_mode<synchronous>, transform_indices = @transform_10, window_bounds = array<i64: 1, 32>}, {pipeline_mode = #tpu.pipeline_mode<synchronous>, transform_indices = @transform_11, window_bounds = array<i64: 32, 32>}, {pipeline_mode = #tpu.pipeline_mode<synchronous>, transform_indices = @transform_12, window_bounds = array<i64: 1, 32>}, {pipeline_mode = #tpu.pipeline_mode<synchronous>, transform_indices = @transform_13, window_bounds = array<i64: 1, 32>}, {pipeline_mode = #tpu.pipeline_mode<synchronous>, transform_indices = @transform_14, window_bounds = array<i64: 1, 32>}, {pipeline_mode = #tpu.pipeline_mode<synchronous>, transform_indices = @transform_15, window_bounds = array<i64: 32, 32>}, {pipeline_mode = #tpu.pipeline_mode<synchronous>, transform_indices = @transform_16, window_bounds = array<i64: 1, 32>}, {pipeline_mode = #tpu.pipeline_mode<synchronous>, transform_indices = @transform_17, window_bounds = array<i64: 32, 32>}, {pipeline_mode = #tpu.pipeline_mode<synchronous>, transform_indices = @transform_18, window_bounds = array<i64: 1, 32>}, {pipeline_mode = #tpu.pipeline_mode<synchronous>, transform_indices = @transform_19, window_bounds = array<i64: 1, 32>}, {pipeline_mode = #tpu.pipeline_mode<synchronous>, transform_indices = @transform_20, window_bounds = array<i64: 1, 32>}, {pipeline_mode = #tpu.pipeline_mode<synchronous>, transform_indices = @transform_21, window_bounds = array<i64: 256, 128>}, {pipeline_mode = #tpu.pipeline_mode<synchronous>, transform_indices = @transform_22, window_bounds = array<i64: 2, 128>}]} {
    %c0 = arith.constant 0 : index
    %c0_0 = arith.constant 0 : index
    %0 = vector.load %arg1[%c0, %c0_0] : memref<256x256xbf16, #tpu.memory_space<vmem>>, vector<256x256xbf16>
    %c0_1 = arith.constant 0 : index
    %c0_2 = arith.constant 0 : index
    %1 = vector.load %arg2[%c0_1, %c0_2] : memref<256x8xf32, #tpu.memory_space<vmem>>, vector<256x8xf32>
    %c0_3 = arith.constant 0 : index
    %c0_4 = arith.constant 0 : index
    %2 = vector.load %arg4[%c0_3, %c0_4] : memref<8x32xf32, #tpu.memory_space<vmem>>, vector<8x32xf32>
    %c0_5 = arith.constant 0 : index
    %c0_6 = arith.constant 0 : index
    %3 = vector.load %arg5[%c0_5, %c0_6] : memref<1x32xf32, #tpu.memory_space<vmem>>, vector<1x32xf32>
    %c0_7 = arith.constant 0 : index
    %c0_8 = arith.constant 0 : index
    %4 = vector.load %arg6[%c0_7, %c0_8] : memref<32x32xf32, #tpu.memory_space<vmem>>, vector<32x32xf32>
    %c0_9 = arith.constant 0 : index
    %c0_10 = arith.constant 0 : index
    %5 = vector.load %arg7[%c0_9, %c0_10] : memref<1x32xf32, #tpu.memory_space<vmem>>, vector<1x32xf32>
    %c0_11 = arith.constant 0 : index
    %c0_12 = arith.constant 0 : index
    %6 = vector.load %arg8[%c0_11, %c0_12] : memref<1x32xf32, #tpu.memory_space<vmem>>, vector<1x32xf32>
    %c0_13 = arith.constant 0 : index
    %c0_14 = arith.constant 0 : index
    %7 = vector.load %arg9[%c0_13, %c0_14] : memref<1x32xf32, #tpu.memory_space<vmem>>, vector<1x32xf32>
    %cst = arith.constant dense<0.000000e+00> : vector<256x32xf32>
    %8 = tpu.matmul %1, %2, %cst {dimension_numbers = #tpu.dot_dimension_numbers<[1], [0], [0], [1], [0, 0, 1, 1], [], []>} : vector<256x8xf32>, vector<8x32xf32>, vector<256x32xf32> -> vector<256x32xf32>
    %9 = arith.truncf %8 : vector<256x32xf32> to vector<256x32xbf16>
    %cst_15 = arith.constant dense<0.000000e+00> : vector<256x32xf32>
    %10 = tpu.matmul %0, %9, %cst_15 {dimension_numbers = #tpu.dot_dimension_numbers<[1], [0], [0], [1], [0, 0, 1, 1], [], []>} : vector<256x256xbf16>, vector<256x32xbf16>, vector<256x32xf32> -> vector<256x32xf32>
    %11 = vector.broadcast %3 : vector<1x32xf32> to vector<256x32xf32>
    %12 = arith.addf %10, %11 : vector<256x32xf32>
    %cst_16 = arith.constant 0.000000e+00 : f32
    %13 = vector.broadcast %cst_16 : f32 to vector<256x32xf32>
    %14 = arith.maximumf %12, %13 : vector<256x32xf32>
    %cst_17 = arith.constant dense<0.000000e+00> : vector<256x32xf32>
    %15 = tpu.matmul %14, %4, %cst_17 {dimension_numbers = #tpu.dot_dimension_numbers<[1], [0], [0], [1], [0, 0, 1, 1], [], []>} : vector<256x32xf32>, vector<32x32xf32>, vector<256x32xf32> -> vector<256x32xf32>
    %16 = vector.broadcast %5 : vector<1x32xf32> to vector<256x32xf32>
    %17 = arith.addf %15, %16 : vector<256x32xf32>
    %cst_18 = arith.constant 0.000000e+00 : f32
    %18 = vector.broadcast %cst_18 : f32 to vector<256x32xf32>
    %19 = arith.maximumf %17, %18 : vector<256x32xf32>
    %cst_19 = arith.constant dense<0.000000e+00> : vector<32xf32>
    %20 = vector.multi_reduction <add>, %19, %cst_19 [0] : vector<256x32xf32> to vector<32xf32>
    %21 = vector.shape_cast %20 : vector<32xf32> to vector<1x32xf32>
    %cst_20 = arith.constant 3.906250e-03 : f32
    %22 = vector.broadcast %cst_20 : f32 to vector<1x32xf32>
    %23 = arith.mulf %21, %22 : vector<1x32xf32>
    %24 = vector.broadcast %23 : vector<1x32xf32> to vector<256x32xf32>
    %25 = arith.subf %19, %24 : vector<256x32xf32>
    %26 = arith.mulf %25, %25 : vector<256x32xf32>
    %cst_21 = arith.constant dense<0.000000e+00> : vector<32xf32>
    %27 = vector.multi_reduction <add>, %26, %cst_21 [0] : vector<256x32xf32> to vector<32xf32>
    %28 = vector.shape_cast %27 : vector<32xf32> to vector<1x32xf32>
    %cst_22 = arith.constant 3.906250e-03 : f32
    %29 = vector.broadcast %cst_22 : f32 to vector<1x32xf32>
    %30 = arith.mulf %28, %29 : vector<1x32xf32>
    %cst_23 = arith.constant 9.99999974E-6 : f32
    %31 = vector.broadcast %cst_23 : f32 to vector<1x32xf32>
    %32 = arith.addf %30, %31 : vector<1x32xf32>
    %33 = math.rsqrt %32 : vector<1x32xf32>
    %34 = arith.mulf %6, %33 : vector<1x32xf32>
    %35 = vector.broadcast %34 : vector<1x32xf32> to vector<256x32xf32>
    %36 = arith.mulf %25, %35 : vector<256x32xf32>
    %37 = vector.broadcast %7 : vector<1x32xf32> to vector<256x32xf32>
    %38 = arith.addf %36, %37 : vector<256x32xf32>
    %c0_24 = arith.constant 0 : index
    %c0_25 = arith.constant 0 : index
    %39 = vector.load %arg3[%c0_24, %c0_25] : memref<256x2xf32, #tpu.memory_space<vmem>>, vector<256x1xf32>
    %40 = vector.broadcast %39 : vector<256x1xf32> to vector<256x32xf32>
    %41 = arith.mulf %38, %40 : vector<256x32xf32>
    %cst_26 = arith.constant dense<0.000000e+00> : vector<32xf32>
    %42 = vector.multi_reduction <add>, %41, %cst_26 [0] : vector<256x32xf32> to vector<32xf32>
    %43 = vector.shape_cast %42 : vector<32xf32> to vector<1x32xf32>
    %c0_27 = arith.constant 0 : index
    %c1 = arith.constant 1 : index
    %44 = vector.load %arg3[%c0_27, %c1] : memref<256x2xf32, #tpu.memory_space<vmem>>, vector<256x1xf32>
    %45 = vector.broadcast %44 : vector<256x1xf32> to vector<256x32xf32>
    %46 = arith.mulf %38, %45 : vector<256x32xf32>
    %cst_28 = arith.constant dense<0.000000e+00> : vector<32xf32>
    %47 = vector.multi_reduction <add>, %46, %cst_28 [0] : vector<256x32xf32> to vector<32xf32>
    %48 = vector.shape_cast %47 : vector<32xf32> to vector<1x32xf32>
    %49 = tpu.concatenate %43, %48 in 0 : vector<1x32xf32>, vector<1x32xf32> -> vector<2x32xf32>
    %c0_29 = arith.constant 0 : index
    %c0_30 = arith.constant 0 : index
    %50 = vector.load %arg10[%c0_29, %c0_30] : memref<32x32xf32, #tpu.memory_space<vmem>>, vector<32x32xf32>
    %c0_31 = arith.constant 0 : index
    %c0_32 = arith.constant 0 : index
    %51 = vector.load %arg11[%c0_31, %c0_32] : memref<1x32xf32, #tpu.memory_space<vmem>>, vector<1x32xf32>
    %c0_33 = arith.constant 0 : index
    %c0_34 = arith.constant 0 : index
    %52 = vector.load %arg12[%c0_33, %c0_34] : memref<32x32xf32, #tpu.memory_space<vmem>>, vector<32x32xf32>
    %c0_35 = arith.constant 0 : index
    %c0_36 = arith.constant 0 : index
    %53 = vector.load %arg13[%c0_35, %c0_36] : memref<1x32xf32, #tpu.memory_space<vmem>>, vector<1x32xf32>
    %c0_37 = arith.constant 0 : index
    %c0_38 = arith.constant 0 : index
    %54 = vector.load %arg14[%c0_37, %c0_38] : memref<1x32xf32, #tpu.memory_space<vmem>>, vector<1x32xf32>
    %c0_39 = arith.constant 0 : index
    %c0_40 = arith.constant 0 : index
    %55 = vector.load %arg15[%c0_39, %c0_40] : memref<1x32xf32, #tpu.memory_space<vmem>>, vector<1x32xf32>
    %cst_41 = arith.constant dense<0.000000e+00> : vector<256x32xf32>
    %56 = tpu.matmul %38, %50, %cst_41 {dimension_numbers = #tpu.dot_dimension_numbers<[1], [0], [0], [1], [0, 0, 1, 1], [], []>} : vector<256x32xf32>, vector<32x32xf32>, vector<256x32xf32> -> vector<256x32xf32>
    %57 = arith.truncf %56 : vector<256x32xf32> to vector<256x32xbf16>
    %cst_42 = arith.constant dense<0.000000e+00> : vector<256x32xf32>
    %58 = tpu.matmul %0, %57, %cst_42 {dimension_numbers = #tpu.dot_dimension_numbers<[1], [0], [0], [1], [0, 0, 1, 1], [], []>} : vector<256x256xbf16>, vector<256x32xbf16>, vector<256x32xf32> -> vector<256x32xf32>
    %59 = vector.broadcast %51 : vector<1x32xf32> to vector<256x32xf32>
    %60 = arith.addf %58, %59 : vector<256x32xf32>
    %cst_43 = arith.constant 0.000000e+00 : f32
    %61 = vector.broadcast %cst_43 : f32 to vector<256x32xf32>
    %62 = arith.maximumf %60, %61 : vector<256x32xf32>
    %cst_44 = arith.constant dense<0.000000e+00> : vector<256x32xf32>
    %63 = tpu.matmul %62, %52, %cst_44 {dimension_numbers = #tpu.dot_dimension_numbers<[1], [0], [0], [1], [0, 0, 1, 1], [], []>} : vector<256x32xf32>, vector<32x32xf32>, vector<256x32xf32> -> vector<256x32xf32>
    %64 = vector.broadcast %53 : vector<1x32xf32> to vector<256x32xf32>
    %65 = arith.addf %63, %64 : vector<256x32xf32>
    %cst_45 = arith.constant 0.000000e+00 : f32
    %66 = vector.broadcast %cst_45 : f32 to vector<256x32xf32>
    %67 = arith.maximumf %65, %66 : vector<256x32xf32>
    %cst_46 = arith.constant dense<0.000000e+00> : vector<32xf32>
    %68 = vector.multi_reduction <add>, %67, %cst_46 [0] : vector<256x32xf32> to vector<32xf32>
    %69 = vector.shape_cast %68 : vector<32xf32> to vector<1x32xf32>
    %cst_47 = arith.constant 3.906250e-03 : f32
    %70 = vector.broadcast %cst_47 : f32 to vector<1x32xf32>
    %71 = arith.mulf %69, %70 : vector<1x32xf32>
    %72 = vector.broadcast %71 : vector<1x32xf32> to vector<256x32xf32>
    %73 = arith.subf %67, %72 : vector<256x32xf32>
    %74 = arith.mulf %73, %73 : vector<256x32xf32>
    %cst_48 = arith.constant dense<0.000000e+00> : vector<32xf32>
    %75 = vector.multi_reduction <add>, %74, %cst_48 [0] : vector<256x32xf32> to vector<32xf32>
    %76 = vector.shape_cast %75 : vector<32xf32> to vector<1x32xf32>
    %cst_49 = arith.constant 3.906250e-03 : f32
    %77 = vector.broadcast %cst_49 : f32 to vector<1x32xf32>
    %78 = arith.mulf %76, %77 : vector<1x32xf32>
    %cst_50 = arith.constant 9.99999974E-6 : f32
    %79 = vector.broadcast %cst_50 : f32 to vector<1x32xf32>
    %80 = arith.addf %78, %79 : vector<1x32xf32>
    %81 = math.rsqrt %80 : vector<1x32xf32>
    %82 = arith.mulf %54, %81 : vector<1x32xf32>
    %83 = vector.broadcast %82 : vector<1x32xf32> to vector<256x32xf32>
    %84 = arith.mulf %73, %83 : vector<256x32xf32>
    %85 = vector.broadcast %55 : vector<1x32xf32> to vector<256x32xf32>
    %86 = arith.addf %84, %85 : vector<256x32xf32>
    %c0_51 = arith.constant 0 : index
    %c0_52 = arith.constant 0 : index
    %87 = vector.load %arg3[%c0_51, %c0_52] : memref<256x2xf32, #tpu.memory_space<vmem>>, vector<256x1xf32>
    %88 = vector.broadcast %87 : vector<256x1xf32> to vector<256x32xf32>
    %89 = arith.mulf %86, %88 : vector<256x32xf32>
    %cst_53 = arith.constant dense<0.000000e+00> : vector<32xf32>
    %90 = vector.multi_reduction <add>, %89, %cst_53 [0] : vector<256x32xf32> to vector<32xf32>
    %91 = vector.shape_cast %90 : vector<32xf32> to vector<1x32xf32>
    %c0_54 = arith.constant 0 : index
    %c1_55 = arith.constant 1 : index
    %92 = vector.load %arg3[%c0_54, %c1_55] : memref<256x2xf32, #tpu.memory_space<vmem>>, vector<256x1xf32>
    %93 = vector.broadcast %92 : vector<256x1xf32> to vector<256x32xf32>
    %94 = arith.mulf %86, %93 : vector<256x32xf32>
    %cst_56 = arith.constant dense<0.000000e+00> : vector<32xf32>
    %95 = vector.multi_reduction <add>, %94, %cst_56 [0] : vector<256x32xf32> to vector<32xf32>
    %96 = vector.shape_cast %95 : vector<32xf32> to vector<1x32xf32>
    %97 = tpu.concatenate %91, %96 in 0 : vector<1x32xf32>, vector<1x32xf32> -> vector<2x32xf32>
    %c0_57 = arith.constant 0 : index
    %c0_58 = arith.constant 0 : index
    %98 = vector.load %arg16[%c0_57, %c0_58] : memref<32x32xf32, #tpu.memory_space<vmem>>, vector<32x32xf32>
    %c0_59 = arith.constant 0 : index
    %c0_60 = arith.constant 0 : index
    %99 = vector.load %arg17[%c0_59, %c0_60] : memref<1x32xf32, #tpu.memory_space<vmem>>, vector<1x32xf32>
    %c0_61 = arith.constant 0 : index
    %c0_62 = arith.constant 0 : index
    %100 = vector.load %arg18[%c0_61, %c0_62] : memref<32x32xf32, #tpu.memory_space<vmem>>, vector<32x32xf32>
    %c0_63 = arith.constant 0 : index
    %c0_64 = arith.constant 0 : index
    %101 = vector.load %arg19[%c0_63, %c0_64] : memref<1x32xf32, #tpu.memory_space<vmem>>, vector<1x32xf32>
    %c0_65 = arith.constant 0 : index
    %c0_66 = arith.constant 0 : index
    %102 = vector.load %arg20[%c0_65, %c0_66] : memref<1x32xf32, #tpu.memory_space<vmem>>, vector<1x32xf32>
    %c0_67 = arith.constant 0 : index
    %c0_68 = arith.constant 0 : index
    %103 = vector.load %arg21[%c0_67, %c0_68] : memref<1x32xf32, #tpu.memory_space<vmem>>, vector<1x32xf32>
    %cst_69 = arith.constant dense<0.000000e+00> : vector<256x32xf32>
    %104 = tpu.matmul %86, %98, %cst_69 {dimension_numbers = #tpu.dot_dimension_numbers<[1], [0], [0], [1], [0, 0, 1, 1], [], []>} : vector<256x32xf32>, vector<32x32xf32>, vector<256x32xf32> -> vector<256x32xf32>
    %105 = arith.truncf %104 : vector<256x32xf32> to vector<256x32xbf16>
    %cst_70 = arith.constant dense<0.000000e+00> : vector<256x32xf32>
    %106 = tpu.matmul %0, %105, %cst_70 {dimension_numbers = #tpu.dot_dimension_numbers<[1], [0], [0], [1], [0, 0, 1, 1], [], []>} : vector<256x256xbf16>, vector<256x32xbf16>, vector<256x32xf32> -> vector<256x32xf32>
    %107 = vector.broadcast %99 : vector<1x32xf32> to vector<256x32xf32>
    %108 = arith.addf %106, %107 : vector<256x32xf32>
    %cst_71 = arith.constant 0.000000e+00 : f32
    %109 = vector.broadcast %cst_71 : f32 to vector<256x32xf32>
    %110 = arith.maximumf %108, %109 : vector<256x32xf32>
    %cst_72 = arith.constant dense<0.000000e+00> : vector<256x32xf32>
    %111 = tpu.matmul %110, %100, %cst_72 {dimension_numbers = #tpu.dot_dimension_numbers<[1], [0], [0], [1], [0, 0, 1, 1], [], []>} : vector<256x32xf32>, vector<32x32xf32>, vector<256x32xf32> -> vector<256x32xf32>
    %112 = vector.broadcast %101 : vector<1x32xf32> to vector<256x32xf32>
    %113 = arith.addf %111, %112 : vector<256x32xf32>
    %cst_73 = arith.constant 0.000000e+00 : f32
    %114 = vector.broadcast %cst_73 : f32 to vector<256x32xf32>
    %115 = arith.maximumf %113, %114 : vector<256x32xf32>
    %cst_74 = arith.constant dense<0.000000e+00> : vector<32xf32>
    %116 = vector.multi_reduction <add>, %115, %cst_74 [0] : vector<256x32xf32> to vector<32xf32>
    %117 = vector.shape_cast %116 : vector<32xf32> to vector<1x32xf32>
    %cst_75 = arith.constant 3.906250e-03 : f32
    %118 = vector.broadcast %cst_75 : f32 to vector<1x32xf32>
    %119 = arith.mulf %117, %118 : vector<1x32xf32>
    %120 = vector.broadcast %119 : vector<1x32xf32> to vector<256x32xf32>
    %121 = arith.subf %115, %120 : vector<256x32xf32>
    %122 = arith.mulf %121, %121 : vector<256x32xf32>
    %cst_76 = arith.constant dense<0.000000e+00> : vector<32xf32>
    %123 = vector.multi_reduction <add>, %122, %cst_76 [0] : vector<256x32xf32> to vector<32xf32>
    %124 = vector.shape_cast %123 : vector<32xf32> to vector<1x32xf32>
    %cst_77 = arith.constant 3.906250e-03 : f32
    %125 = vector.broadcast %cst_77 : f32 to vector<1x32xf32>
    %126 = arith.mulf %124, %125 : vector<1x32xf32>
    %cst_78 = arith.constant 9.99999974E-6 : f32
    %127 = vector.broadcast %cst_78 : f32 to vector<1x32xf32>
    %128 = arith.addf %126, %127 : vector<1x32xf32>
    %129 = math.rsqrt %128 : vector<1x32xf32>
    %130 = arith.mulf %102, %129 : vector<1x32xf32>
    %131 = vector.broadcast %130 : vector<1x32xf32> to vector<256x32xf32>
    %132 = arith.mulf %121, %131 : vector<256x32xf32>
    %133 = vector.broadcast %103 : vector<1x32xf32> to vector<256x32xf32>
    %134 = arith.addf %132, %133 : vector<256x32xf32>
    %c0_79 = arith.constant 0 : index
    %c0_80 = arith.constant 0 : index
    %135 = vector.load %arg3[%c0_79, %c0_80] : memref<256x2xf32, #tpu.memory_space<vmem>>, vector<256x1xf32>
    %136 = vector.broadcast %135 : vector<256x1xf32> to vector<256x32xf32>
    %137 = arith.mulf %134, %136 : vector<256x32xf32>
    %cst_81 = arith.constant dense<0.000000e+00> : vector<32xf32>
    %138 = vector.multi_reduction <add>, %137, %cst_81 [0] : vector<256x32xf32> to vector<32xf32>
    %139 = vector.shape_cast %138 : vector<32xf32> to vector<1x32xf32>
    %c0_82 = arith.constant 0 : index
    %c1_83 = arith.constant 1 : index
    %140 = vector.load %arg3[%c0_82, %c1_83] : memref<256x2xf32, #tpu.memory_space<vmem>>, vector<256x1xf32>
    %141 = vector.broadcast %140 : vector<256x1xf32> to vector<256x32xf32>
    %142 = arith.mulf %134, %141 : vector<256x32xf32>
    %cst_84 = arith.constant dense<0.000000e+00> : vector<32xf32>
    %143 = vector.multi_reduction <add>, %142, %cst_84 [0] : vector<256x32xf32> to vector<32xf32>
    %144 = vector.shape_cast %143 : vector<32xf32> to vector<1x32xf32>
    %145 = tpu.concatenate %139, %144 in 0 : vector<1x32xf32>, vector<1x32xf32> -> vector<2x32xf32>
    %cst_85 = arith.constant 0.000000e+00 : f32
    %146 = vector.broadcast %cst_85 : f32 to vector<256x32xf32>
    %cst_86 = arith.constant 0.000000e+00 : f32
    %147 = vector.broadcast %cst_86 : f32 to vector<2x32xf32>
    %148 = tpu.concatenate %38, %86, %134, %146 in 1 : vector<256x32xf32>, vector<256x32xf32>, vector<256x32xf32>, vector<256x32xf32> -> vector<256x128xf32>
    %c0_87 = arith.constant 0 : index
    %c0_88 = arith.constant 0 : index
    %149 = vector.load %arg22[%c0_87, %c0_88] : memref<256x128xf32, #tpu.memory_space<vmem>>, vector<256x128xf32>
    tpu.vector_store %arg22[%c0_87, %c0_88], %148 {strides = array<i32>} : memref<256x128xf32, #tpu.memory_space<vmem>>, vector<256x128xf32>,
    %150 = tpu.concatenate %49, %97, %145, %147 in 1 : vector<2x32xf32>, vector<2x32xf32>, vector<2x32xf32>, vector<2x32xf32> -> vector<2x128xf32>
    %c0_89 = arith.constant 0 : index
    %c0_90 = arith.constant 0 : index
    %151 = vector.load %arg23[%c0_89, %c0_90] : memref<2x128xf32, #tpu.memory_space<vmem>>, vector<2x128xf32>
    tpu.vector_store %arg23[%c0_89, %c0_90], %150 {strides = array<i32>} : memref<2x128xf32, #tpu.memory_space<vmem>>, vector<2x128xf32>,
    return
  }
  func.func @transform_0(%arg0: i32) -> (i32, i32) {
    %c0_i32 = arith.constant 0 : i32
    %c0_i32_0 = arith.constant 0 : i32
    %c0_i32_1 = arith.constant 0 : i32
    return %c0_i32, %c0_i32_0 : i32, i32
  }
  func.func @transform_1(%arg0: i32) -> (i32, i32) {
    %c0_i32 = arith.constant 0 : i32
    %c0_i32_0 = arith.constant 0 : i32
    %c0_i32_1 = arith.constant 0 : i32
    return %c0_i32, %c0_i32_0 : i32, i32
  }
  func.func @transform_2(%arg0: i32) -> (i32, i32) {
    %c0_i32 = arith.constant 0 : i32
    %c0_i32_0 = arith.constant 0 : i32
    %c0_i32_1 = arith.constant 0 : i32
    return %c0_i32, %c0_i32_0 : i32, i32
  }
  func.func @transform_3(%arg0: i32) -> (i32, i32) {
    %c0_i32 = arith.constant 0 : i32
    %c0_i32_0 = arith.constant 0 : i32
    %c0_i32_1 = arith.constant 0 : i32
    return %c0_i32, %c0_i32_0 : i32, i32
  }
  func.func @transform_4(%arg0: i32) -> (i32, i32) {
    %c0_i32 = arith.constant 0 : i32
    %c0_i32_0 = arith.constant 0 : i32
    %c0_i32_1 = arith.constant 0 : i32
    return %c0_i32, %c0_i32_0 : i32, i32
  }
  func.func @transform_5(%arg0: i32) -> (i32, i32) {
    %c0_i32 = arith.constant 0 : i32
    %c0_i32_0 = arith.constant 0 : i32
    %c0_i32_1 = arith.constant 0 : i32
    return %c0_i32, %c0_i32_0 : i32, i32
  }
  func.func @transform_6(%arg0: i32) -> (i32, i32) {
    %c0_i32 = arith.constant 0 : i32
    %c0_i32_0 = arith.constant 0 : i32
    %c0_i32_1 = arith.constant 0 : i32
    return %c0_i32, %c0_i32_0 : i32, i32
  }
  func.func @transform_7(%arg0: i32) -> (i32, i32) {
    %c0_i32 = arith.constant 0 : i32
    %c0_i32_0 = arith.constant 0 : i32
    %c0_i32_1 = arith.constant 0 : i32
    return %c0_i32, %c0_i32_0 : i32, i32
  }
  func.func @transform_8(%arg0: i32) -> (i32, i32) {
    %c0_i32 = arith.constant 0 : i32
    %c0_i32_0 = arith.constant 0 : i32
    %c0_i32_1 = arith.constant 0 : i32
    return %c0_i32, %c0_i32_0 : i32, i32
  }
  func.func @transform_9(%arg0: i32) -> (i32, i32) {
    %c0_i32 = arith.constant 0 : i32
    %c0_i32_0 = arith.constant 0 : i32
    %c0_i32_1 = arith.constant 0 : i32
    return %c0_i32, %c0_i32_0 : i32, i32
  }
  func.func @transform_10(%arg0: i32) -> (i32, i32) {
    %c0_i32 = arith.constant 0 : i32
    %c0_i32_0 = arith.constant 0 : i32
    %c0_i32_1 = arith.constant 0 : i32
    return %c0_i32, %c0_i32_0 : i32, i32
  }
  func.func @transform_11(%arg0: i32) -> (i32, i32) {
    %c0_i32 = arith.constant 0 : i32
    %c0_i32_0 = arith.constant 0 : i32
    %c0_i32_1 = arith.constant 0 : i32
    return %c0_i32, %c0_i32_0 : i32, i32
  }
  func.func @transform_12(%arg0: i32) -> (i32, i32) {
    %c0_i32 = arith.constant 0 : i32
    %c0_i32_0 = arith.constant 0 : i32
    %c0_i32_1 = arith.constant 0 : i32
    return %c0_i32, %c0_i32_0 : i32, i32
  }
  func.func @transform_13(%arg0: i32) -> (i32, i32) {
    %c0_i32 = arith.constant 0 : i32
    %c0_i32_0 = arith.constant 0 : i32
    %c0_i32_1 = arith.constant 0 : i32
    return %c0_i32, %c0_i32_0 : i32, i32
  }
  func.func @transform_14(%arg0: i32) -> (i32, i32) {
    %c0_i32 = arith.constant 0 : i32
    %c0_i32_0 = arith.constant 0 : i32
    %c0_i32_1 = arith.constant 0 : i32
    return %c0_i32, %c0_i32_0 : i32, i32
  }
  func.func @transform_15(%arg0: i32) -> (i32, i32) {
    %c0_i32 = arith.constant 0 : i32
    %c0_i32_0 = arith.constant 0 : i32
    %c0_i32_1 = arith.constant 0 : i32
    return %c0_i32, %c0_i32_0 : i32, i32
  }
  func.func @transform_16(%arg0: i32) -> (i32, i32) {
    %c0_i32 = arith.constant 0 : i32
    %c0_i32_0 = arith.constant 0 : i32
    %c0_i32_1 = arith.constant 0 : i32
    return %c0_i32, %c0_i32_0 : i32, i32
  }
  func.func @transform_17(%arg0: i32) -> (i32, i32) {
    %c0_i32 = arith.constant 0 : i32
    %c0_i32_0 = arith.constant 0 : i32
    %c0_i32_1 = arith.constant 0 : i32
    return %c0_i32, %c0_i32_0 : i32, i32
  }
  func.func @transform_18(%arg0: i32) -> (i32, i32) {
    %c0_i32 = arith.constant 0 : i32
    %c0_i32_0 = arith.constant 0 : i32
    %c0_i32_1 = arith.constant 0 : i32
    return %c0_i32, %c0_i32_0 : i32, i32
  }
  func.func @transform_19(%arg0: i32) -> (i32, i32) {
    %c0_i32 = arith.constant 0 : i32
    %c0_i32_0 = arith.constant 0 : i32
    %c0_i32_1 = arith.constant 0 : i32
    return %c0_i32, %c0_i32_0 : i32, i32
  }
  func.func @transform_20(%arg0: i32) -> (i32, i32) {
    %c0_i32 = arith.constant 0 : i32
    %c0_i32_0 = arith.constant 0 : i32
    %c0_i32_1 = arith.constant 0 : i32
    return %c0_i32, %c0_i32_0 : i32, i32
  }
  func.func @transform_21(%arg0: i32) -> (i32, i32) {
    %c0_i32 = arith.constant 0 : i32
    %c0_i32_0 = arith.constant 0 : i32
    %c0_i32_1 = arith.constant 0 : i32
    return %c0_i32, %c0_i32_0 : i32, i32
  }
  func.func @transform_22(%arg0: i32) -> (i32, i32) {
    %c0_i32 = arith.constant 0 : i32
    %c0_i32_0 = arith.constant 0 : i32
    %c0_i32_1 = arith.constant 0 : i32
    return %c0_i32, %c0_i32_0 : i32, i32
  }
}

</mosaic_0001>

<llo_original>
// kernel: gconv_forward.1
$region0: #{gconv_forward.1}
  #allocation0 [shape = 'u32[]', space=smem, size = 0x4, offset = 0x4, fixed_abs, tag = 'smem constant byte address 0x4 - core index']
  #allocation1 [shape = 'u32[144,128]{1,0:T(1,128)}', space=vmem, size = 0x12000, scoped, tag = 'internal scratch']
  %s0 = inlined_call_operand.vmem [shape: bf16[256,256], index: 0, kind: input, shape index: {}]
  %s1 = inlined_call_operand.vmem [shape: f32[256,8], index: 1, kind: input, shape index: {}]
  %s2 = inlined_call_operand.vmem [shape: f32[256,2], index: 2, kind: input, shape index: {}]
  %s3 = inlined_call_operand.vmem [shape: f32[8,32], index: 3, kind: input, shape index: {}]
  %s4 = inlined_call_operand.vmem [shape: f32[1,32], index: 4, kind: input, shape index: {}]
  %s5 = inlined_call_operand.vmem [shape: f32[32,32], index: 5, kind: input, shape index: {}]
  %s6 = inlined_call_operand.vmem [shape: f32[1,32], index: 6, kind: input, shape index: {}]
  %s7 = inlined_call_operand.vmem [shape: f32[1,32], index: 7, kind: input, shape index: {}]
  %s8 = inlined_call_operand.vmem [shape: f32[1,32], index: 8, kind: input, shape index: {}]
  %s9 = inlined_call_operand.vmem [shape: f32[32,32], index: 9, kind: input, shape index: {}]
  %s10 = inlined_call_operand.vmem [shape: f32[1,32], index: 10, kind: input, shape index: {}]
  %s11 = inlined_call_operand.vmem [shape: f32[32,32], index: 11, kind: input, shape index: {}]
  %s12 = inlined_call_operand.vmem [shape: f32[1,32], index: 12, kind: input, shape index: {}]
  %s13 = inlined_call_operand.vmem [shape: f32[1,32], index: 13, kind: input, shape index: {}]
  %s14 = inlined_call_operand.vmem [shape: f32[1,32], index: 14, kind: input, shape index: {}]
  %s15 = inlined_call_operand.vmem [shape: f32[32,32], index: 15, kind: input, shape index: {}]
  %s16 = inlined_call_operand.vmem [shape: f32[1,32], index: 16, kind: input, shape index: {}]
  %s17 = inlined_call_operand.vmem [shape: f32[32,32], index: 17, kind: input, shape index: {}]
  %s18 = inlined_call_operand.vmem [shape: f32[1,32], index: 18, kind: input, shape index: {}]
  %s19 = inlined_call_operand.vmem [shape: f32[1,32], index: 19, kind: input, shape index: {}]
  %s20 = inlined_call_operand.vmem [shape: f32[1,32], index: 20, kind: input, shape index: {}]
  %s21 = inlined_call_operand.vmem [shape: f32[256,128], index: 21, kind: output, shape index: {0}]
  %s22 = inlined_call_operand.hbm [shape: f32[2,128], index: 22, kind: output, shape index: {1}]
  %23 = xla_tuple %s21, %s22
  %s24 = sld [smem:[#allocation0]]
  $region102: #{gconv_forward.1} parent=0
    _
  %s26 = ssub.s32 1, %s24
  %s27 = scalar_select 0, %s26, %s24
  $region1: #{gconv_forward.1} parent=0
    #allocation2 [shape = 'u8[1024]{0}', space=vmem, size = 0x400, scoped, tag = 'output window, operand 1, single buffered']
    #allocation3 [shape = 's32[1]{0}', space=sflag, size = 0x4, scoped, tag = 'scoped memory for gconv_forward.1']
    %28 = vsyncpa [#allocation3], 0
    // Predicated region
    $region2: #{gconv_forward.1} parent=1 // pred_check
      _
    $region3: #{gconv_forward.1} parent=1 // pred_check_branch
      %30 = sbr.rel (0) target = $region5
    $region4: #{gconv_forward.1} parent=1 // pred_region
      _
    $region5: #{gconv_forward.1} parent=1 // pred_fallthru
      _
    // Predicated region
    $region6: #{gconv_forward.1} parent=1 // pred_check
      _
    $region7: #{gconv_forward.1} parent=1 // pred_check_branch
      %32 = sbr.rel (0) target = $region9
    $region8: #{gconv_forward.1} parent=1 // pred_region
      _
    $region9: #{gconv_forward.1} parent=1 // pred_fallthru
      _
    // Predicated region
    $region10: #{gconv_forward.1} parent=1 // pred_check
      _
    $region11: #{gconv_forward.1} parent=1 // pred_check_branch
      %34 = sbr.rel (0) target = $region13
    $region12: #{gconv_forward.1} parent=1 // pred_region
      _
    $region13: #{gconv_forward.1} parent=1 // pred_fallthru
      _
    // Predicated region
    $region14: #{gconv_forward.1} parent=1 // pred_check
      _
    $region15: #{gconv_forward.1} parent=1 // pred_check_branch
      %36 = sbr.rel (0) target = $region17
    $region16: #{gconv_forward.1} parent=1 // pred_region
      _
    $region17: #{gconv_forward.1} parent=1 // pred_fallthru
      _
    // Predicated region
    $region18: #{gconv_forward.1} parent=1 // pred_check
      _
    $region19: #{gconv_forward.1} parent=1 // pred_check_branch
      %38 = sbr.rel (0) target = $region21
    $region20: #{gconv_forward.1} parent=1 // pred_region
      _
    $region21: #{gconv_forward.1} parent=1 // pred_fallthru
      _
    // Predicated region
    $region22: #{gconv_forward.1} parent=1 // pred_check
      _
    $region23: #{gconv_forward.1} parent=1 // pred_check_branch
      %40 = sbr.rel (0) target = $region25
    $region24: #{gconv_forward.1} parent=1 // pred_region
      _
    $region25: #{gconv_forward.1} parent=1 // pred_fallthru
      _
    // Predicated region
    $region26: #{gconv_forward.1} parent=1 // pred_check
      _
    $region27: #{gconv_forward.1} parent=1 // pred_check_branch
      %42 = sbr.rel (0) target = $region29
    $region28: #{gconv_forward.1} parent=1 // pred_region
      _
    $region29: #{gconv_forward.1} parent=1 // pred_fallthru
      _
    // Predicated region
    $region30: #{gconv_forward.1} parent=1 // pred_check
      _
    $region31: #{gconv_forward.1} parent=1 // pred_check_branch
      %44 = sbr.rel (0) target = $region33
    $region32: #{gconv_forward.1} parent=1 // pred_region
      _
    $region33: #{gconv_forward.1} parent=1 // pred_fallthru
      _
    // Predicated region
    $region34: #{gconv_forward.1} parent=1 // pred_check
      _
    $region35: #{gconv_forward.1} parent=1 // pred_check_branch
      %46 = sbr.rel (0) target = $region37
    $region36: #{gconv_forward.1} parent=1 // pred_region
      _
    $region37: #{gconv_forward.1} parent=1 // pred_fallthru
      _
    // Predicated region
    $region38: #{gconv_forward.1} parent=1 // pred_check
      _
    $region39: #{gconv_forward.1} parent=1 // pred_check_branch
      %48 = sbr.rel (0) target = $region41
    $region40: #{gconv_forward.1} parent=1 // pred_region
      _
    $region41: #{gconv_forward.1} parent=1 // pred_fallthru
      _
    // Predicated region
    $region42: #{gconv_forward.1} parent=1 // pred_check
      _
    $region43: #{gconv_forward.1} parent=1 // pred_check_branch
      %50 = sbr.rel (0) target = $region45
    $region44: #{gconv_forward.1} parent=1 // pred_region
      _
    $region45: #{gconv_forward.1} parent=1 // pred_fallthru
      _
    // Predicated region
    $region46: #{gconv_forward.1} parent=1 // pred_check
      _
    $region47: #{gconv_forward.1} parent=1 // pred_check_branch
      %52 = sbr.rel (0) target = $region49
    $region48: #{gconv_forward.1} parent=1 // pred_region
      _
    $region49: #{gconv_forward.1} parent=1 // pred_fallthru
      _
    // Predicated region
    $region50: #{gconv_forward.1} parent=1 // pred_check
      _
    $region51: #{gconv_forward.1} parent=1 // pred_check_branch
      %54 = sbr.rel (0) target = $region53
    $region52: #{gconv_forward.1} parent=1 // pred_region
      _
    $region53: #{gconv_forward.1} parent=1 // pred_fallthru
      _
    // Predicated region
    $region54: #{gconv_forward.1} parent=1 // pred_check
      _
    $region55: #{gconv_forward.1} parent=1 // pred_check_branch
      %56 = sbr.rel (0) target = $region57
    $region56: #{gconv_forward.1} parent=1 // pred_region
      _
    $region57: #{gconv_forward.1} parent=1 // pred_fallthru
      _
    // Predicated region
    $region58: #{gconv_forward.1} parent=1 // pred_check
      _
    $region59: #{gconv_forward.1} parent=1 // pred_check_branch
      %58 = sbr.rel (0) target = $region61
    $region60: #{gconv_forward.1} parent=1 // pred_region
      _
    $region61: #{gconv_forward.1} parent=1 // pred_fallthru
      _
    // Predicated region
    $region62: #{gconv_forward.1} parent=1 // pred_check
      _
    $region63: #{gconv_forward.1} parent=1 // pred_check_branch
      %60 = sbr.rel (0) target = $region65
    $region64: #{gconv_forward.1} parent=1 // pred_region
      _
    $region65: #{gconv_forward.1} parent=1 // pred_fallthru
      _
    // Predicated region
    $region66: #{gconv_forward.1} parent=1 // pred_check
      _
    $region67: #{gconv_forward.1} parent=1 // pred_check_branch
      %62 = sbr.rel (0) target = $region69
    $region68: #{gconv_forward.1} parent=1 // pred_region
      _
    $region69: #{gconv_forward.1} parent=1 // pred_fallthru
      _
    // Predicated region
    $region70: #{gconv_forward.1} parent=1 // pred_check
      _
    $region71: #{gconv_forward.1} parent=1 // pred_check_branch
      %64 = sbr.rel (0) target = $region73
    $region72: #{gconv_forward.1} parent=1 // pred_region
      _
    $region73: #{gconv_forward.1} parent=1 // pred_fallthru
      _
    // Predicated region
    $region74: #{gconv_forward.1} parent=1 // pred_check
      _
    $region75: #{gconv_forward.1} parent=1 // pred_check_branch
      %66 = sbr.rel (0) target = $region77
    $region76: #{gconv_forward.1} parent=1 // pred_region
      _
    $region77: #{gconv_forward.1} parent=1 // pred_fallthru
      _
    // Predicated region
    $region78: #{gconv_forward.1} parent=1 // pred_check
      _
    $region79: #{gconv_forward.1} parent=1 // pred_check_branch
      %68 = sbr.rel (0) target = $region81
    $region80: #{gconv_forward.1} parent=1 // pred_region
      _
    $region81: #{gconv_forward.1} parent=1 // pred_fallthru
      _
    // Predicated region
    $region82: #{gconv_forward.1} parent=1 // pred_check
      _
    $region83: #{gconv_forward.1} parent=1 // pred_check_branch
      %70 = sbr.rel (0) target = $region85
    $region84: #{gconv_forward.1} parent=1 // pred_region
      _
    $region85: #{gconv_forward.1} parent=1 // pred_fallthru
      _
    %v72 = vld [vmem:[%s0] sm:$0xff]
    %v73 = vld [vmem:[%s0 + $0x8] sm:$0xff]
    %v74 = vld [vmem:[%s0 + $0x10] sm:$0xff]
    %v75 = vld [vmem:[%s0 + $0x18] sm:$0xff]
    %v76 = vld [vmem:[%s0 + $0x20] sm:$0xff]
    %v77 = vld [vmem:[%s0 + $0x28] sm:$0xff]
    %v78 = vld [vmem:[%s0 + $0x30] sm:$0xff]
    %v79 = vld [vmem:[%s0 + $0x38] sm:$0xff]
    %v80 = vld [vmem:[%s0 + $0x40] sm:$0xff]
    %v81 = vld [vmem:[%s0 + $0x48] sm:$0xff]
    %v82 = vld [vmem:[%s0 + $0x50] sm:$0xff]
    %v83 = vld [vmem:[%s0 + $0x58] sm:$0xff]
    %v84 = vld [vmem:[%s0 + $0x60] sm:$0xff]
    %v85 = vld [vmem:[%s0 + $0x68] sm:$0xff]
    %v86 = vld [vmem:[%s0 + $0x70] sm:$0xff]
    %v87 = vld [vmem:[%s0 + $0x78] sm:$0xff]
    %v88 = vld [vmem:[%s0 + $0x80] sm:$0xff]
    %v89 = vld [vmem:[%s0 + $0x88] sm:$0xff]
    %v90 = vld [vmem:[%s0 + $0x90] sm:$0xff]
    %v91 = vld [vmem:[%s0 + $0x98] sm:$0xff]
    %v92 = vld [vmem:[%s0 + $0xa0] sm:$0xff]
    %v93 = vld [vmem:[%s0 + $0xa8] sm:$0xff]
    %v94 = vld [vmem:[%s0 + $0xb0] sm:$0xff]
    %v95 = vld [vmem:[%s0 + $0xb8] sm:$0xff]
    %v96 = vld [vmem:[%s0 + $0xc0] sm:$0xff]
    %v97 = vld [vmem:[%s0 + $0xc8] sm:$0xff]
    %v98 = vld [vmem:[%s0 + $0xd0] sm:$0xff]
    %v99 = vld [vmem:[%s0 + $0xd8] sm:$0xff]
    %v100 = vld [vmem:[%s0 + $0xe0] sm:$0xff]
    %v101 = vld [vmem:[%s0 + $0xe8] sm:$0xff]
    %v102 = vld [vmem:[%s0 + $0xf0] sm:$0xff]
    %v103 = vld [vmem:[%s0 + $0xf8] sm:$0xff]
    %v104 = vld [vmem:[%s1] sm:$0xff]
    %v105 = vld [vmem:[%s1 + $0x8] sm:$0xff]
    %v106 = vld [vmem:[%s1 + $0x10] sm:$0xff]
    %v107 = vld [vmem:[%s1 + $0x18] sm:$0xff]
    %v108 = vld [vmem:[%s1 + $0x20] sm:$0xff]
    %v109 = vld [vmem:[%s1 + $0x28] sm:$0xff]
    %v110 = vld [vmem:[%s1 + $0x30] sm:$0xff]
    %v111 = vld [vmem:[%s1 + $0x38] sm:$0xff]
    %v112 = vld [vmem:[%s1 + $0x40] sm:$0xff]
    %v113 = vld [vmem:[%s1 + $0x48] sm:$0xff]
    %v114 = vld [vmem:[%s1 + $0x50] sm:$0xff]
    %v115 = vld [vmem:[%s1 + $0x58] sm:$0xff]
    %v116 = vld [vmem:[%s1 + $0x60] sm:$0xff]
    %v117 = vld [vmem:[%s1 + $0x68] sm:$0xff]
    %v118 = vld [vmem:[%s1 + $0x70] sm:$0xff]
    %v119 = vld [vmem:[%s1 + $0x78] sm:$0xff]
    %v120 = vld [vmem:[%s1 + $0x80] sm:$0xff]
    %v121 = vld [vmem:[%s1 + $0x88] sm:$0xff]
    %v122 = vld [vmem:[%s1 + $0x90] sm:$0xff]
    %v123 = vld [vmem:[%s1 + $0x98] sm:$0xff]
    %v124 = vld [vmem:[%s1 + $0xa0] sm:$0xff]
    %v125 = vld [vmem:[%s1 + $0xa8] sm:$0xff]
    %v126 = vld [vmem:[%s1 + $0xb0] sm:$0xff]
    %v127 = vld [vmem:[%s1 + $0xb8] sm:$0xff]
    %v128 = vld [vmem:[%s1 + $0xc0] sm:$0xff]
    %v129 = vld [vmem:[%s1 + $0xc8] sm:$0xff]
    %v130 = vld [vmem:[%s1 + $0xd0] sm:$0xff]
    %v131 = vld [vmem:[%s1 + $0xd8] sm:$0xff]
    %v132 = vld [vmem:[%s1 + $0xe0] sm:$0xff]
    %v133 = vld [vmem:[%s1 + $0xe8] sm:$0xff]
    %v134 = vld [vmem:[%s1 + $0xf0] sm:$0xff]
    %v135 = vld [vmem:[%s1 + $0xf8] sm:$0xff]
    %v136 = vld [vmem:[%s3] sm:$0xff]
    %v137 = vld [vmem:[%s4] sm:$0x1]
    %v138 = vld [vmem:[%s5] sm:$0xff]
    %v139 = vld [vmem:[%s5 + $0x8] sm:$0xff]
    %v140 = vld [vmem:[%s5 + $0x10] sm:$0xff]
    %v141 = vld [vmem:[%s5 + $0x18] sm:$0xff]
    %v142 = vld [vmem:[%s6] sm:$0x1]
    %v143 = vld [vmem:[%s7] sm:$0x1]
    %v144 = vld [vmem:[%s8] sm:$0x1]
    %vm145 = vcmask 64512
    %v147 = vsel %vm145, %v104, 0
    %v150 = vsel %vm145, %v105, 0
    %v153 = vsel %vm145, %v106, 0
    %v156 = vsel %vm145, %v107, 0
    %v159 = vsel %vm145, %v108, 0
    %v162 = vsel %vm145, %v109, 0
    %v165 = vsel %vm145, %v110, 0
    %v168 = vsel %vm145, %v111, 0
    %v171 = vsel %vm145, %v112, 0
    %v174 = vsel %vm145, %v113, 0
    %v177 = vsel %vm145, %v114, 0
    %v180 = vsel %vm145, %v115, 0
    %v183 = vsel %vm145, %v116, 0
    %v186 = vsel %vm145, %v117, 0
    %v189 = vsel %vm145, %v118, 0
    %v192 = vsel %vm145, %v119, 0
    %v195 = vsel %vm145, %v120, 0
    %v198 = vsel %vm145, %v121, 0
    %v201 = vsel %vm145, %v122, 0
    %v204 = vsel %vm145, %v123, 0
    %v207 = vsel %vm145, %v124, 0
    %v210 = vsel %vm145, %v125, 0
    %v213 = vsel %vm145, %v126, 0
    %v216 = vsel %vm145, %v127, 0
    %v219 = vsel %vm145, %v128, 0
    %v222 = vsel %vm145, %v129, 0
    %v225 = vsel %vm145, %v130, 0
    %v228 = vsel %vm145, %v131, 0
    %v231 = vsel %vm145, %v132, 0
    %v234 = vsel %vm145, %v133, 0
    %v237 = vsel %vm145, %v134, 0
    %v240 = vsel %vm145, %v135, 0
    %242 = vmatprep.subr.mxu0 0.0
    %243 = vmatpush1.msra.mxu0 %v136
    %244 = vmatprep.subr.mxu0 0.0
    %245 = vmatpush1.msra.mxu0 0.0
    %246 = vmatprep.subr.mxu0 0.0
    %247 = vmatpush1.msra.mxu0 0.0
    %248 = vmatprep.subr.mxu0 0.0
    %249 = vmatpush1.msra.mxu0 0.0
    %250 = vmatprep.subr.mxu0 0.0
    %251 = vmatpush1.msra.mxu0 0.0
    %252 = vmatprep.subr.mxu0 0.0
    %253 = vmatpush1.msra.mxu0 0.0
    %254 = vmatprep.subr.mxu0 0.0
    %255 = vmatpush1.msra.mxu0 0.0
    %256 = vmatprep.subr.mxu0 0.0
    %257 = vmatpush1.msra.mxu0 0.0
    %258 = vmatprep.subr.mxu0 0.0
    %259 = vmatpush1.msra.mxu0 0.0
    %260 = vmatprep.subr.mxu0 0.0
    %261 = vmatpush1.msra.mxu0 0.0
    %262 = vmatprep.subr.mxu0 0.0
    %263 = vmatpush1.msra.mxu0 0.0
    %264 = vmatprep.subr.mxu0 0.0
    %265 = vmatpush1.msra.mxu0 0.0
    %266 = vmatprep.subr.mxu0 0.0
    %267 = vmatpush1.msra.mxu0 0.0
    %268 = vmatprep.subr.mxu0 0.0
    %269 = vmatpush1.msra.mxu0 0.0
    %270 = vmatprep.subr.mxu0 0.0
    %271 = vmatpush1.msra.mxu0 0.0
    %272 = vmatprep.subr.mxu0 0.0
    %273 = vmatpush1.msra.mxu0 0.0
    %274 = vmatprep.subr.mxu0 0.0
    %275 = vmatpush1.msra.mxu0 0.0
    %276 = vmatprep.subr.mxu0 0.0
    %277 = vmatpush1.msra.mxu0 0.0
    %278 = vmatprep.subr.mxu0 0.0
    %279 = vmatpush1.msra.mxu0 0.0
    %280 = vmatprep.subr.mxu0 0.0
    %281 = vmatpush1.msra.mxu0 0.0
    %282 = vmatprep.subr.mxu0 0.0
    %283 = vmatpush1.msra.mxu0 0.0
    %284 = vmatprep.subr.mxu0 0.0
    %285 = vmatpush1.msra.mxu0 0.0
    %286 = vmatprep.subr.mxu0 0.0
    %287 = vmatpush1.msra.mxu0 0.0
    %288 = vmatprep.subr.mxu0 0.0
    %289 = vmatpush1.msra.mxu0 0.0
    %290 = vmatprep.subr.mxu0 0.0
    %291 = vmatpush1.msra.mxu0 0.0
    %292 = vmatprep.subr.mxu0 0.0
    %293 = vmatpush1.msra.mxu0 0.0
    %294 = vmatprep.subr.mxu0 0.0
    %295 = vmatpush1.msra.mxu0 0.0
    %296 = vmatprep.subr.mxu0 0.0
    %297 = vmatpush1.msra.mxu0 0.0
    %298 = vmatprep.subr.mxu0 0.0
    %299 = vmatpush1.msra.mxu0 0.0
    %300 = vmatprep.subr.mxu0 0.0
    %301 = vmatpush1.msra.mxu0 0.0
    %302 = vmatprep.subr.mxu0 0.0
    %303 = vmatpush1.msra.mxu0 0.0
    %304 = vmatprep.subr.mxu0 0.0
    %305 = vmatpush1.msra.mxu0 0.0
    %306 = vmatprep.mubr.f32.mxu0 0.0
    %307 = vmatmul.mubr.f32.gmra.mrb[0].mxu0 %v147
    %v308 = vpop.f32.mrb[0].mxu0
    %v309 = vadd.f32 0.0, %v308
    %v310 = vpop.f32.mrb[0].mxu0
    %311 = vmatprep.mubr.f32.mxu0 0.0
    %312 = vmatmul.mubr.f32.gmra.mrb[0].mxu0 %v150
    %v313 = vpop.f32.mrb[0].mxu0
    %v314 = vadd.f32 0.0, %v313
    %v315 = vpop.f32.mrb[0].mxu0
    %316 = vmatprep.mubr.f32.mxu0 0.0
    %317 = vmatmul.mubr.f32.gmra.mrb[0].mxu0 %v153
    %v318 = vpop.f32.mrb[0].mxu0
    %v319 = vadd.f32 0.0, %v318
    %v320 = vpop.f32.mrb[0].mxu0
    %321 = vmatprep.mubr.f32.mxu0 0.0
    %322 = vmatmul.mubr.f32.gmra.mrb[0].mxu0 %v156
    %v323 = vpop.f32.mrb[0].mxu0
    %v324 = vadd.f32 0.0, %v323
    %v325 = vpop.f32.mrb[0].mxu0
    %326 = vmatprep.mubr.f32.mxu0 0.0
    %327 = vmatmul.mubr.f32.gmra.mrb[0].mxu0 %v159
    %v328 = vpop.f32.mrb[0].mxu0
    %v329 = vadd.f32 0.0, %v328
    %v330 = vpop.f32.mrb[0].mxu0
    %331 = vmatprep.mubr.f32.mxu0 0.0
    %332 = vmatmul.mubr.f32.gmra.mrb[0].mxu0 %v162
    %v333 = vpop.f32.mrb[0].mxu0
    %v334 = vadd.f32 0.0, %v333
    %v335 = vpop.f32.mrb[0].mxu0
    %336 = vmatprep.mubr.f32.mxu0 0.0
    %337 = vmatmul.mubr.f32.gmra.mrb[0].mxu0 %v165
    %v338 = vpop.f32.mrb[0].mxu0
    %v339 = vadd.f32 0.0, %v338
    %v340 = vpop.f32.mrb[0].mxu0
    %341 = vmatprep.mubr.f32.mxu0 0.0
    %342 = vmatmul.mubr.f32.gmra.mrb[0].mxu0 %v168
    %v343 = vpop.f32.mrb[0].mxu0
    %v344 = vadd.f32 0.0, %v343
    %v345 = vpop.f32.mrb[0].mxu0
    %346 = vmatprep.mubr.f32.mxu0 0.0
    %347 = vmatmul.mubr.f32.gmra.mrb[0].mxu0 %v171
    %v348 = vpop.f32.mrb[0].mxu0
    %v349 = vadd.f32 0.0, %v348
    %v350 = vpop.f32.mrb[0].mxu0
    %351 = vmatprep.mubr.f32.mxu0 0.0
    %352 = vmatmul.mubr.f32.gmra.mrb[0].mxu0 %v174
    %v353 = vpop.f32.mrb[0].mxu0
    %v354 = vadd.f32 0.0, %v353
    %v355 = vpop.f32.mrb[0].mxu0
    %356 = vmatprep.mubr.f32.mxu0 0.0
    %357 = vmatmul.mubr.f32.gmra.mrb[0].mxu0 %v177
    %v358 = vpop.f32.mrb[0].mxu0
    %v359 = vadd.f32 0.0, %v358
    %v360 = vpop.f32.mrb[0].mxu0
    %361 = vmatprep.mubr.f32.mxu0 0.0
    %362 = vmatmul.mubr.f32.gmra.mrb[0].mxu0 %v180
    %v363 = vpop.f32.mrb[0].mxu0
    %v364 = vadd.f32 0.0, %v363
    %v365 = vpop.f32.mrb[0].mxu0
    %366 = vmatprep.mubr.f32.mxu0 0.0
    %367 = vmatmul.mubr.f32.gmra.mrb[0].mxu0 %v183
    %v368 = vpop.f32.mrb[0].mxu0
    %v369 = vadd.f32 0.0, %v368
    %v370 = vpop.f32.mrb[0].mxu0
    %371 = vmatprep.mubr.f32.mxu0 0.0
    %372 = vmatmul.mubr.f32.gmra.mrb[0].mxu0 %v186
    %v373 = vpop.f32.mrb[0].mxu0
    %v374 = vadd.f32 0.0, %v373
    %v375 = vpop.f32.mrb[0].mxu0
    %376 = vmatprep.mubr.f32.mxu0 0.0
    %377 = vmatmul.mubr.f32.gmra.mrb[0].mxu0 %v189
    %v378 = vpop.f32.mrb[0].mxu0
    %v379 = vadd.f32 0.0, %v378
    %v380 = vpop.f32.mrb[0].mxu0
    %381 = vmatprep.mubr.f32.mxu0 0.0
    %382 = vmatmul.mubr.f32.gmra.mrb[0].mxu0 %v192
    %v383 = vpop.f32.mrb[0].mxu0
    %v384 = vadd.f32 0.0, %v383
    %v385 = vpop.f32.mrb[0].mxu0
    %386 = vmatprep.mubr.f32.mxu0 0.0
    %387 = vmatmul.mubr.f32.gmra.mrb[0].mxu0 %v195
    %v388 = vpop.f32.mrb[0].mxu0
    %v389 = vadd.f32 0.0, %v388
    %v390 = vpop.f32.mrb[0].mxu0
    %391 = vmatprep.mubr.f32.mxu0 0.0
    %392 = vmatmul.mubr.f32.gmra.mrb[0].mxu0 %v198
    %v393 = vpop.f32.mrb[0].mxu0
    %v394 = vadd.f32 0.0, %v393
    %v395 = vpop.f32.mrb[0].mxu0
    %396 = vmatprep.mubr.f32.mxu0 0.0
    %397 = vmatmul.mubr.f32.gmra.mrb[0].mxu0 %v201
    %v398 = vpop.f32.mrb[0].mxu0
    %v399 = vadd.f32 0.0, %v398
    %v400 = vpop.f32.mrb[0].mxu0
    %401 = vmatprep.mubr.f32.mxu0 0.0
    %402 = vmatmul.mubr.f32.gmra.mrb[0].mxu0 %v204
    %v403 = vpop.f32.mrb[0].mxu0
    %v404 = vadd.f32 0.0, %v403
    %v405 = vpop.f32.mrb[0].mxu0
    %406 = vmatprep.mubr.f32.mxu0 0.0
    %407 = vmatmul.mubr.f32.gmra.mrb[0].mxu0 %v207
    %v408 = vpop.f32.mrb[0].mxu0
    %v409 = vadd.f32 0.0, %v408
    %v410 = vpop.f32.mrb[0].mxu0
    %411 = vmatprep.mubr.f32.mxu0 0.0
    %412 = vmatmul.mubr.f32.gmra.mrb[0].mxu0 %v210
    %v413 = vpop.f32.mrb[0].mxu0
    %v414 = vadd.f32 0.0, %v413
    %v415 = vpop.f32.mrb[0].mxu0
    %416 = vmatprep.mubr.f32.mxu0 0.0
    %417 = vmatmul.mubr.f32.gmra.mrb[0].mxu0 %v213
    %v418 = vpop.f32.mrb[0].mxu0
    %v419 = vadd.f32 0.0, %v418
    %v420 = vpop.f32.mrb[0].mxu0
    %421 = vmatprep.mubr.f32.mxu0 0.0
    %422 = vmatmul.mubr.f32.gmra.mrb[0].mxu0 %v216
    %v423 = vpop.f32.mrb[0].mxu0
    %v424 = vadd.f32 0.0, %v423
    %v425 = vpop.f32.mrb[0].mxu0
    %426 = vmatprep.mubr.f32.mxu0 0.0
    %427 = vmatmul.mubr.f32.gmra.mrb[0].mxu0 %v219
    %v428 = vpop.f32.mrb[0].mxu0
    %v429 = vadd.f32 0.0, %v428
    %v430 = vpop.f32.mrb[0].mxu0
    %431 = vmatprep.mubr.f32.mxu0 0.0
    %432 = vmatmul.mubr.f32.gmra.mrb[0].mxu0 %v222
    %v433 = vpop.f32.mrb[0].mxu0
    %v434 = vadd.f32 0.0, %v433
    %v435 = vpop.f32.mrb[0].mxu0
    %436 = vmatprep.mubr.f32.mxu0 0.0
    %437 = vmatmul.mubr.f32.gmra.mrb[0].mxu0 %v225
    %v438 = vpop.f32.mrb[0].mxu0
    %v439 = vadd.f32 0.0, %v438
    %v440 = vpop.f32.mrb[0].mxu0
    %441 = vmatprep.mubr.f32.mxu0 0.0
    %442 = vmatmul.mubr.f32.gmra.mrb[0].mxu0 %v228
    %v443 = vpop.f32.mrb[0].mxu0
    %v444 = vadd.f32 0.0, %v443
    %v445 = vpop.f32.mrb[0].mxu0
    %446 = vmatprep.mubr.f32.mxu0 0.0
    %447 = vmatmul.mubr.f32.gmra.mrb[0].mxu0 %v231
    %v448 = vpop.f32.mrb[0].mxu0
    %v449 = vadd.f32 0.0, %v448
    %v450 = vpop.f32.mrb[0].mxu0
    %451 = vmatprep.mubr.f32.mxu0 0.0
    %452 = vmatmul.mubr.f32.gmra.mrb[0].mxu0 %v234
    %v453 = vpop.f32.mrb[0].mxu0
    %v454 = vadd.f32 0.0, %v453
    %v455 = vpop.f32.mrb[0].mxu0
    %456 = vmatprep.mubr.f32.mxu0 0.0
    %457 = vmatmul.mubr.f32.gmra.mrb[0].mxu0 %v237
    %v458 = vpop.f32.mrb[0].mxu0
    %v459 = vadd.f32 0.0, %v458
    %v460 = vpop.f32.mrb[0].mxu0
    %461 = vmatprep.mubr.f32.mxu0 0.0
    %462 = vmatmul.mubr.f32.gmra.mrb[0].mxu0 %v240
    %v463 = vpop.f32.mrb[0].mxu0
    %v464 = vadd.f32 0.0, %v463
    %v465 = vpop.f32.mrb[0].mxu0
    %466 = vdwg.mxu0
    %v467 = vpack.c.bf16 %v314, %v309
    %v468 = vpack.c.bf16 %v324, %v319
    %v469 = vpack.c.bf16 %v334, %v329
    %v470 = vpack.c.bf16 %v344, %v339
    %v471 = vpack.c.bf16 %v354, %v349
    %v472 = vpack.c.bf16 %v364, %v359
    %v473 = vpack.c.bf16 %v374, %v369
    %v474 = vpack.c.bf16 %v384, %v379
    %v475 = vpack.c.bf16 %v394, %v389
    %v476 = vpack.c.bf16 %v404, %v399
    %v477 = vpack.c.bf16 %v414, %v409
    %v478 = vpack.c.bf16 %v424, %v419
    %v479 = vpack.c.bf16 %v434, %v429
    %v480 = vpack.c.bf16 %v444, %v439
    %v481 = vpack.c.bf16 %v454, %v449
    %v482 = vpack.c.bf16 %v464, %v459
    %v484 = vlaneseq
    %v485 = vshrl.u32 %v484, 7
    %v486 = vsub.s32 0, %v485
    %v487 = vrot.slane %v137, %v486
    %v521 = vunpack.c.l.b16 %v72
    %v522 = vunpack.c.h.b16 %v72
    %v523 = vunpack.c.l.b16 %v73
    %v524 = vunpack.c.h.b16 %v73
    %v525 = vunpack.c.l.b16 %v74
    %v526 = vunpack.c.h.b16 %v74
    %v527 = vunpack.c.l.b16 %v75
    %v528 = vunpack.c.h.b16 %v75
    %v529 = vunpack.c.l.b16 %v76
    %v530 = vunpack.c.h.b16 %v76
    %v531 = vunpack.c.l.b16 %v77
    %v532 = vunpack.c.h.b16 %v77
    %v533 = vunpack.c.l.b16 %v78
    %v534 = vunpack.c.h.b16 %v78
    %v535 = vunpack.c.l.b16 %v79
    %v536 = vunpack.c.h.b16 %v79
    %v537 = vunpack.c.l.b16 %v80
    %v538 = vunpack.c.h.b16 %v80
    %v539 = vunpack.c.l.b16 %v81
    %v540 = vunpack.c.h.b16 %v81
    %v541 = vunpack.c.l.b16 %v82
    %v542 = vunpack.c.h.b16 %v82
    %v543 = vunpack.c.l.b16 %v83
    %v544 = vunpack.c.h.b16 %v83
    %v545 = vunpack.c.l.b16 %v84
    %v546 = vunpack.c.h.b16 %v84
    %v547 = vunpack.c.l.b16 %v85
    %v548 = vunpack.c.h.b16 %v85
    %v549 = vunpack.c.l.b16 %v86
    %v550 = vunpack.c.h.b16 %v86
    %v551 = vunpack.c.l.b16 %v87
    %v552 = vunpack.c.h.b16 %v87
    %v553 = vunpack.c.l.b16 %v88
    %v554 = vunpack.c.h.b16 %v88
    %v555 = vunpack.c.l.b16 %v89
    %v556 = vunpack.c.h.b16 %v89
    %v557 = vunpack.c.l.b16 %v90
    %v558 = vunpack.c.h.b16 %v90
    %v559 = vunpack.c.l.b16 %v91
    %v560 = vunpack.c.h.b16 %v91
    %v561 = vunpack.c.l.b16 %v92
    %v562 = vunpack.c.h.b16 %v92
    %v563 = vunpack.c.l.b16 %v93
    %v564 = vunpack.c.h.b16 %v93
    %v565 = vunpack.c.l.b16 %v94
    %v566 = vunpack.c.h.b16 %v94
    %v567 = vunpack.c.l.b16 %v95
    %v568 = vunpack.c.h.b16 %v95
    %v569 = vunpack.c.l.b16 %v96
    %v570 = vunpack.c.h.b16 %v96
    %v571 = vunpack.c.l.b16 %v97
    %v572 = vunpack.c.h.b16 %v97
    %v573 = vunpack.c.l.b16 %v98
    %v574 = vunpack.c.h.b16 %v98
    %v575 = vunpack.c.l.b16 %v99
    %v576 = vunpack.c.h.b16 %v99
    %v577 = vunpack.c.l.b16 %v100
    %v578 = vunpack.c.h.b16 %v100
    %v579 = vunpack.c.l.b16 %v101
    %v580 = vunpack.c.h.b16 %v101
    %v581 = vunpack.c.l.b16 %v102
    %v582 = vunpack.c.h.b16 %v102
    %v583 = vunpack.c.l.b16 %v103
    %v584 = vunpack.c.h.b16 %v103
    %v585 = vpack.c.b16 %v523, %v521
    %v586 = vpack.c.b16 %v524, %v522
    %v587 = vpack.c.b16 %v527, %v525
    %v588 = vpack.c.b16 %v528, %v526
    %v589 = vpack.c.b16 %v531, %v529
    %v590 = vpack.c.b16 %v532, %v530
    %v591 = vpack.c.b16 %v535, %v533
    %v592 = vpack.c.b16 %v536, %v534
    %v593 = vpack.c.b16 %v539, %v537
    %v594 = vpack.c.b16 %v540, %v538
    %v595 = vpack.c.b16 %v543, %v541
    %v596 = vpack.c.b16 %v544, %v542
    %v597 = vpack.c.b16 %v547, %v545
    %v598 = vpack.c.b16 %v548, %v546
    %v599 = vpack.c.b16 %v551, %v549
    %v600 = vpack.c.b16 %v552, %v550
    %v601 = vpack.c.b16 %v555, %v553
    %v602 = vpack.c.b16 %v556, %v554
    %v603 = vpack.c.b16 %v559, %v557
    %v604 = vpack.c.b16 %v560, %v558
    %v605 = vpack.c.b16 %v563, %v561
    %v606 = vpack.c.b16 %v564, %v562
    %v607 = vpack.c.b16 %v567, %v565
    %v608 = vpack.c.b16 %v568, %v566
    %v609 = vpack.c.b16 %v571, %v569
    %v610 = vpack.c.b16 %v572, %v570
    %v611 = vpack.c.b16 %v575, %v573
    %v612 = vpack.c.b16 %v576, %v574
    %v613 = vpack.c.b16 %v579, %v577
    %v614 = vpack.c.b16 %v580, %v578
    %v615 = vpack.c.b16 %v583, %v581
    %v616 = vpack.c.b16 %v584, %v582
    %649 = vmatprep.subr.bf16.mxu0 0
    %650 = vmatpush1.bf16.msra.mxu0 %v467
    %651 = vmatprep.subr.bf16.mxu0 0
    %652 = vmatpush1.bf16.msra.mxu0 %v468
    %653 = vmatprep.subr.bf16.mxu0 0
    %654 = vmatpush1.bf16.msra.mxu0 %v469
    %655 = vmatprep.subr.bf16.mxu0 0
    %656 = vmatpush1.bf16.msra.mxu0 %v470
    %657 = vmatprep.subr.bf16.mxu0 0
    %658 = vmatpush1.bf16.msra.mxu0 %v471
    %659 = vmatprep.subr.bf16.mxu0 0
    %660 = vmatpush1.bf16.msra.mxu0 %v472
    %661 = vmatprep.subr.bf16.mxu0 0
    %662 = vmatpush1.bf16.msra.mxu0 %v473
    %663 = vmatprep.subr.bf16.mxu0 0
    %664 = vmatpush1.bf16.msra.mxu0 %v474
    %665 = vmatprep.subr.bf16.mxu0 0
    %666 = vmatpush1.bf16.msra.mxu0 %v475
    %667 = vmatprep.subr.bf16.mxu0 0
    %668 = vmatpush1.bf16.msra.mxu0 %v476
    %669 = vmatprep.subr.bf16.mxu0 0
    %670 = vmatpush1.bf16.msra.mxu0 %v477
    %671 = vmatprep.subr.bf16.mxu0 0
    %672 = vmatpush1.bf16.msra.mxu0 %v478
    %673 = vmatprep.subr.bf16.mxu0 0
    %674 = vmatpush1.bf16.msra.mxu0 %v479
    %675 = vmatprep.subr.bf16.mxu0 0
    %676 = vmatpush1.bf16.msra.mxu0 %v480
    %677 = vmatprep.subr.bf16.mxu0 0
    %678 = vmatpush1.bf16.msra.mxu0 %v481
    %679 = vmatprep.subr.bf16.mxu0 0
    %680 = vmatpush1.bf16.msra.mxu0 %v482
    %681 = vmatprep.mubr.bf16.mxu0 %v586
    %682 = vmatmul.mubr.bf16.gmra.mrb[0].mxu0 %v585
    %v683 = vpop.f32.mrb[0].mxu0
    %v684 = vadd.f32 %v487, %v683
    %v685 = vpop.f32.mrb[0].mxu0
    %v686 = vpop.f32.mrb[0].mxu0
    %v687 = vadd.f32 %v487, %v686
    %v688 = vpop.f32.mrb[0].mxu0
    %689 = vmatprep.mubr.bf16.mxu0 %v588
    %690 = vmatmul.mubr.bf16.gmra.mrb[0].mxu0 %v587
    %v691 = vpop.f32.mrb[0].mxu0
    %v692 = vadd.f32 %v487, %v691
    %v693 = vpop.f32.mrb[0].mxu0
    %v694 = vpop.f32.mrb[0].mxu0
    %v695 = vadd.f32 %v487, %v694
    %v696 = vpop.f32.mrb[0].mxu0
    %697 = vmatprep.mubr.bf16.mxu0 %v590
    %698 = vmatmul.mubr.bf16.gmra.mrb[0].mxu0 %v589
    %v699 = vpop.f32.mrb[0].mxu0
    %v700 = vadd.f32 %v487, %v699
    %v701 = vpop.f32.mrb[0].mxu0
    %v702 = vpop.f32.mrb[0].mxu0
    %v703 = vadd.f32 %v487, %v702
    %v704 = vpop.f32.mrb[0].mxu0
    %705 = vmatprep.mubr.bf16.mxu0 %v592
    %706 = vmatmul.mubr.bf16.gmra.mrb[0].mxu0 %v591
    %v707 = vpop.f32.mrb[0].mxu0
    %v708 = vadd.f32 %v487, %v707
    %v709 = vpop.f32.mrb[0].mxu0
    %v710 = vpop.f32.mrb[0].mxu0
    %v711 = vadd.f32 %v487, %v710
    %v712 = vpop.f32.mrb[0].mxu0
    %713 = vmatprep.mubr.bf16.mxu0 %v594
    %714 = vmatmul.mubr.bf16.gmra.mrb[0].mxu0 %v593
    %v715 = vpop.f32.mrb[0].mxu0
    %v716 = vadd.f32 %v487, %v715
    %v717 = vpop.f32.mrb[0].mxu0
    %v718 = vpop.f32.mrb[0].mxu0
    %v719 = vadd.f32 %v487, %v718
    %v720 = vpop.f32.mrb[0].mxu0
    %721 = vmatprep.mubr.bf16.mxu0 %v596
    %722 = vmatmul.mubr.bf16.gmra.mrb[0].mxu0 %v595
    %v723 = vpop.f32.mrb[0].mxu0
    %v724 = vadd.f32 %v487, %v723
    %v725 = vpop.f32.mrb[0].mxu0
    %v726 = vpop.f32.mrb[0].mxu0
    %v727 = vadd.f32 %v487, %v726
    %v728 = vpop.f32.mrb[0].mxu0
    %729 = vmatprep.mubr.bf16.mxu0 %v598
    %730 = vmatmul.mubr.bf16.gmra.mrb[0].mxu0 %v597
    %v731 = vpop.f32.mrb[0].mxu0
    %v732 = vadd.f32 %v487, %v731
    %v733 = vpop.f32.mrb[0].mxu0
    %v734 = vpop.f32.mrb[0].mxu0
    %v735 = vadd.f32 %v487, %v734
    %v736 = vpop.f32.mrb[0].mxu0
    %737 = vmatprep.mubr.bf16.mxu0 %v600
    %738 = vmatmul.mubr.bf16.gmra.mrb[0].mxu0 %v599
    %v739 = vpop.f32.mrb[0].mxu0
    %v740 = vadd.f32 %v487, %v739
    %v741 = vpop.f32.mrb[0].mxu0
    %v742 = vpop.f32.mrb[0].mxu0
    %v743 = vadd.f32 %v487, %v742
    %v744 = vpop.f32.mrb[0].mxu0
    %745 = vmatprep.mubr.bf16.mxu0 %v602
    %746 = vmatmul.mubr.bf16.gmra.mrb[0].mxu0 %v601
    %v747 = vpop.f32.mrb[0].mxu0
    %v748 = vadd.f32 %v487, %v747
    %v749 = vpop.f32.mrb[0].mxu0
    %v750 = vpop.f32.mrb[0].mxu0
    %v751 = vadd.f32 %v487, %v750
    %v752 = vpop.f32.mrb[0].mxu0
    %753 = vmatprep.mubr.bf16.mxu0 %v604
    %754 = vmatmul.mubr.bf16.gmra.mrb[0].mxu0 %v603
    %v755 = vpop.f32.mrb[0].mxu0
    %v756 = vadd.f32 %v487, %v755
    %v757 = vpop.f32.mrb[0].mxu0
    %v758 = vpop.f32.mrb[0].mxu0
    %v759 = vadd.f32 %v487, %v758
    %v760 = vpop.f32.mrb[0].mxu0
    %761 = vmatprep.mubr.bf16.mxu0 %v606
    %762 = vmatmul.mubr.bf16.gmra.mrb[0].mxu0 %v605
    %v763 = vpop.f32.mrb[0].mxu0
    %v764 = vadd.f32 %v487, %v763
    %v765 = vpop.f32.mrb[0].mxu0
    %v766 = vpop.f32.mrb[0].mxu0
    %v767 = vadd.f32 %v487, %v766
    %v768 = vpop.f32.mrb[0].mxu0
    %769 = vmatprep.mubr.bf16.mxu0 %v608
    %770 = vmatmul.mubr.bf16.gmra.mrb[0].mxu0 %v607
    %v771 = vpop.f32.mrb[0].mxu0
    %v772 = vadd.f32 %v487, %v771
    %v773 = vpop.f32.mrb[0].mxu0
    %v774 = vpop.f32.mrb[0].mxu0
    %v775 = vadd.f32 %v487, %v774
    %v776 = vpop.f32.mrb[0].mxu0
    %777 = vmatprep.mubr.bf16.mxu0 %v610
    %778 = vmatmul.mubr.bf16.gmra.mrb[0].mxu0 %v609
    %v779 = vpop.f32.mrb[0].mxu0
    %v780 = vadd.f32 %v487, %v779
    %v781 = vpop.f32.mrb[0].mxu0
    %v782 = vpop.f32.mrb[0].mxu0
    %v783 = vadd.f32 %v487, %v782
    %v784 = vpop.f32.mrb[0].mxu0
    %785 = vmatprep.mubr.bf16.mxu0 %v612
    %786 = vmatmul.mubr.bf16.gmra.mrb[0].mxu0 %v611
    %v787 = vpop.f32.mrb[0].mxu0
    %v788 = vadd.f32 %v487, %v787
    %v789 = vpop.f32.mrb[0].mxu0
    %v790 = vpop.f32.mrb[0].mxu0
    %v791 = vadd.f32 %v487, %v790
    %v792 = vpop.f32.mrb[0].mxu0
    %793 = vmatprep.mubr.bf16.mxu0 %v614
    %794 = vmatmul.mubr.bf16.gmra.mrb[0].mxu0 %v613
    %v795 = vpop.f32.mrb[0].mxu0
    %v796 = vadd.f32 %v487, %v795
    %v797 = vpop.f32.mrb[0].mxu0
    %v798 = vpop.f32.mrb[0].mxu0
    %v799 = vadd.f32 %v487, %v798
    %v800 = vpop.f32.mrb[0].mxu0
    %801 = vmatprep.mubr.bf16.mxu0 %v616
    %802 = vmatmul.mubr.bf16.gmra.mrb[0].mxu0 %v615
    %v803 = vpop.f32.mrb[0].mxu0
    %v804 = vadd.f32 %v487, %v803
    %v805 = vpop.f32.mrb[0].mxu0
    %v806 = vpop.f32.mrb[0].mxu0
    %v807 = vadd.f32 %v487, %v806
    %v808 = vpop.f32.mrb[0].mxu0
    %809 = vdwg.mxu0
    %v810 = vmax.f32 %v684, 0.0
    %v811 = vmax.f32 %v687, 0.0
    %v812 = vmax.f32 %v692, 0.0
    %v813 = vmax.f32 %v695, 0.0
    %v814 = vmax.f32 %v700, 0.0
    %v815 = vmax.f32 %v703, 0.0
    %v816 = vmax.f32 %v708, 0.0
    %v817 = vmax.f32 %v711, 0.0
    %v818 = vmax.f32 %v716, 0.0
    %v819 = vmax.f32 %v719, 0.0
    %v820 = vmax.f32 %v724, 0.0
    %v821 = vmax.f32 %v727, 0.0
    %v822 = vmax.f32 %v732, 0.0
    %v823 = vmax.f32 %v735, 0.0
    %v824 = vmax.f32 %v740, 0.0
    %v825 = vmax.f32 %v743, 0.0
    %v826 = vmax.f32 %v748, 0.0
    %v827 = vmax.f32 %v751, 0.0
    %v828 = vmax.f32 %v756, 0.0
    %v829 = vmax.f32 %v759, 0.0
    %v830 = vmax.f32 %v764, 0.0
    %v831 = vmax.f32 %v767, 0.0
    %v832 = vmax.f32 %v772, 0.0
    %v833 = vmax.f32 %v775, 0.0
    %v834 = vmax.f32 %v780, 0.0
    %v835 = vmax.f32 %v783, 0.0
    %v836 = vmax.f32 %v788, 0.0
    %v837 = vmax.f32 %v791, 0.0
    %v838 = vmax.f32 %v796, 0.0
    %v839 = vmax.f32 %v799, 0.0
    %v840 = vmax.f32 %v804, 0.0
    %v841 = vmax.f32 %v807, 0.0
    %v843 = vlaneseq
    %v844 = vshrl.u32 %v843, 7
    %v845 = vsub.s32 0, %v844
    %v846 = vrot.slane %v142, %v845
    %vm848 = vcmask 261120
    %v850 = vsel %vm848, %v810, 0
    %v853 = vsel %vm848, %v811, 0
    %v856 = vsel %vm848, %v812, 0
    %v859 = vsel %vm848, %v813, 0
    %v862 = vsel %vm848, %v814, 0
    %v865 = vsel %vm848, %v815, 0
    %v868 = vsel %vm848, %v816, 0
    %v871 = vsel %vm848, %v817, 0
    %v874 = vsel %vm848, %v818, 0
    %v877 = vsel %vm848, %v819, 0
    %v880 = vsel %vm848, %v820, 0
    %v883 = vsel %vm848, %v821, 0
    %v886 = vsel %vm848, %v822, 0
    %v889 = vsel %vm848, %v823, 0
    %v892 = vsel %vm848, %v824, 0
    %v895 = vsel %vm848, %v825, 0
    %v898 = vsel %vm848, %v826, 0
    %v901 = vsel %vm848, %v827, 0
    %v904 = vsel %vm848, %v828, 0
    %v907 = vsel %vm848, %v829, 0
    %v910 = vsel %vm848, %v830, 0
    %v913 = vsel %vm848, %v831, 0
    %v916 = vsel %vm848, %v832, 0
    %v919 = vsel %vm848, %v833, 0
    %v922 = vsel %vm848, %v834, 0
    %v925 = vsel %vm848, %v835, 0
    %v928 = vsel %vm848, %v836, 0
    %v931 = vsel %vm848, %v837, 0
    %v934 = vsel %vm848, %v838, 0
    %v937 = vsel %vm848, %v839, 0
    %v940 = vsel %vm848, %v840, 0
    %v943 = vsel %vm848, %v841, 0
    %945 = vmatprep.subr.mxu0 0.0
    %946 = vmatpush1.msra.mxu0 %v138
    %947 = vmatprep.subr.mxu0 0.0
    %948 = vmatpush1.msra.mxu0 %v139
    %949 = vmatprep.subr.mxu0 0.0
    %950 = vmatpush1.msra.mxu0 %v140
    %951 = vmatprep.subr.mxu0 0.0
    %952 = vmatpush1.msra.mxu0 %v141
    %953 = vmatprep.subr.mxu0 0.0
    %954 = vmatpush1.msra.mxu0 0.0
    %955 = vmatprep.subr.mxu0 0.0
    %956 = vmatpush1.msra.mxu0 0.0
    %957 = vmatprep.subr.mxu0 0.0
    %958 = vmatpush1.msra.mxu0 0.0
    %959 = vmatprep.subr.mxu0 0.0
    %960 = vmatpush1.msra.mxu0 0.0
    %961 = vmatprep.subr.mxu0 0.0
    %962 = vmatpush1.msra.mxu0 0.0
    %963 = vmatprep.subr.mxu0 0.0
    %964 = vmatpush1.msra.mxu0 0.0
    %965 = vmatprep.subr.mxu0 0.0
    %966 = vmatpush1.msra.mxu0 0.0
    %967 = vmatprep.subr.mxu0 0.0
    %968 = vmatpush1.msra.mxu0 0.0
    %969 = vmatprep.subr.mxu0 0.0
    %970 = vmatpush1.msra.mxu0 0.0
    %971 = vmatprep.subr.mxu0 0.0
    %972 = vmatpush1.msra.mxu0 0.0
    %973 = vmatprep.subr.mxu0 0.0
    %974 = vmatpush1.msra.mxu0 0.0
    %975 = vmatprep.subr.mxu0 0.0
    %976 = vmatpush1.msra.mxu0 0.0
    %977 = vmatprep.subr.mxu0 0.0
    %978 = vmatpush1.msra.mxu0 0.0
    %979 = vmatprep.subr.mxu0 0.0
    %980 = vmatpush1.msra.mxu0 0.0
    %981 = vmatprep.subr.mxu0 0.0
    %982 = vmatpush1.msra.mxu0 0.0
    %983 = vmatprep.subr.mxu0 0.0
    %984 = vmatpush1.msra.mxu0 0.0
    %985 = vmatprep.subr.mxu0 0.0
    %986 = vmatpush1.msra.mxu0 0.0
    %987 = vmatprep.subr.mxu0 0.0
    %988 = vmatpush1.msra.mxu0 0.0
    %989 = vmatprep.subr.mxu0 0.0
    %990 = vmatpush1.msra.mxu0 0.0
    %991 = vmatprep.subr.mxu0 0.0
    %992 = vmatpush1.msra.mxu0 0.0
    %993 = vmatprep.subr.mxu0 0.0
    %994 = vmatpush1.msra.mxu0 0.0
    %995 = vmatprep.subr.mxu0 0.0
    %996 = vmatpush1.msra.mxu0 0.0
    %997 = vmatprep.subr.mxu0 0.0
    %998 = vmatpush1.msra.mxu0 0.0
    %999 = vmatprep.subr.mxu0 0.0
    %1000 = vmatpush1.msra.mxu0 0.0
    %1001 = vmatprep.subr.mxu0 0.0
    %1002 = vmatpush1.msra.mxu0 0.0
    %1003 = vmatprep.subr.mxu0 0.0
    %1004 = vmatpush1.msra.mxu0 0.0
    %1005 = vmatprep.subr.mxu0 0.0
    %1006 = vmatpush1.msra.mxu0 0.0
    %1007 = vmatprep.subr.mxu0 0.0
    %1008 = vmatpush1.msra.mxu0 0.0
    %1009 = vmatprep.mubr.f32.mxu0 0.0
    %1010 = vmatmul.mubr.f32.gmra.mrb[0].mxu0 %v850
    %v1011 = vpop.f32.mrb[0].mxu0
    %v1012 = vadd.f32 %v846, %v1011
    %v1013 = vpop.f32.mrb[0].mxu0
    %1014 = vmatprep.mubr.f32.mxu0 0.0
    %1015 = vmatmul.mubr.f32.gmra.mrb[0].mxu0 %v853
    %v1016 = vpop.f32.mrb[0].mxu0
    %v1017 = vadd.f32 %v846, %v1016
    %v1018 = vpop.f32.mrb[0].mxu0
    %1019 = vmatprep.mubr.f32.mxu0 0.0
    %1020 = vmatmul.mubr.f32.gmra.mrb[0].mxu0 %v856
    %v1021 = vpop.f32.mrb[0].mxu0
    %v1022 = vadd.f32 %v846, %v1021
    %v1023 = vpop.f32.mrb[0].mxu0
    %1024 = vmatprep.mubr.f32.mxu0 0.0
    %1025 = vmatmul.mubr.f32.gmra.mrb[0].mxu0 %v859
    %v1026 = vpop.f32.mrb[0].mxu0
    %v1027 = vadd.f32 %v846, %v1026
    %v1028 = vpop.f32.mrb[0].mxu0
    %1029 = vmatprep.mubr.f32.mxu0 0.0
    %1030 = vmatmul.mubr.f32.gmra.mrb[0].mxu0 %v862
    %v1031 = vpop.f32.mrb[0].mxu0
    %v1032 = vadd.f32 %v846, %v1031
    %v1033 = vpop.f32.mrb[0].mxu0
    %1034 = vmatprep.mubr.f32.mxu0 0.0
    %1035 = vmatmul.mubr.f32.gmra.mrb[0].mxu0 %v865
    %v1036 = vpop.f32.mrb[0].mxu0
    %v1037 = vadd.f32 %v846, %v1036
    %v1038 = vpop.f32.mrb[0].mxu0
    %1039 = vmatprep.mubr.f32.mxu0 0.0
    %1040 = vmatmul.mubr.f32.gmra.mrb[0].mxu0 %v868
    %v1041 = vpop.f32.mrb[0].mxu0
    %v1042 = vadd.f32 %v846, %v1041
    %v1043 = vpop.f32.mrb[0].mxu0
    %1044 = vmatprep.mubr.f32.mxu0 0.0
    %1045 = vmatmul.mubr.f32.gmra.mrb[0].mxu0 %v871
    %v1046 = vpop.f32.mrb[0].mxu0
    %v1047 = vadd.f32 %v846, %v1046
    %v1048 = vpop.f32.mrb[0].mxu0
    %1049 = vmatprep.mubr.f32.mxu0 0.0
    %1050 = vmatmul.mubr.f32.gmra.mrb[0].mxu0 %v874
    %v1051 = vpop.f32.mrb[0].mxu0
    %v1052 = vadd.f32 %v846, %v1051
    %v1053 = vpop.f32.mrb[0].mxu0
    %1054 = vmatprep.mubr.f32.mxu0 0.0
    %1055 = vmatmul.mubr.f32.gmra.mrb[0].mxu0 %v877
    %v1056 = vpop.f32.mrb[0].mxu0
    %v1057 = vadd.f32 %v846, %v1056
    %v1058 = vpop.f32.mrb[0].mxu0
    %1059 = vmatprep.mubr.f32.mxu0 0.0
    %1060 = vmatmul.mubr.f32.gmra.mrb[0].mxu0 %v880
    %v1061 = vpop.f32.mrb[0].mxu0
    %v1062 = vadd.f32 %v846, %v1061
    %v1063 = vpop.f32.mrb[0].mxu0
    %1064 = vmatprep.mubr.f32.mxu0 0.0
    %1065 = vmatmul.mubr.f32.gmra.mrb[0].mxu0 %v883
    %v1066 = vpop.f32.mrb[0].mxu0
    %v1067 = vadd.f32 %v846, %v1066
    %v1068 = vpop.f32.mrb[0].mxu0
    %1069 = vmatprep.mubr.f32.mxu0 0.0
    %1070 = vmatmul.mubr.f32.gmra.mrb[0].mxu0 %v886
    %v1071 = vpop.f32.mrb[0].mxu0
    %v1072 = vadd.f32 %v846, %v1071
    %v1073 = vpop.f32.mrb[0].mxu0
    %1074 = vmatprep.mubr.f32.mxu0 0.0
    %1075 = vmatmul.mubr.f32.gmra.mrb[0].mxu0 %v889
    %v1076 = vpop.f32.mrb[0].mxu0
    %v1077 = vadd.f32 %v846, %v1076
    %v1078 = vpop.f32.mrb[0].mxu0
    %1079 = vmatprep.mubr.f32.mxu0 0.0
    %1080 = vmatmul.mubr.f32.gmra.mrb[0].mxu0 %v892
    %v1081 = vpop.f32.mrb[0].mxu0
    %v1082 = vadd.f32 %v846, %v1081
    %v1083 = vpop.f32.mrb[0].mxu0
    %1084 = vmatprep.mubr.f32.mxu0 0.0
    %1085 = vmatmul.mubr.f32.gmra.mrb[0].mxu0 %v895
    %v1086 = vpop.f32.mrb[0].mxu0
    %v1087 = vadd.f32 %v846, %v1086
    %v1088 = vpop.f32.mrb[0].mxu0
    %1089 = vmatprep.mubr.f32.mxu0 0.0
    %1090 = vmatmul.mubr.f32.gmra.mrb[0].mxu0 %v898
    %v1091 = vpop.f32.mrb[0].mxu0
    %v1092 = vadd.f32 %v846, %v1091
    %v1093 = vpop.f32.mrb[0].mxu0
    %1094 = vmatprep.mubr.f32.mxu0 0.0
    %1095 = vmatmul.mubr.f32.gmra.mrb[0].mxu0 %v901
    %v1096 = vpop.f32.mrb[0].mxu0
    %v1097 = vadd.f32 %v846, %v1096
    %v1098 = vpop.f32.mrb[0].mxu0
    %1099 = vmatprep.mubr.f32.mxu0 0.0
    %1100 = vmatmul.mubr.f32.gmra.mrb[0].mxu0 %v904
    %v1101 = vpop.f32.mrb[0].mxu0
    %v1102 = vadd.f32 %v846, %v1101
    %v1103 = vpop.f32.mrb[0].mxu0
    %1104 = vmatprep.mubr.f32.mxu0 0.0
    %1105 = vmatmul.mubr.f32.gmra.mrb[0].mxu0 %v907
    %v1106 = vpop.f32.mrb[0].mxu0
    %v1107 = vadd.f32 %v846, %v1106
    %v1108 = vpop.f32.mrb[0].mxu0
    %1109 = vmatprep.mubr.f32.mxu0 0.0
    %1110 = vmatmul.mubr.f32.gmra.mrb[0].mxu0 %v910
    %v1111 = vpop.f32.mrb[0].mxu0
    %v1112 = vadd.f32 %v846, %v1111
    %v1113 = vpop.f32.mrb[0].mxu0
    %1114 = vmatprep.mubr.f32.mxu0 0.0
    %1115 = vmatmul.mubr.f32.gmra.mrb[0].mxu0 %v913
    %v1116 = vpop.f32.mrb[0].mxu0
    %v1117 = vadd.f32 %v846, %v1116
    %v1118 = vpop.f32.mrb[0].mxu0
    %1119 = vmatprep.mubr.f32.mxu0 0.0
    %1120 = vmatmul.mubr.f32.gmra.mrb[0].mxu0 %v916
    %v1121 = vpop.f32.mrb[0].mxu0
    %v1122 = vadd.f32 %v846, %v1121
    %v1123 = vpop.f32.mrb[0].mxu0
    %1124 = vmatprep.mubr.f32.mxu0 0.0
    %1125 = vmatmul.mubr.f32.gmra.mrb[0].mxu0 %v919
    %v1126 = vpop.f32.mrb[0].mxu0
    %v1127 = vadd.f32 %v846, %v1126
    %v1128 = vpop.f32.mrb[0].mxu0
    %1129 = vmatprep.mubr.f32.mxu0 0.0
    %1130 = vmatmul.mubr.f32.gmra.mrb[0].mxu0 %v922
    %v1131 = vpop.f32.mrb[0].mxu0
    %v1132 = vadd.f32 %v846, %v1131
    %v1133 = vpop.f32.mrb[0].mxu0
    %1134 = vmatprep.mubr.f32.mxu0 0.0
    %1135 = vmatmul.mubr.f32.gmra.mrb[0].mxu0 %v925
    %v1136 = vpop.f32.mrb[0].mxu0
    %v1137 = vadd.f32 %v846, %v1136
    %v1138 = vpop.f32.mrb[0].mxu0
    %1139 = vmatprep.mubr.f32.mxu0 0.0
    %1140 = vmatmul.mubr.f32.gmra.mrb[0].mxu0 %v928
    %v1141 = vpop.f32.mrb[0].mxu0
    %v1142 = vadd.f32 %v846, %v1141
    %v1143 = vpop.f32.mrb[0].mxu0
    %1144 = vmatprep.mubr.f32.mxu0 0.0
    %1145 = vmatmul.mubr.f32.gmra.mrb[0].mxu0 %v931
    %v1146 = vpop.f32.mrb[0].mxu0
    %v1147 = vadd.f32 %v846, %v1146
    %v1148 = vpop.f32.mrb[0].mxu0
    %1149 = vmatprep.mubr.f32.mxu0 0.0
    %1150 = vmatmul.mubr.f32.gmra.mrb[0].mxu0 %v934
    %v1151 = vpop.f32.mrb[0].mxu0
    %v1152 = vadd.f32 %v846, %v1151
    %v1153 = vpop.f32.mrb[0].mxu0
    %1154 = vmatprep.mubr.f32.mxu0 0.0
    %1155 = vmatmul.mubr.f32.gmra.mrb[0].mxu0 %v937
    %v1156 = vpop.f32.mrb[0].mxu0
    %v1157 = vadd.f32 %v846, %v1156
    %v1158 = vpop.f32.mrb[0].mxu0
    %1159 = vmatprep.mubr.f32.mxu0 0.0
    %1160 = vmatmul.mubr.f32.gmra.mrb[0].mxu0 %v940
    %v1161 = vpop.f32.mrb[0].mxu0
    %v1162 = vadd.f32 %v846, %v1161
    %v1163 = vpop.f32.mrb[0].mxu0
    %1164 = vmatprep.mubr.f32.mxu0 0.0
    %1165 = vmatmul.mubr.f32.gmra.mrb[0].mxu0 %v943
    %v1166 = vpop.f32.mrb[0].mxu0
    %v1167 = vadd.f32 %v846, %v1166
    %v1168 = vpop.f32.mrb[0].mxu0
    %1169 = vdwg.mxu0
    %v1170 = vmax.f32 %v1012, 0.0
    %v1171 = vmax.f32 %v1017, 0.0
    %v1172 = vmax.f32 %v1022, 0.0
    %v1173 = vmax.f32 %v1027, 0.0
    %v1174 = vmax.f32 %v1032, 0.0
    %v1175 = vmax.f32 %v1037, 0.0
    %v1176 = vmax.f32 %v1042, 0.0
    %v1177 = vmax.f32 %v1047, 0.0
    %v1178 = vmax.f32 %v1052, 0.0
    %v1179 = vmax.f32 %v1057, 0.0
    %v1180 = vmax.f32 %v1062, 0.0
    %v1181 = vmax.f32 %v1067, 0.0
    %v1182 = vmax.f32 %v1072, 0.0
    %v1183 = vmax.f32 %v1077, 0.0
    %v1184 = vmax.f32 %v1082, 0.0
    %v1185 = vmax.f32 %v1087, 0.0
    %v1186 = vmax.f32 %v1092, 0.0
    %v1187 = vmax.f32 %v1097, 0.0
    %v1188 = vmax.f32 %v1102, 0.0
    %v1189 = vmax.f32 %v1107, 0.0
    %v1190 = vmax.f32 %v1112, 0.0
    %v1191 = vmax.f32 %v1117, 0.0
    %v1192 = vmax.f32 %v1122, 0.0
    %v1193 = vmax.f32 %v1127, 0.0
    %v1194 = vmax.f32 %v1132, 0.0
    %v1195 = vmax.f32 %v1137, 0.0
    %v1196 = vmax.f32 %v1142, 0.0
    %v1197 = vmax.f32 %v1147, 0.0
    %v1198 = vmax.f32 %v1152, 0.0
    %v1199 = vmax.f32 %v1157, 0.0
    %v1200 = vmax.f32 %v1162, 0.0
    %v1201 = vmax.f32 %v1167, 0.0
    %v1202 = vsel %vm848, %v1170, 0.0
    %v1203 = vsel %vm848, %v1171, 0.0
    %v1204 = vadd.f32 %v1202, %v1203
    %v1205 = vsel %vm848, %v1172, 0.0
    %v1206 = vadd.f32 %v1204, %v1205
    %v1207 = vsel %vm848, %v1173, 0.0
    %v1208 = vadd.f32 %v1206, %v1207
    %v1209 = vsel %vm848, %v1174, 0.0
    %v1210 = vadd.f32 %v1208, %v1209
    %v1211 = vsel %vm848, %v1175, 0.0
    %v1212 = vadd.f32 %v1210, %v1211
    %v1213 = vsel %vm848, %v1176, 0.0
    %v1214 = vadd.f32 %v1212, %v1213
    %v1215 = vsel %vm848, %v1177, 0.0
    %v1216 = vadd.f32 %v1214, %v1215
    %v1217 = vsel %vm848, %v1178, 0.0
    %v1218 = vadd.f32 %v1216, %v1217
    %v1219 = vsel %vm848, %v1179, 0.0
    %v1220 = vadd.f32 %v1218, %v1219
    %v1221 = vsel %vm848, %v1180, 0.0
    %v1222 = vadd.f32 %v1220, %v1221
    %v1223 = vsel %vm848, %v1181, 0.0
    %v1224 = vadd.f32 %v1222, %v1223
    %v1225 = vsel %vm848, %v1182, 0.0
    %v1226 = vadd.f32 %v1224, %v1225
    %v1227 = vsel %vm848, %v1183, 0.0
    %v1228 = vadd.f32 %v1226, %v1227
    %v1229 = vsel %vm848, %v1184, 0.0
    %v1230 = vadd.f32 %v1228, %v1229
    %v1231 = vsel %vm848, %v1185, 0.0
    %v1232 = vadd.f32 %v1230, %v1231
    %v1233 = vsel %vm848, %v1186, 0.0
    %v1234 = vadd.f32 %v1232, %v1233
    %v1235 = vsel %vm848, %v1187, 0.0
    %v1236 = vadd.f32 %v1234, %v1235
    %v1237 = vsel %vm848, %v1188, 0.0
    %v1238 = vadd.f32 %v1236, %v1237
    %v1239 = vsel %vm848, %v1189, 0.0
    %v1240 = vadd.f32 %v1238, %v1239
    %v1241 = vsel %vm848, %v1190, 0.0
    %v1242 = vadd.f32 %v1240, %v1241
    %v1243 = vsel %vm848, %v1191, 0.0
    %v1244 = vadd.f32 %v1242, %v1243
    %v1245 = vsel %vm848, %v1192, 0.0
    %v1246 = vadd.f32 %v1244, %v1245
    %v1247 = vsel %vm848, %v1193, 0.0
    %v1248 = vadd.f32 %v1246, %v1247
    %v1249 = vsel %vm848, %v1194, 0.0
    %v1250 = vadd.f32 %v1248, %v1249
    %v1251 = vsel %vm848, %v1195, 0.0
    %v1252 = vadd.f32 %v1250, %v1251
    %v1253 = vsel %vm848, %v1196, 0.0
    %v1254 = vadd.f32 %v1252, %v1253
    %v1255 = vsel %vm848, %v1197, 0.0
    %v1256 = vadd.f32 %v1254, %v1255
    %v1257 = vsel %vm848, %v1198, 0.0
    %v1258 = vadd.f32 %v1256, %v1257
    %v1259 = vsel %vm848, %v1199, 0.0
    %v1260 = vadd.f32 %v1258, %v1259
    %v1261 = vsel %vm848, %v1200, 0.0
    %v1262 = vadd.f32 %v1260, %v1261
    %v1263 = vsel %vm848, %v1201, 0.0
    %v1264 = vadd.f32 %v1262, %v1263
    %v1265 = vrot.slane %v1264, 4
    %v1266 = vadd.f32 %v1264, %v1265
    %v1267 = vrot.slane %v1266, 2
    %v1268 = vadd.f32 %v1266, %v1267
    %v1269 = vrot.slane %v1268, 1
    %v1270 = vadd.f32 %v1268, %v1269
    %v1271 = vmul.f32 %v1270, 0.00390625
    %v1272 = vsub.f32 %v1170, %v1271
    %v1273 = vsub.f32 %v1171, %v1271
    %v1274 = vsub.f32 %v1172, %v1271
    %v1275 = vsub.f32 %v1173, %v1271
    %v1276 = vsub.f32 %v1174, %v1271
    %v1277 = vsub.f32 %v1175, %v1271
    %v1278 = vsub.f32 %v1176, %v1271
    %v1279 = vsub.f32 %v1177, %v1271
    %v1280 = vsub.f32 %v1178, %v1271
    %v1281 = vsub.f32 %v1179, %v1271
    %v1282 = vsub.f32 %v1180, %v1271
    %v1283 = vsub.f32 %v1181, %v1271
    %v1284 = vsub.f32 %v1182, %v1271
    %v1285 = vsub.f32 %v1183, %v1271
    %v1286 = vsub.f32 %v1184, %v1271
    %v1287 = vsub.f32 %v1185, %v1271
    %v1288 = vsub.f32 %v1186, %v1271
    %v1289 = vsub.f32 %v1187, %v1271
    %v1290 = vsub.f32 %v1188, %v1271
    %v1291 = vsub.f32 %v1189, %v1271
    %v1292 = vsub.f32 %v1190, %v1271
    %v1293 = vsub.f32 %v1191, %v1271
    %v1294 = vsub.f32 %v1192, %v1271
    %v1295 = vsub.f32 %v1193, %v1271
    %v1296 = vsub.f32 %v1194, %v1271
    %v1297 = vsub.f32 %v1195, %v1271
    %v1298 = vsub.f32 %v1196, %v1271
    %v1299 = vsub.f32 %v1197, %v1271
    %v1300 = vsub.f32 %v1198, %v1271
    %v1301 = vsub.f32 %v1199, %v1271
    %v1302 = vsub.f32 %v1200, %v1271
    %v1303 = vsub.f32 %v1201, %v1271
    %v1304 = vmul.f32 %v1272, %v1272
    %v1305 = vmul.f32 %v1273, %v1273
    %v1306 = vmul.f32 %v1274, %v1274
    %v1307 = vmul.f32 %v1275, %v1275
    %v1308 = vmul.f32 %v1276, %v1276
    %v1309 = vmul.f32 %v1277, %v1277
    %v1310 = vmul.f32 %v1278, %v1278
    %v1311 = vmul.f32 %v1279, %v1279
    %v1312 = vmul.f32 %v1280, %v1280
    %v1313 = vmul.f32 %v1281, %v1281
    %v1314 = vmul.f32 %v1282, %v1282
    %v1315 = vmul.f32 %v1283, %v1283
    %v1316 = vmul.f32 %v1284, %v1284
    %v1317 = vmul.f32 %v1285, %v1285
    %v1318 = vmul.f32 %v1286, %v1286
    %v1319 = vmul.f32 %v1287, %v1287
    %v1320 = vmul.f32 %v1288, %v1288
    %v1321 = vmul.f32 %v1289, %v1289
    %v1322 = vmul.f32 %v1290, %v1290
    %v1323 = vmul.f32 %v1291, %v1291
    %v1324 = vmul.f32 %v1292, %v1292
    %v1325 = vmul.f32 %v1293, %v1293
    %v1326 = vmul.f32 %v1294, %v1294
    %v1327 = vmul.f32 %v1295, %v1295
    %v1328 = vmul.f32 %v1296, %v1296
    %v1329 = vmul.f32 %v1297, %v1297
    %v1330 = vmul.f32 %v1298, %v1298
    %v1331 = vmul.f32 %v1299, %v1299
    %v1332 = vmul.f32 %v1300, %v1300
    %v1333 = vmul.f32 %v1301, %v1301
    %v1334 = vmul.f32 %v1302, %v1302
    %v1335 = vmul.f32 %v1303, %v1303
    %v1336 = vsel %vm848, %v1304, 0.0
    %v1337 = vsel %vm848, %v1305, 0.0
    %v1338 = vadd.f32 %v1336, %v1337
    %v1339 = vsel %vm848, %v1306, 0.0
    %v1340 = vadd.f32 %v1338, %v1339
    %v1341 = vsel %vm848, %v1307, 0.0
    %v1342 = vadd.f32 %v1340, %v1341
    %v1343 = vsel %vm848, %v1308, 0.0
    %v1344 = vadd.f32 %v1342, %v1343
    %v1345 = vsel %vm848, %v1309, 0.0
    %v1346 = vadd.f32 %v1344, %v1345
    %v1347 = vsel %vm848, %v1310, 0.0
    %v1348 = vadd.f32 %v1346, %v1347
    %v1349 = vsel %vm848, %v1311, 0.0
    %v1350 = vadd.f32 %v1348, %v1349
    %v1351 = vsel %vm848, %v1312, 0.0
    %v1352 = vadd.f32 %v1350, %v1351
    %v1353 = vsel %vm848, %v1313, 0.0
    %v1354 = vadd.f32 %v1352, %v1353
    %v1355 = vsel %vm848, %v1314, 0.0
    %v1356 = vadd.f32 %v1354, %v1355
    %v1357 = vsel %vm848, %v1315, 0.0
    %v1358 = vadd.f32 %v1356, %v1357
    %v1359 = vsel %vm848, %v1316, 0.0
    %v1360 = vadd.f32 %v1358, %v1359
    %v1361 = vsel %vm848, %v1317, 0.0
    %v1362 = vadd.f32 %v1360, %v1361
    %v1363 = vsel %vm848, %v1318, 0.0
    %v1364 = vadd.f32 %v1362, %v1363
    %v1365 = vsel %vm848, %v1319, 0.0
    %v1366 = vadd.f32 %v1364, %v1365
    %v1367 = vsel %vm848, %v1320, 0.0
    %v1368 = vadd.f32 %v1366, %v1367
    %v1369 = vsel %vm848, %v1321, 0.0
    %v1370 = vadd.f32 %v1368, %v1369
    %v1371 = vsel %vm848, %v1322, 0.0
    %v1372 = vadd.f32 %v1370, %v1371
    %v1373 = vsel %vm848, %v1323, 0.0
    %v1374 = vadd.f32 %v1372, %v1373
    %v1375 = vsel %vm848, %v1324, 0.0
    %v1376 = vadd.f32 %v1374, %v1375
    %v1377 = vsel %vm848, %v1325, 0.0
    %v1378 = vadd.f32 %v1376, %v1377
    %v1379 = vsel %vm848, %v1326, 0.0
    %v1380 = vadd.f32 %v1378, %v1379
    %v1381 = vsel %vm848, %v1327, 0.0
    %v1382 = vadd.f32 %v1380, %v1381
    %v1383 = vsel %vm848, %v1328, 0.0
    %v1384 = vadd.f32 %v1382, %v1383
    %v1385 = vsel %vm848, %v1329, 0.0
    %v1386 = vadd.f32 %v1384, %v1385
    %v1387 = vsel %vm848, %v1330, 0.0
    %v1388 = vadd.f32 %v1386, %v1387
    %v1389 = vsel %vm848, %v1331, 0.0
    %v1390 = vadd.f32 %v1388, %v1389
    %v1391 = vsel %vm848, %v1332, 0.0
    %v1392 = vadd.f32 %v1390, %v1391
    %v1393 = vsel %vm848, %v1333, 0.0
    %v1394 = vadd.f32 %v1392, %v1393
    %v1395 = vsel %vm848, %v1334, 0.0
    %v1396 = vadd.f32 %v1394, %v1395
    %v1397 = vsel %vm848, %v1335, 0.0
    %v1398 = vadd.f32 %v1396, %v1397
    %v1399 = vrot.slane %v1398, 4
    %v1400 = vadd.f32 %v1398, %v1399
    %v1401 = vrot.slane %v1400, 2
    %v1402 = vadd.f32 %v1400, %v1401
    %v1403 = vrot.slane %v1402, 1
    %v1404 = vadd.f32 %v1402, %v1403
    %v1405 = vmul.f32 %v1404, 0.00390625
    %v1406 = vadd.f32 %v1405, 1e-05
    %v1407 = vrsqrt.pop %v1406
    %v1408 = vmul.f32 %v143, %v1407
    %v1410 = vlaneseq
    %v1411 = vshrl.u32 %v1410, 7
    %v1412 = vsub.s32 0, %v1411
    %v1413 = vrot.slane %v1408, %v1412
    %v1415 = vmul.f32 %v1272, %v1413
    %v1416 = vmul.f32 %v1273, %v1413
    %v1417 = vmul.f32 %v1274, %v1413
    %v1418 = vmul.f32 %v1275, %v1413
    %v1419 = vmul.f32 %v1276, %v1413
    %v1420 = vmul.f32 %v1277, %v1413
    %v1421 = vmul.f32 %v1278, %v1413
    %v1422 = vmul.f32 %v1279, %v1413
    %v1423 = vmul.f32 %v1280, %v1413
    %v1424 = vmul.f32 %v1281, %v1413
    %v1425 = vmul.f32 %v1282, %v1413
    %v1426 = vmul.f32 %v1283, %v1413
    %v1427 = vmul.f32 %v1284, %v1413
    %v1428 = vmul.f32 %v1285, %v1413
    %v1429 = vmul.f32 %v1286, %v1413
    %v1430 = vmul.f32 %v1287, %v1413
    %v1431 = vmul.f32 %v1288, %v1413
    %v1432 = vmul.f32 %v1289, %v1413
    %v1433 = vmul.f32 %v1290, %v1413
    %v1434 = vmul.f32 %v1291, %v1413
    %v1435 = vmul.f32 %v1292, %v1413
    %v1436 = vmul.f32 %v1293, %v1413
    %v1437 = vmul.f32 %v1294, %v1413
    %v1438 = vmul.f32 %v1295, %v1413
    %v1439 = vmul.f32 %v1296, %v1413
    %v1440 = vmul.f32 %v1297, %v1413
    %v1441 = vmul.f32 %v1298, %v1413
    %v1442 = vmul.f32 %v1299, %v1413
    %v1443 = vmul.f32 %v1300, %v1413
    %v1444 = vmul.f32 %v1301, %v1413
    %v1445 = vmul.f32 %v1302, %v1413
    %v1446 = vmul.f32 %v1303, %v1413
    %v1448 = vlaneseq
    %v1449 = vshrl.u32 %v1448, 7
    %v1450 = vsub.s32 0, %v1449
    %v1451 = vrot.slane %v144, %v1450
    %v1453 = vadd.f32 %v1415, %v1451
    %v1454 = vadd.f32 %v1416, %v1451
    %v1455 = vadd.f32 %v1417, %v1451
    %v1456 = vadd.f32 %v1418, %v1451
    %v1457 = vadd.f32 %v1419, %v1451
    %v1458 = vadd.f32 %v1420, %v1451
    %v1459 = vadd.f32 %v1421, %v1451
    %v1460 = vadd.f32 %v1422, %v1451
    %v1461 = vadd.f32 %v1423, %v1451
    %v1462 = vadd.f32 %v1424, %v1451
    %v1463 = vadd.f32 %v1425, %v1451
    %v1464 = vadd.f32 %v1426, %v1451
    %v1465 = vadd.f32 %v1427, %v1451
    %v1466 = vadd.f32 %v1428, %v1451
    %v1467 = vadd.f32 %v1429, %v1451
    %v1468 = vadd.f32 %v1430, %v1451
    %v1469 = vadd.f32 %v1431, %v1451
    %v1470 = vadd.f32 %v1432, %v1451
    %v1471 = vadd.f32 %v1433, %v1451
    %v1472 = vadd.f32 %v1434, %v1451
    %v1473 = vadd.f32 %v1435, %v1451
    %v1474 = vadd.f32 %v1436, %v1451
    %v1475 = vadd.f32 %v1437, %v1451
    %v1476 = vadd.f32 %v1438, %v1451
    %v1477 = vadd.f32 %v1439, %v1451
    %v1478 = vadd.f32 %v1440, %v1451
    %v1479 = vadd.f32 %v1441, %v1451
    %v1480 = vadd.f32 %v1442, %v1451
    %v1481 = vadd.f32 %v1443, %v1451
    %v1482 = vadd.f32 %v1444, %v1451
    %v1483 = vadd.f32 %v1445, %v1451
    %v1484 = vadd.f32 %v1446, %v1451
    %v1485 = vld [vmem:[%s2] sm:$0xff]
    %v1486 = vld [vmem:[%s2 + $0x8] sm:$0xff]
    %v1487 = vld [vmem:[%s2 + $0x10] sm:$0xff]
    %v1488 = vld [vmem:[%s2 + $0x18] sm:$0xff]
    %v1489 = vld [vmem:[%s2 + $0x20] sm:$0xff]
    %v1490 = vld [vmem:[%s2 + $0x28] sm:$0xff]
    %v1491 = vld [vmem:[%s2 + $0x30] sm:$0xff]
    %v1492 = vld [vmem:[%s2 + $0x38] sm:$0xff]
    %v1493 = vld [vmem:[%s2 + $0x40] sm:$0xff]
    %v1494 = vld [vmem:[%s2 + $0x48] sm:$0xff]
    %v1495 = vld [vmem:[%s2 + $0x50] sm:$0xff]
    %v1496 = vld [vmem:[%s2 + $0x58] sm:$0xff]
    %v1497 = vld [vmem:[%s2 + $0x60] sm:$0xff]
    %v1498 = vld [vmem:[%s2 + $0x68] sm:$0xff]
    %v1499 = vld [vmem:[%s2 + $0x70] sm:$0xff]
    %v1500 = vld [vmem:[%s2 + $0x78] sm:$0xff]
    %v1501 = vld [vmem:[%s2 + $0x80] sm:$0xff]
    %v1502 = vld [vmem:[%s2 + $0x88] sm:$0xff]
    %v1503 = vld [vmem:[%s2 + $0x90] sm:$0xff]
    %v1504 = vld [vmem:[%s2 + $0x98] sm:$0xff]
    %v1505 = vld [vmem:[%s2 + $0xa0] sm:$0xff]
    %v1506 = vld [vmem:[%s2 + $0xa8] sm:$0xff]
    %v1507 = vld [vmem:[%s2 + $0xb0] sm:$0xff]
    %v1508 = vld [vmem:[%s2 + $0xb8] sm:$0xff]
    %v1509 = vld [vmem:[%s2 + $0xc0] sm:$0xff]
    %v1510 = vld [vmem:[%s2 + $0xc8] sm:$0xff]
    %v1511 = vld [vmem:[%s2 + $0xd0] sm:$0xff]
    %v1512 = vld [vmem:[%s2 + $0xd8] sm:$0xff]
    %v1513 = vld [vmem:[%s2 + $0xe0] sm:$0xff]
    %v1514 = vld [vmem:[%s2 + $0xe8] sm:$0xff]
    %v1515 = vld [vmem:[%s2 + $0xf0] sm:$0xff]
    %v1516 = vld [vmem:[%s2 + $0xf8] sm:$0xff]
    %1518 = vset.pattern.permute.xlu0 0
    %1519 = vperm.xlu0 %1518, %v1485
    %v1520 = vpop.permute.xlu0 %1519
    %1523 = vset.pattern.permute.xlu0 0
    %1524 = vperm.xlu0 %1523, %v1486
    %v1525 = vpop.permute.xlu0 %1524
    %1528 = vset.pattern.permute.xlu0 0
    %1529 = vperm.xlu0 %1528, %v1487
    %v1530 = vpop.permute.xlu0 %1529
    %1533 = vset.pattern.permute.xlu0 0
    %1534 = vperm.xlu0 %1533, %v1488
    %v1535 = vpop.permute.xlu0 %1534
    %1538 = vset.pattern.permute.xlu0 0
    %1539 = vperm.xlu0 %1538, %v1489
    %v1540 = vpop.permute.xlu0 %1539
    %1543 = vset.pattern.permute.xlu0 0
    %1544 = vperm.xlu0 %1543, %v1490
    %v1545 = vpop.permute.xlu0 %1544
    %1548 = vset.pattern.permute.xlu0 0
    %1549 = vperm.xlu0 %1548, %v1491
    %v1550 = vpop.permute.xlu0 %1549
    %1553 = vset.pattern.permute.xlu0 0
    %1554 = vperm.xlu0 %1553, %v1492
    %v1555 = vpop.permute.xlu0 %1554
    %1558 = vset.pattern.permute.xlu0 0
    %1559 = vperm.xlu0 %1558, %v1493
    %v1560 = vpop.permute.xlu0 %1559
    %1563 = vset.pattern.permute.xlu0 0
    %1564 = vperm.xlu0 %1563, %v1494
    %v1565 = vpop.permute.xlu0 %1564
    %1568 = vset.pattern.permute.xlu0 0
    %1569 = vperm.xlu0 %1568, %v1495
    %v1570 = vpop.permute.xlu0 %1569
    %1573 = vset.pattern.permute.xlu0 0
    %1574 = vperm.xlu0 %1573, %v1496
    %v1575 = vpop.permute.xlu0 %1574
    %1578 = vset.pattern.permute.xlu0 0
    %1579 = vperm.xlu0 %1578, %v1497
    %v1580 = vpop.permute.xlu0 %1579
    %1583 = vset.pattern.permute.xlu0 0
    %1584 = vperm.xlu0 %1583, %v1498
    %v1585 = vpop.permute.xlu0 %1584
    %1588 = vset.pattern.permute.xlu0 0
    %1589 = vperm.xlu0 %1588, %v1499
    %v1590 = vpop.permute.xlu0 %1589
    %1593 = vset.pattern.permute.xlu0 0
    %1594 = vperm.xlu0 %1593, %v1500
    %v1595 = vpop.permute.xlu0 %1594
    %1598 = vset.pattern.permute.xlu0 0
    %1599 = vperm.xlu0 %1598, %v1501
    %v1600 = vpop.permute.xlu0 %1599
    %1603 = vset.pattern.permute.xlu0 0
    %1604 = vperm.xlu0 %1603, %v1502
    %v1605 = vpop.permute.xlu0 %1604
    %1608 = vset.pattern.permute.xlu0 0
    %1609 = vperm.xlu0 %1608, %v1503
    %v1610 = vpop.permute.xlu0 %1609
    %1613 = vset.pattern.permute.xlu0 0
    %1614 = vperm.xlu0 %1613, %v1504
    %v1615 = vpop.permute.xlu0 %1614
    %1618 = vset.pattern.permute.xlu0 0
    %1619 = vperm.xlu0 %1618, %v1505
    %v1620 = vpop.permute.xlu0 %1619
    %1623 = vset.pattern.permute.xlu0 0
    %1624 = vperm.xlu0 %1623, %v1506
    %v1625 = vpop.permute.xlu0 %1624
    %1628 = vset.pattern.permute.xlu0 0
    %1629 = vperm.xlu0 %1628, %v1507
    %v1630 = vpop.permute.xlu0 %1629
    %1633 = vset.pattern.permute.xlu0 0
    %1634 = vperm.xlu0 %1633, %v1508
    %v1635 = vpop.permute.xlu0 %1634
    %1638 = vset.pattern.permute.xlu0 0
    %1639 = vperm.xlu0 %1638, %v1509
    %v1640 = vpop.permute.xlu0 %1639
    %1643 = vset.pattern.permute.xlu0 0
    %1644 = vperm.xlu0 %1643, %v1510
    %v1645 = vpop.permute.xlu0 %1644
    %1648 = vset.pattern.permute.xlu0 0
    %1649 = vperm.xlu0 %1648, %v1511
    %v1650 = vpop.permute.xlu0 %1649
    %1653 = vset.pattern.permute.xlu0 0
    %1654 = vperm.xlu0 %1653, %v1512
    %v1655 = vpop.permute.xlu0 %1654
    %1658 = vset.pattern.permute.xlu0 0
    %1659 = vperm.xlu0 %1658, %v1513
    %v1660 = vpop.permute.xlu0 %1659
    %1663 = vset.pattern.permute.xlu0 0
    %1664 = vperm.xlu0 %1663, %v1514
    %v1665 = vpop.permute.xlu0 %1664
    %1668 = vset.pattern.permute.xlu0 0
    %1669 = vperm.xlu0 %1668, %v1515
    %v1670 = vpop.permute.xlu0 %1669
    %1673 = vset.pattern.permute.xlu0 0
    %1674 = vperm.xlu0 %1673, %v1516
    %v1675 = vpop.permute.xlu0 %1674
    %v1677 = vmul.f32 %v1453, %v1520
    %v1678 = vmul.f32 %v1454, %v1525
    %v1679 = vmul.f32 %v1455, %v1530
    %v1680 = vmul.f32 %v1456, %v1535
    %v1681 = vmul.f32 %v1457, %v1540
    %v1682 = vmul.f32 %v1458, %v1545
    %v1683 = vmul.f32 %v1459, %v1550
    %v1684 = vmul.f32 %v1460, %v1555
    %v1685 = vmul.f32 %v1461, %v1560
    %v1686 = vmul.f32 %v1462, %v1565
    %v1687 = vmul.f32 %v1463, %v1570
    %v1688 = vmul.f32 %v1464, %v1575
    %v1689 = vmul.f32 %v1465, %v1580
    %v1690 = vmul.f32 %v1466, %v1585
    %v1691 = vmul.f32 %v1467, %v1590
    %v1692 = vmul.f32 %v1468, %v1595
    %v1693 = vmul.f32 %v1469, %v1600
    %v1694 = vmul.f32 %v1470, %v1605
    %v1695 = vmul.f32 %v1471, %v1610
    %v1696 = vmul.f32 %v1472, %v1615
    %v1697 = vmul.f32 %v1473, %v1620
    %v1698 = vmul.f32 %v1474, %v1625
    %v1699 = vmul.f32 %v1475, %v1630
    %v1700 = vmul.f32 %v1476, %v1635
    %v1701 = vmul.f32 %v1477, %v1640
    %v1702 = vmul.f32 %v1478, %v1645
    %v1703 = vmul.f32 %v1479, %v1650
    %v1704 = vmul.f32 %v1480, %v1655
    %v1705 = vmul.f32 %v1481, %v1660
    %v1706 = vmul.f32 %v1482, %v1665
    %v1707 = vmul.f32 %v1483, %v1670
    %v1708 = vmul.f32 %v1484, %v1675
    %v1709 = vsel %vm848, %v1677, 0.0
    %v1710 = vsel %vm848, %v1678, 0.0
    %v1711 = vadd.f32 %v1709, %v1710
    %v1712 = vsel %vm848, %v1679, 0.0
    %v1713 = vadd.f32 %v1711, %v1712
    %v1714 = vsel %vm848, %v1680, 0.0
    %v1715 = vadd.f32 %v1713, %v1714
    %v1716 = vsel %vm848, %v1681, 0.0
    %v1717 = vadd.f32 %v1715, %v1716
    %v1718 = vsel %vm848, %v1682, 0.0
    %v1719 = vadd.f32 %v1717, %v1718
    %v1720 = vsel %vm848, %v1683, 0.0
    %v1721 = vadd.f32 %v1719, %v1720
    %v1722 = vsel %vm848, %v1684, 0.0
    %v1723 = vadd.f32 %v1721, %v1722
    %v1724 = vsel %vm848, %v1685, 0.0
    %v1725 = vadd.f32 %v1723, %v1724
    %v1726 = vsel %vm848, %v1686, 0.0
    %v1727 = vadd.f32 %v1725, %v1726
    %v1728 = vsel %vm848, %v1687, 0.0
    %v1729 = vadd.f32 %v1727, %v1728
    %v1730 = vsel %vm848, %v1688, 0.0
    %v1731 = vadd.f32 %v1729, %v1730
    %v1732 = vsel %vm848, %v1689, 0.0
    %v1733 = vadd.f32 %v1731, %v1732
    %v1734 = vsel %vm848, %v1690, 0.0
    %v1735 = vadd.f32 %v1733, %v1734
    %v1736 = vsel %vm848, %v1691, 0.0
    %v1737 = vadd.f32 %v1735, %v1736
    %v1738 = vsel %vm848, %v1692, 0.0
    %v1739 = vadd.f32 %v1737, %v1738
    %v1740 = vsel %vm848, %v1693, 0.0
    %v1741 = vadd.f32 %v1739, %v1740
    %v1742 = vsel %vm848, %v1694, 0.0
    %v1743 = vadd.f32 %v1741, %v1742
    %v1744 = vsel %vm848, %v1695, 0.0
    %v1745 = vadd.f32 %v1743, %v1744
    %v1746 = vsel %vm848, %v1696, 0.0
    %v1747 = vadd.f32 %v1745, %v1746
    %v1748 = vsel %vm848, %v1697, 0.0
    %v1749 = vadd.f32 %v1747, %v1748
    %v1750 = vsel %vm848, %v1698, 0.0
    %v1751 = vadd.f32 %v1749, %v1750
    %v1752 = vsel %vm848, %v1699, 0.0
    %v1753 = vadd.f32 %v1751, %v1752
    %v1754 = vsel %vm848, %v1700, 0.0
    %v1755 = vadd.f32 %v1753, %v1754
    %v1756 = vsel %vm848, %v1701, 0.0
    %v1757 = vadd.f32 %v1755, %v1756
    %v1758 = vsel %vm848, %v1702, 0.0
    %v1759 = vadd.f32 %v1757, %v1758
    %v1760 = vsel %vm848, %v1703, 0.0
    %v1761 = vadd.f32 %v1759, %v1760
    %v1762 = vsel %vm848, %v1704, 0.0
    %v1763 = vadd.f32 %v1761, %v1762
    %v1764 = vsel %vm848, %v1705, 0.0
    %v1765 = vadd.f32 %v1763, %v1764
    %v1766 = vsel %vm848, %v1706, 0.0
    %v1767 = vadd.f32 %v1765, %v1766
    %v1768 = vsel %vm848, %v1707, 0.0
    %v1769 = vadd.f32 %v1767, %v1768
    %v1770 = vsel %vm848, %v1708, 0.0
    %v1771 = vadd.f32 %v1769, %v1770
    %v1772 = vrot.slane %v1771, 4
    %v1773 = vadd.f32 %v1771, %v1772
    %v1774 = vrot.slane %v1773, 2
    %v1775 = vadd.f32 %v1773, %v1774
    %v1776 = vrot.slane %v1775, 1
    %v1777 = vadd.f32 %v1775, %v1776
    %1778 = vset.pattern.permute.xlu0 1
    %1779 = vperm.xlu0 %1778, %v1485
    %v1780 = vpop.permute.xlu0 %1779
    %1782 = vset.pattern.permute.xlu0 1
    %1783 = vperm.xlu0 %1782, %v1486
    %v1784 = vpop.permute.xlu0 %1783
    %1786 = vset.pattern.permute.xlu0 1
    %1787 = vperm.xlu0 %1786, %v1487
    %v1788 = vpop.permute.xlu0 %1787
    %1790 = vset.pattern.permute.xlu0 1
    %1791 = vperm.xlu0 %1790, %v1488
    %v1792 = vpop.permute.xlu0 %1791
    %1794 = vset.pattern.permute.xlu0 1
    %1795 = vperm.xlu0 %1794, %v1489
    %v1796 = vpop.permute.xlu0 %1795
    %1798 = vset.pattern.permute.xlu0 1
    %1799 = vperm.xlu0 %1798, %v1490
    %v1800 = vpop.permute.xlu0 %1799
    %1802 = vset.pattern.permute.xlu0 1
    %1803 = vperm.xlu0 %1802, %v1491
    %v1804 = vpop.permute.xlu0 %1803
    %1806 = vset.pattern.permute.xlu0 1
    %1807 = vperm.xlu0 %1806, %v1492
    %v1808 = vpop.permute.xlu0 %1807
    %1810 = vset.pattern.permute.xlu0 1
    %1811 = vperm.xlu0 %1810, %v1493
    %v1812 = vpop.permute.xlu0 %1811
    %1814 = vset.pattern.permute.xlu0 1
    %1815 = vperm.xlu0 %1814, %v1494
    %v1816 = vpop.permute.xlu0 %1815
    %1818 = vset.pattern.permute.xlu0 1
    %1819 = vperm.xlu0 %1818, %v1495
    %v1820 = vpop.permute.xlu0 %1819
    %1822 = vset.pattern.permute.xlu0 1
    %1823 = vperm.xlu0 %1822, %v1496
    %v1824 = vpop.permute.xlu0 %1823
    %1826 = vset.pattern.permute.xlu0 1
    %1827 = vperm.xlu0 %1826, %v1497
    %v1828 = vpop.permute.xlu0 %1827
    %1830 = vset.pattern.permute.xlu0 1
    %1831 = vperm.xlu0 %1830, %v1498
    %v1832 = vpop.permute.xlu0 %1831
    %1834 = vset.pattern.permute.xlu0 1
    %1835 = vperm.xlu0 %1834, %v1499
    %v1836 = vpop.permute.xlu0 %1835
    %1838 = vset.pattern.permute.xlu0 1
    %1839 = vperm.xlu0 %1838, %v1500
    %v1840 = vpop.permute.xlu0 %1839
    %1842 = vset.pattern.permute.xlu0 1
    %1843 = vperm.xlu0 %1842, %v1501
    %v1844 = vpop.permute.xlu0 %1843
    %1846 = vset.pattern.permute.xlu0 1
    %1847 = vperm.xlu0 %1846, %v1502
    %v1848 = vpop.permute.xlu0 %1847
    %1850 = vset.pattern.permute.xlu0 1
    %1851 = vperm.xlu0 %1850, %v1503
    %v1852 = vpop.permute.xlu0 %1851
    %1854 = vset.pattern.permute.xlu0 1
    %1855 = vperm.xlu0 %1854, %v1504
    %v1856 = vpop.permute.xlu0 %1855
    %1858 = vset.pattern.permute.xlu0 1
    %1859 = vperm.xlu0 %1858, %v1505
    %v1860 = vpop.permute.xlu0 %1859
    %1862 = vset.pattern.permute.xlu0 1
    %1863 = vperm.xlu0 %1862, %v1506
    %v1864 = vpop.permute.xlu0 %1863
    %1866 = vset.pattern.permute.xlu0 1
    %1867 = vperm.xlu0 %1866, %v1507
    %v1868 = vpop.permute.xlu0 %1867
    %1870 = vset.pattern.permute.xlu0 1
    %1871 = vperm.xlu0 %1870, %v1508
    %v1872 = vpop.permute.xlu0 %1871
    %1874 = vset.pattern.permute.xlu0 1
    %1875 = vperm.xlu0 %1874, %v1509
    %v1876 = vpop.permute.xlu0 %1875
    %1878 = vset.pattern.permute.xlu0 1
    %1879 = vperm.xlu0 %1878, %v1510
    %v1880 = vpop.permute.xlu0 %1879
    %1882 = vset.pattern.permute.xlu0 1
    %1883 = vperm.xlu0 %1882, %v1511
    %v1884 = vpop.permute.xlu0 %1883
    %1886 = vset.pattern.permute.xlu0 1
    %1887 = vperm.xlu0 %1886, %v1512
    %v1888 = vpop.permute.xlu0 %1887
    %1890 = vset.pattern.permute.xlu0 1
    %1891 = vperm.xlu0 %1890, %v1513
    %v1892 = vpop.permute.xlu0 %1891
    %1894 = vset.pattern.permute.xlu0 1
    %1895 = vperm.xlu0 %1894, %v1514
    %v1896 = vpop.permute.xlu0 %1895
    %1898 = vset.pattern.permute.xlu0 1
    %1899 = vperm.xlu0 %1898, %v1515
    %v1900 = vpop.permute.xlu0 %1899
    %1902 = vset.pattern.permute.xlu0 1
    %1903 = vperm.xlu0 %1902, %v1516
    %v1904 = vpop.permute.xlu0 %1903
    %v1906 = vmul.f32 %v1453, %v1780
    %v1907 = vmul.f32 %v1454, %v1784
    %v1908 = vmul.f32 %v1455, %v1788
    %v1909 = vmul.f32 %v1456, %v1792
    %v1910 = vmul.f32 %v1457, %v1796
    %v1911 = vmul.f32 %v1458, %v1800
    %v1912 = vmul.f32 %v1459, %v1804
    %v1913 = vmul.f32 %v1460, %v1808
    %v1914 = vmul.f32 %v1461, %v1812
    %v1915 = vmul.f32 %v1462, %v1816
    %v1916 = vmul.f32 %v1463, %v1820
    %v1917 = vmul.f32 %v1464, %v1824
    %v1918 = vmul.f32 %v1465, %v1828
    %v1919 = vmul.f32 %v1466, %v1832
    %v1920 = vmul.f32 %v1467, %v1836
    %v1921 = vmul.f32 %v1468, %v1840
    %v1922 = vmul.f32 %v1469, %v1844
    %v1923 = vmul.f32 %v1470, %v1848
    %v1924 = vmul.f32 %v1471, %v1852
    %v1925 = vmul.f32 %v1472, %v1856
    %v1926 = vmul.f32 %v1473, %v1860
    %v1927 = vmul.f32 %v1474, %v1864
    %v1928 = vmul.f32 %v1475, %v1868
    %v1929 = vmul.f32 %v1476, %v1872
    %v1930 = vmul.f32 %v1477, %v1876
    %v1931 = vmul.f32 %v1478, %v1880
    %v1932 = vmul.f32 %v1479, %v1884
    %v1933 = vmul.f32 %v1480, %v1888
    %v1934 = vmul.f32 %v1481, %v1892
    %v1935 = vmul.f32 %v1482, %v1896
    %v1936 = vmul.f32 %v1483, %v1900
    %v1937 = vmul.f32 %v1484, %v1904
    %v1938 = vsel %vm848, %v1906, 0.0
    %v1939 = vsel %vm848, %v1907, 0.0
    %v1940 = vadd.f32 %v1938, %v1939
    %v1941 = vsel %vm848, %v1908, 0.0
    %v1942 = vadd.f32 %v1940, %v1941
    %v1943 = vsel %vm848, %v1909, 0.0
    %v1944 = vadd.f32 %v1942, %v1943
    %v1945 = vsel %vm848, %v1910, 0.0
    %v1946 = vadd.f32 %v1944, %v1945
    %v1947 = vsel %vm848, %v1911, 0.0
    %v1948 = vadd.f32 %v1946, %v1947
    %v1949 = vsel %vm848, %v1912, 0.0
    %v1950 = vadd.f32 %v1948, %v1949
    %v1951 = vsel %vm848, %v1913, 0.0
    %v1952 = vadd.f32 %v1950, %v1951
    %v1953 = vsel %vm848, %v1914, 0.0
    %v1954 = vadd.f32 %v1952, %v1953
    %v1955 = vsel %vm848, %v1915, 0.0
    %v1956 = vadd.f32 %v1954, %v1955
    %v1957 = vsel %vm848, %v1916, 0.0
    %v1958 = vadd.f32 %v1956, %v1957
    %v1959 = vsel %vm848, %v1917, 0.0
    %v1960 = vadd.f32 %v1958, %v1959
    %v1961 = vsel %vm848, %v1918, 0.0
    %v1962 = vadd.f32 %v1960, %v1961
    %v1963 = vsel %vm848, %v1919, 0.0
    %v1964 = vadd.f32 %v1962, %v1963
    %v1965 = vsel %vm848, %v1920, 0.0
    %v1966 = vadd.f32 %v1964, %v1965
    %v1967 = vsel %vm848, %v1921, 0.0
    %v1968 = vadd.f32 %v1966, %v1967
    %v1969 = vsel %vm848, %v1922, 0.0
    %v1970 = vadd.f32 %v1968, %v1969
    %v1971 = vsel %vm848, %v1923, 0.0
    %v1972 = vadd.f32 %v1970, %v1971
    %v1973 = vsel %vm848, %v1924, 0.0
    %v1974 = vadd.f32 %v1972, %v1973
    %v1975 = vsel %vm848, %v1925, 0.0
    %v1976 = vadd.f32 %v1974, %v1975
    %v1977 = vsel %vm848, %v1926, 0.0
    %v1978 = vadd.f32 %v1976, %v1977
    %v1979 = vsel %vm848, %v1927, 0.0
    %v1980 = vadd.f32 %v1978, %v1979
    %v1981 = vsel %vm848, %v1928, 0.0
    %v1982 = vadd.f32 %v1980, %v1981
    %v1983 = vsel %vm848, %v1929, 0.0
    %v1984 = vadd.f32 %v1982, %v1983
    %v1985 = vsel %vm848, %v1930, 0.0
    %v1986 = vadd.f32 %v1984, %v1985
    %v1987 = vsel %vm848, %v1931, 0.0
    %v1988 = vadd.f32 %v1986, %v1987
    %v1989 = vsel %vm848, %v1932, 0.0
    %v1990 = vadd.f32 %v1988, %v1989
    %v1991 = vsel %vm848, %v1933, 0.0
    %v1992 = vadd.f32 %v1990, %v1991
    %v1993 = vsel %vm848, %v1934, 0.0
    %v1994 = vadd.f32 %v1992, %v1993
    %v1995 = vsel %vm848, %v1935, 0.0
    %v1996 = vadd.f32 %v1994, %v1995
    %v1997 = vsel %vm848, %v1936, 0.0
    %v1998 = vadd.f32 %v1996, %v1997
    %v1999 = vsel %vm848, %v1937, 0.0
    %v2000 = vadd.f32 %v1998, %v1999
    %v2001 = vrot.slane %v2000, 4
    %v2002 = vadd.f32 %v2000, %v2001
    %v2003 = vrot.slane %v2002, 2
    %v2004 = vadd.f32 %v2002, %v2003
    %v2005 = vrot.slane %v2004, 1
    %v2006 = vadd.f32 %v2004, %v2005
    %vm2007 = vcmask 1040384
    %v2008 = vsel %vm2007, %v1777, %v2006
    %v2009 = vld [vmem:[%s9] sm:$0xff]
    %v2010 = vld [vmem:[%s9 + $0x8] sm:$0xff]
    %v2011 = vld [vmem:[%s9 + $0x10] sm:$0xff]
    %v2012 = vld [vmem:[%s9 + $0x18] sm:$0xff]
    %v2013 = vld [vmem:[%s10] sm:$0x1]
    %v2014 = vld [vmem:[%s11] sm:$0xff]
    %v2015 = vld [vmem:[%s11 + $0x8] sm:$0xff]
    %v2016 = vld [vmem:[%s11 + $0x10] sm:$0xff]
    %v2017 = vld [vmem:[%s11 + $0x18] sm:$0xff]
    %v2018 = vld [vmem:[%s12] sm:$0x1]
    %v2019 = vld [vmem:[%s13] sm:$0x1]
    %v2020 = vld [vmem:[%s14] sm:$0x1]
    %v2022 = vsel %vm848, %v1453, 0
    %v2025 = vsel %vm848, %v1454, 0
    %v2028 = vsel %vm848, %v1455, 0
    %v2031 = vsel %vm848, %v1456, 0
    %v2034 = vsel %vm848, %v1457, 0
    %v2037 = vsel %vm848, %v1458, 0
    %v2040 = vsel %vm848, %v1459, 0
    %v2043 = vsel %vm848, %v1460, 0
    %v2046 = vsel %vm848, %v1461, 0
    %v2049 = vsel %vm848, %v1462, 0
    %v2052 = vsel %vm848, %v1463, 0
    %v2055 = vsel %vm848, %v1464, 0
    %v2058 = vsel %vm848, %v1465, 0
    %v2061 = vsel %vm848, %v1466, 0
    %v2064 = vsel %vm848, %v1467, 0
    %v2067 = vsel %vm848, %v1468, 0
    %v2070 = vsel %vm848, %v1469, 0
    %v2073 = vsel %vm848, %v1470, 0
    %v2076 = vsel %vm848, %v1471, 0
    %v2079 = vsel %vm848, %v1472, 0
    %v2082 = vsel %vm848, %v1473, 0
    %v2085 = vsel %vm848, %v1474, 0
    %v2088 = vsel %vm848, %v1475, 0
    %v2091 = vsel %vm848, %v1476, 0
    %v2094 = vsel %vm848, %v1477, 0
    %v2097 = vsel %vm848, %v1478, 0
    %v2100 = vsel %vm848, %v1479, 0
    %v2103 = vsel %vm848, %v1480, 0
    %v2106 = vsel %vm848, %v1481, 0
    %v2109 = vsel %vm848, %v1482, 0
    %v2112 = vsel %vm848, %v1483, 0
    %v2115 = vsel %vm848, %v1484, 0
    %2117 = vmatprep.subr.mxu0 0.0
    %2118 = vmatpush1.msra.mxu0 %v2009
    %2119 = vmatprep.subr.mxu0 0.0
    %2120 = vmatpush1.msra.mxu0 %v2010
    %2121 = vmatprep.subr.mxu0 0.0
    %2122 = vmatpush1.msra.mxu0 %v2011
    %2123 = vmatprep.subr.mxu0 0.0
    %2124 = vmatpush1.msra.mxu0 %v2012
    %2125 = vmatprep.subr.mxu0 0.0
    %2126 = vmatpush1.msra.mxu0 0.0
    %2127 = vmatprep.subr.mxu0 0.0
    %2128 = vmatpush1.msra.mxu0 0.0
    %2129 = vmatprep.subr.mxu0 0.0
    %2130 = vmatpush1.msra.mxu0 0.0
    %2131 = vmatprep.subr.mxu0 0.0
    %2132 = vmatpush1.msra.mxu0 0.0
    %2133 = vmatprep.subr.mxu0 0.0
    %2134 = vmatpush1.msra.mxu0 0.0
    %2135 = vmatprep.subr.mxu0 0.0
    %2136 = vmatpush1.msra.mxu0 0.0
    %2137 = vmatprep.subr.mxu0 0.0
    %2138 = vmatpush1.msra.mxu0 0.0
    %2139 = vmatprep.subr.mxu0 0.0
    %2140 = vmatpush1.msra.mxu0 0.0
    %2141 = vmatprep.subr.mxu0 0.0
    %2142 = vmatpush1.msra.mxu0 0.0
    %2143 = vmatprep.subr.mxu0 0.0
    %2144 = vmatpush1.msra.mxu0 0.0
    %2145 = vmatprep.subr.mxu0 0.0
    %2146 = vmatpush1.msra.mxu0 0.0
    %2147 = vmatprep.subr.mxu0 0.0
    %2148 = vmatpush1.msra.mxu0 0.0
    %2149 = vmatprep.subr.mxu0 0.0
    %2150 = vmatpush1.msra.mxu0 0.0
    %2151 = vmatprep.subr.mxu0 0.0
    %2152 = vmatpush1.msra.mxu0 0.0
    %2153 = vmatprep.subr.mxu0 0.0
    %2154 = vmatpush1.msra.mxu0 0.0
    %2155 = vmatprep.subr.mxu0 0.0
    %2156 = vmatpush1.msra.mxu0 0.0
    %2157 = vmatprep.subr.mxu0 0.0
    %2158 = vmatpush1.msra.mxu0 0.0
    %2159 = vmatprep.subr.mxu0 0.0
    %2160 = vmatpush1.msra.mxu0 0.0
    %2161 = vmatprep.subr.mxu0 0.0
    %2162 = vmatpush1.msra.mxu0 0.0
    %2163 = vmatprep.subr.mxu0 0.0
    %2164 = vmatpush1.msra.mxu0 0.0
    %2165 = vmatprep.subr.mxu0 0.0
    %2166 = vmatpush1.msra.mxu0 0.0
    %2167 = vmatprep.subr.mxu0 0.0
    %2168 = vmatpush1.msra.mxu0 0.0
    %2169 = vmatprep.subr.mxu0 0.0
    %2170 = vmatpush1.msra.mxu0 0.0
    %2171 = vmatprep.subr.mxu0 0.0
    %2172 = vmatpush1.msra.mxu0 0.0
    %2173 = vmatprep.subr.mxu0 0.0
    %2174 = vmatpush1.msra.mxu0 0.0
    %2175 = vmatprep.subr.mxu0 0.0
    %2176 = vmatpush1.msra.mxu0 0.0
    %2177 = vmatprep.subr.mxu0 0.0
    %2178 = vmatpush1.msra.mxu0 0.0
    %2179 = vmatprep.subr.mxu0 0.0
    %2180 = vmatpush1.msra.mxu0 0.0
    %2181 = vmatprep.mubr.f32.mxu0 0.0
    %2182 = vmatmul.mubr.f32.gmra.mrb[0].mxu0 %v2022
    %v2183 = vpop.f32.mrb[0].mxu0
    %v2184 = vadd.f32 0.0, %v2183
    %v2185 = vpop.f32.mrb[0].mxu0
    %2186 = vmatprep.mubr.f32.mxu0 0.0
    %2187 = vmatmul.mubr.f32.gmra.mrb[0].mxu0 %v2025
    %v2188 = vpop.f32.mrb[0].mxu0
    %v2189 = vadd.f32 0.0, %v2188
    %v2190 = vpop.f32.mrb[0].mxu0
    %2191 = vmatprep.mubr.f32.mxu0 0.0
    %2192 = vmatmul.mubr.f32.gmra.mrb[0].mxu0 %v2028
    %v2193 = vpop.f32.mrb[0].mxu0
    %v2194 = vadd.f32 0.0, %v2193
    %v2195 = vpop.f32.mrb[0].mxu0
    %2196 = vmatprep.mubr.f32.mxu0 0.0
    %2197 = vmatmul.mubr.f32.gmra.mrb[0].mxu0 %v2031
    %v2198 = vpop.f32.mrb[0].mxu0
    %v2199 = vadd.f32 0.0, %v2198
    %v2200 = vpop.f32.mrb[0].mxu0
    %2201 = vmatprep.mubr.f32.mxu0 0.0
    %2202 = vmatmul.mubr.f32.gmra.mrb[0].mxu0 %v2034
    %v2203 = vpop.f32.mrb[0].mxu0
    %v2204 = vadd.f32 0.0, %v2203
    %v2205 = vpop.f32.mrb[0].mxu0
    %2206 = vmatprep.mubr.f32.mxu0 0.0
    %2207 = vmatmul.mubr.f32.gmra.mrb[0].mxu0 %v2037
    %v2208 = vpop.f32.mrb[0].mxu0
    %v2209 = vadd.f32 0.0, %v2208
    %v2210 = vpop.f32.mrb[0].mxu0
    %2211 = vmatprep.mubr.f32.mxu0 0.0
    %2212 = vmatmul.mubr.f32.gmra.mrb[0].mxu0 %v2040
    %v2213 = vpop.f32.mrb[0].mxu0
    %v2214 = vadd.f32 0.0, %v2213
    %v2215 = vpop.f32.mrb[0].mxu0
    %2216 = vmatprep.mubr.f32.mxu0 0.0
    %2217 = vmatmul.mubr.f32.gmra.mrb[0].mxu0 %v2043
    %v2218 = vpop.f32.mrb[0].mxu0
    %v2219 = vadd.f32 0.0, %v2218
    %v2220 = vpop.f32.mrb[0].mxu0
    %2221 = vmatprep.mubr.f32.mxu0 0.0
    %2222 = vmatmul.mubr.f32.gmra.mrb[0].mxu0 %v2046
    %v2223 = vpop.f32.mrb[0].mxu0
    %v2224 = vadd.f32 0.0, %v2223
    %v2225 = vpop.f32.mrb[0].mxu0
    %2226 = vmatprep.mubr.f32.mxu0 0.0
    %2227 = vmatmul.mubr.f32.gmra.mrb[0].mxu0 %v2049
    %v2228 = vpop.f32.mrb[0].mxu0
    %v2229 = vadd.f32 0.0, %v2228
    %v2230 = vpop.f32.mrb[0].mxu0
    %2231 = vmatprep.mubr.f32.mxu0 0.0
    %2232 = vmatmul.mubr.f32.gmra.mrb[0].mxu0 %v2052
    %v2233 = vpop.f32.mrb[0].mxu0
    %v2234 = vadd.f32 0.0, %v2233
    %v2235 = vpop.f32.mrb[0].mxu0
    %2236 = vmatprep.mubr.f32.mxu0 0.0
    %2237 = vmatmul.mubr.f32.gmra.mrb[0].mxu0 %v2055
    %v2238 = vpop.f32.mrb[0].mxu0
    %v2239 = vadd.f32 0.0, %v2238
    %v2240 = vpop.f32.mrb[0].mxu0
    %2241 = vmatprep.mubr.f32.mxu0 0.0
    %2242 = vmatmul.mubr.f32.gmra.mrb[0].mxu0 %v2058
    %v2243 = vpop.f32.mrb[0].mxu0
    %v2244 = vadd.f32 0.0, %v2243
    %v2245 = vpop.f32.mrb[0].mxu0
    %2246 = vmatprep.mubr.f32.mxu0 0.0
    %2247 = vmatmul.mubr.f32.gmra.mrb[0].mxu0 %v2061
    %v2248 = vpop.f32.mrb[0].mxu0
    %v2249 = vadd.f32 0.0, %v2248
    %v2250 = vpop.f32.mrb[0].mxu0
    %2251 = vmatprep.mubr.f32.mxu0 0.0
    %2252 = vmatmul.mubr.f32.gmra.mrb[0].mxu0 %v2064
    %v2253 = vpop.f32.mrb[0].mxu0
    %v2254 = vadd.f32 0.0, %v2253
    %v2255 = vpop.f32.mrb[0].mxu0
    %2256 = vmatprep.mubr.f32.mxu0 0.0
    %2257 = vmatmul.mubr.f32.gmra.mrb[0].mxu0 %v2067
    %v2258 = vpop.f32.mrb[0].mxu0
    %v2259 = vadd.f32 0.0, %v2258
    %v2260 = vpop.f32.mrb[0].mxu0
    %2261 = vmatprep.mubr.f32.mxu0 0.0
    %2262 = vmatmul.mubr.f32.gmra.mrb[0].mxu0 %v2070
    %v2263 = vpop.f32.mrb[0].mxu0
    %v2264 = vadd.f32 0.0, %v2263
    %v2265 = vpop.f32.mrb[0].mxu0
    %2266 = vmatprep.mubr.f32.mxu0 0.0
    %2267 = vmatmul.mubr.f32.gmra.mrb[0].mxu0 %v2073
    %v2268 = vpop.f32.mrb[0].mxu0
    %v2269 = vadd.f32 0.0, %v2268
    %v2270 = vpop.f32.mrb[0].mxu0
    %2271 = vmatprep.mubr.f32.mxu0 0.0
    %2272 = vmatmul.mubr.f32.gmra.mrb[0].mxu0 %v2076
    %v2273 = vpop.f32.mrb[0].mxu0
    %v2274 = vadd.f32 0.0, %v2273
    %v2275 = vpop.f32.mrb[0].mxu0
    %2276 = vmatprep.mubr.f32.mxu0 0.0
    %2277 = vmatmul.mubr.f32.gmra.mrb[0].mxu0 %v2079
    %v2278 = vpop.f32.mrb[0].mxu0
    %v2279 = vadd.f32 0.0, %v2278
    %v2280 = vpop.f32.mrb[0].mxu0
    %2281 = vmatprep.mubr.f32.mxu0 0.0
    %2282 = vmatmul.mubr.f32.gmra.mrb[0].mxu0 %v2082
    %v2283 = vpop.f32.mrb[0].mxu0
    %v2284 = vadd.f32 0.0, %v2283
    %v2285 = vpop.f32.mrb[0].mxu0
    %2286 = vmatprep.mubr.f32.mxu0 0.0
    %2287 = vmatmul.mubr.f32.gmra.mrb[0].mxu0 %v2085
    %v2288 = vpop.f32.mrb[0].mxu0
    %v2289 = vadd.f32 0.0, %v2288
    %v2290 = vpop.f32.mrb[0].mxu0
    %2291 = vmatprep.mubr.f32.mxu0 0.0
    %2292 = vmatmul.mubr.f32.gmra.mrb[0].mxu0 %v2088
    %v2293 = vpop.f32.mrb[0].mxu0
    %v2294 = vadd.f32 0.0, %v2293
    %v2295 = vpop.f32.mrb[0].mxu0
    %2296 = vmatprep.mubr.f32.mxu0 0.0
    %2297 = vmatmul.mubr.f32.gmra.mrb[0].mxu0 %v2091
    %v2298 = vpop.f32.mrb[0].mxu0
    %v2299 = vadd.f32 0.0, %v2298
    %v2300 = vpop.f32.mrb[0].mxu0
    %2301 = vmatprep.mubr.f32.mxu0 0.0
    %2302 = vmatmul.mubr.f32.gmra.mrb[0].mxu0 %v2094
    %v2303 = vpop.f32.mrb[0].mxu0
    %v2304 = vadd.f32 0.0, %v2303
    %v2305 = vpop.f32.mrb[0].mxu0
    %2306 = vmatprep.mubr.f32.mxu0 0.0
    %2307 = vmatmul.mubr.f32.gmra.mrb[0].mxu0 %v2097
    %v2308 = vpop.f32.mrb[0].mxu0
    %v2309 = vadd.f32 0.0, %v2308
    %v2310 = vpop.f32.mrb[0].mxu0
    %2311 = vmatprep.mubr.f32.mxu0 0.0
    %2312 = vmatmul.mubr.f32.gmra.mrb[0].mxu0 %v2100
    %v2313 = vpop.f32.mrb[0].mxu0
    %v2314 = vadd.f32 0.0, %v2313
    %v2315 = vpop.f32.mrb[0].mxu0
    %2316 = vmatprep.mubr.f32.mxu0 0.0
    %2317 = vmatmul.mubr.f32.gmra.mrb[0].mxu0 %v2103
    %v2318 = vpop.f32.mrb[0].mxu0
    %v2319 = vadd.f32 0.0, %v2318
    %v2320 = vpop.f32.mrb[0].mxu0
    %2321 = vmatprep.mubr.f32.mxu0 0.0
    %2322 = vmatmul.mubr.f32.gmra.mrb[0].mxu0 %v2106
    %v2323 = vpop.f32.mrb[0].mxu0
    %v2324 = vadd.f32 0.0, %v2323
    %v2325 = vpop.f32.mrb[0].mxu0
    %2326 = vmatprep.mubr.f32.mxu0 0.0
    %2327 = vmatmul.mubr.f32.gmra.mrb[0].mxu0 %v2109
    %v2328 = vpop.f32.mrb[0].mxu0
    %v2329 = vadd.f32 0.0, %v2328
    %v2330 = vpop.f32.mrb[0].mxu0
    %2331 = vmatprep.mubr.f32.mxu0 0.0
    %2332 = vmatmul.mubr.f32.gmra.mrb[0].mxu0 %v2112
    %v2333 = vpop.f32.mrb[0].mxu0
    %v2334 = vadd.f32 0.0, %v2333
    %v2335 = vpop.f32.mrb[0].mxu0
    %2336 = vmatprep.mubr.f32.mxu0 0.0
    %2337 = vmatmul.mubr.f32.gmra.mrb[0].mxu0 %v2115
    %v2338 = vpop.f32.mrb[0].mxu0
    %v2339 = vadd.f32 0.0, %v2338
    %v2340 = vpop.f32.mrb[0].mxu0
    %2341 = vdwg.mxu0
    %v2342 = vpack.c.bf16 %v2189, %v2184
    %v2343 = vpack.c.bf16 %v2199, %v2194
    %v2344 = vpack.c.bf16 %v2209, %v2204
    %v2345 = vpack.c.bf16 %v2219, %v2214
    %v2346 = vpack.c.bf16 %v2229, %v2224
    %v2347 = vpack.c.bf16 %v2239, %v2234
    %v2348 = vpack.c.bf16 %v2249, %v2244
    %v2349 = vpack.c.bf16 %v2259, %v2254
    %v2350 = vpack.c.bf16 %v2269, %v2264
    %v2351 = vpack.c.bf16 %v2279, %v2274
    %v2352 = vpack.c.bf16 %v2289, %v2284
    %v2353 = vpack.c.bf16 %v2299, %v2294
    %v2354 = vpack.c.bf16 %v2309, %v2304
    %v2355 = vpack.c.bf16 %v2319, %v2314
    %v2356 = vpack.c.bf16 %v2329, %v2324
    %v2357 = vpack.c.bf16 %v2339, %v2334
    %v2359 = vlaneseq
    %v2360 = vshrl.u32 %v2359, 7
    %v2361 = vsub.s32 0, %v2360
    %v2362 = vrot.slane %v2013, %v2361
    %2364 = vmatprep.subr.bf16.mxu0 0
    %2365 = vmatpush1.bf16.msra.mxu0 %v2342
    %2366 = vmatprep.subr.bf16.mxu0 0
    %2367 = vmatpush1.bf16.msra.mxu0 %v2343
    %2368 = vmatprep.subr.bf16.mxu0 0
    %2369 = vmatpush1.bf16.msra.mxu0 %v2344
    %2370 = vmatprep.subr.bf16.mxu0 0
    %2371 = vmatpush1.bf16.msra.mxu0 %v2345
    %2372 = vmatprep.subr.bf16.mxu0 0
    %2373 = vmatpush1.bf16.msra.mxu0 %v2346
    %2374 = vmatprep.subr.bf16.mxu0 0
    %2375 = vmatpush1.bf16.msra.mxu0 %v2347
    %2376 = vmatprep.subr.bf16.mxu0 0
    %2377 = vmatpush1.bf16.msra.mxu0 %v2348
    %2378 = vmatprep.subr.bf16.mxu0 0
    %2379 = vmatpush1.bf16.msra.mxu0 %v2349
    %2380 = vmatprep.subr.bf16.mxu0 0
    %2381 = vmatpush1.bf16.msra.mxu0 %v2350
    %2382 = vmatprep.subr.bf16.mxu0 0
    %2383 = vmatpush1.bf16.msra.mxu0 %v2351
    %2384 = vmatprep.subr.bf16.mxu0 0
    %2385 = vmatpush1.bf16.msra.mxu0 %v2352
    %2386 = vmatprep.subr.bf16.mxu0 0
    %2387 = vmatpush1.bf16.msra.mxu0 %v2353
    %2388 = vmatprep.subr.bf16.mxu0 0
    %2389 = vmatpush1.bf16.msra.mxu0 %v2354
    %2390 = vmatprep.subr.bf16.mxu0 0
    %2391 = vmatpush1.bf16.msra.mxu0 %v2355
    %2392 = vmatprep.subr.bf16.mxu0 0
    %2393 = vmatpush1.bf16.msra.mxu0 %v2356
    %2394 = vmatprep.subr.bf16.mxu0 0
    %2395 = vmatpush1.bf16.msra.mxu0 %v2357
    %2396 = vmatprep.mubr.bf16.mxu0 %v586
    %2397 = vmatmul.mubr.bf16.gmra.mrb[0].mxu0 %v585
    %v2398 = vpop.f32.mrb[0].mxu0
    %v2399 = vadd.f32 %v2362, %v2398
    %v2400 = vpop.f32.mrb[0].mxu0
    %v2401 = vpop.f32.mrb[0].mxu0
    %v2402 = vadd.f32 %v2362, %v2401
    %v2403 = vpop.f32.mrb[0].mxu0
    %2404 = vmatprep.mubr.bf16.mxu0 %v588
    %2405 = vmatmul.mubr.bf16.gmra.mrb[0].mxu0 %v587
    %v2406 = vpop.f32.mrb[0].mxu0
    %v2407 = vadd.f32 %v2362, %v2406
    %v2408 = vpop.f32.mrb[0].mxu0
    %v2409 = vpop.f32.mrb[0].mxu0
    %v2410 = vadd.f32 %v2362, %v2409
    %v2411 = vpop.f32.mrb[0].mxu0
    %2412 = vmatprep.mubr.bf16.mxu0 %v590
    %2413 = vmatmul.mubr.bf16.gmra.mrb[0].mxu0 %v589
    %v2414 = vpop.f32.mrb[0].mxu0
    %v2415 = vadd.f32 %v2362, %v2414
    %v2416 = vpop.f32.mrb[0].mxu0
    %v2417 = vpop.f32.mrb[0].mxu0
    %v2418 = vadd.f32 %v2362, %v2417
    %v2419 = vpop.f32.mrb[0].mxu0
    %2420 = vmatprep.mubr.bf16.mxu0 %v592
    %2421 = vmatmul.mubr.bf16.gmra.mrb[0].mxu0 %v591
    %v2422 = vpop.f32.mrb[0].mxu0
    %v2423 = vadd.f32 %v2362, %v2422
    %v2424 = vpop.f32.mrb[0].mxu0
    %v2425 = vpop.f32.mrb[0].mxu0
    %v2426 = vadd.f32 %v2362, %v2425
    %v2427 = vpop.f32.mrb[0].mxu0
    %2428 = vmatprep.mubr.bf16.mxu0 %v594
    %2429 = vmatmul.mubr.bf16.gmra.mrb[0].mxu0 %v593
    %v2430 = vpop.f32.mrb[0].mxu0
    %v2431 = vadd.f32 %v2362, %v2430
    %v2432 = vpop.f32.mrb[0].mxu0
    %v2433 = vpop.f32.mrb[0].mxu0
    %v2434 = vadd.f32 %v2362, %v2433
    %v2435 = vpop.f32.mrb[0].mxu0
    %2436 = vmatprep.mubr.bf16.mxu0 %v596
    %2437 = vmatmul.mubr.bf16.gmra.mrb[0].mxu0 %v595
    %v2438 = vpop.f32.mrb[0].mxu0
    %v2439 = vadd.f32 %v2362, %v2438
    %v2440 = vpop.f32.mrb[0].mxu0
    %v2441 = vpop.f32.mrb[0].mxu0
    %v2442 = vadd.f32 %v2362, %v2441
    %v2443 = vpop.f32.mrb[0].mxu0
    %2444 = vmatprep.mubr.bf16.mxu0 %v598
    %2445 = vmatmul.mubr.bf16.gmra.mrb[0].mxu0 %v597
    %v2446 = vpop.f32.mrb[0].mxu0
    %v2447 = vadd.f32 %v2362, %v2446
    %v2448 = vpop.f32.mrb[0].mxu0
    %v2449 = vpop.f32.mrb[0].mxu0
    %v2450 = vadd.f32 %v2362, %v2449
    %v2451 = vpop.f32.mrb[0].mxu0
    %2452 = vmatprep.mubr.bf16.mxu0 %v600
    %2453 = vmatmul.mubr.bf16.gmra.mrb[0].mxu0 %v599
    %v2454 = vpop.f32.mrb[0].mxu0
    %v2455 = vadd.f32 %v2362, %v2454
    %v2456 = vpop.f32.mrb[0].mxu0
    %v2457 = vpop.f32.mrb[0].mxu0
    %v2458 = vadd.f32 %v2362, %v2457
    %v2459 = vpop.f32.mrb[0].mxu0
    %2460 = vmatprep.mubr.bf16.mxu0 %v602
    %2461 = vmatmul.mubr.bf16.gmra.mrb[0].mxu0 %v601
    %v2462 = vpop.f32.mrb[0].mxu0
    %v2463 = vadd.f32 %v2362, %v2462
    %v2464 = vpop.f32.mrb[0].mxu0
    %v2465 = vpop.f32.mrb[0].mxu0
    %v2466 = vadd.f32 %v2362, %v2465
    %v2467 = vpop.f32.mrb[0].mxu0
    %2468 = vmatprep.mubr.bf16.mxu0 %v604
    %2469 = vmatmul.mubr.bf16.gmra.mrb[0].mxu0 %v603
    %v2470 = vpop.f32.mrb[0].mxu0
    %v2471 = vadd.f32 %v2362, %v2470
    %v2472 = vpop.f32.mrb[0].mxu0
    %v2473 = vpop.f32.mrb[0].mxu0
    %v2474 = vadd.f32 %v2362, %v2473
    %v2475 = vpop.f32.mrb[0].mxu0
    %2476 = vmatprep.mubr.bf16.mxu0 %v606
    %2477 = vmatmul.mubr.bf16.gmra.mrb[0].mxu0 %v605
    %v2478 = vpop.f32.mrb[0].mxu0
    %v2479 = vadd.f32 %v2362, %v2478
    %v2480 = vpop.f32.mrb[0].mxu0
    %v2481 = vpop.f32.mrb[0].mxu0
    %v2482 = vadd.f32 %v2362, %v2481
    %v2483 = vpop.f32.mrb[0].mxu0
    %2484 = vmatprep.mubr.bf16.mxu0 %v608
    %2485 = vmatmul.mubr.bf16.gmra.mrb[0].mxu0 %v607
    %v2486 = vpop.f32.mrb[0].mxu0
    %v2487 = vadd.f32 %v2362, %v2486
    %v2488 = vpop.f32.mrb[0].mxu0
    %v2489 = vpop.f32.mrb[0].mxu0
    %v2490 = vadd.f32 %v2362, %v2489
    %v2491 = vpop.f32.mrb[0].mxu0
    %2492 = vmatprep.mubr.bf16.mxu0 %v610
    %2493 = vmatmul.mubr.bf16.gmra.mrb[0].mxu0 %v609
    %v2494 = vpop.f32.mrb[0].mxu0
    %v2495 = vadd.f32 %v2362, %v2494
    %v2496 = vpop.f32.mrb[0].mxu0
    %v2497 = vpop.f32.mrb[0].mxu0
    %v2498 = vadd.f32 %v2362, %v2497
    %v2499 = vpop.f32.mrb[0].mxu0
    %2500 = vmatprep.mubr.bf16.mxu0 %v612
    %2501 = vmatmul.mubr.bf16.gmra.mrb[0].mxu0 %v611
    %v2502 = vpop.f32.mrb[0].mxu0
    %v2503 = vadd.f32 %v2362, %v2502
    %v2504 = vpop.f32.mrb[0].mxu0
    %v2505 = vpop.f32.mrb[0].mxu0
    %v2506 = vadd.f32 %v2362, %v2505
    %v2507 = vpop.f32.mrb[0].mxu0
    %2508 = vmatprep.mubr.bf16.mxu0 %v614
    %2509 = vmatmul.mubr.bf16.gmra.mrb[0].mxu0 %v613
    %v2510 = vpop.f32.mrb[0].mxu0
    %v2511 = vadd.f32 %v2362, %v2510
    %v2512 = vpop.f32.mrb[0].mxu0
    %v2513 = vpop.f32.mrb[0].mxu0
    %v2514 = vadd.f32 %v2362, %v2513
    %v2515 = vpop.f32.mrb[0].mxu0
    %2516 = vmatprep.mubr.bf16.mxu0 %v616
    %2517 = vmatmul.mubr.bf16.gmra.mrb[0].mxu0 %v615
    %v2518 = vpop.f32.mrb[0].mxu0
    %v2519 = vadd.f32 %v2362, %v2518
    %v2520 = vpop.f32.mrb[0].mxu0
    %v2521 = vpop.f32.mrb[0].mxu0
    %v2522 = vadd.f32 %v2362, %v2521
    %v2523 = vpop.f32.mrb[0].mxu0
    %2524 = vdwg.mxu0
    %v2525 = vmax.f32 %v2399, 0.0
    %v2526 = vmax.f32 %v2402, 0.0
    %v2527 = vmax.f32 %v2407, 0.0
    %v2528 = vmax.f32 %v2410, 0.0
    %v2529 = vmax.f32 %v2415, 0.0
    %v2530 = vmax.f32 %v2418, 0.0
    %v2531 = vmax.f32 %v2423, 0.0
    %v2532 = vmax.f32 %v2426, 0.0
    %v2533 = vmax.f32 %v2431, 0.0
    %v2534 = vmax.f32 %v2434, 0.0
    %v2535 = vmax.f32 %v2439, 0.0
    %v2536 = vmax.f32 %v2442, 0.0
    %v2537 = vmax.f32 %v2447, 0.0
    %v2538 = vmax.f32 %v2450, 0.0
    %v2539 = vmax.f32 %v2455, 0.0
    %v2540 = vmax.f32 %v2458, 0.0
    %v2541 = vmax.f32 %v2463, 0.0
    %v2542 = vmax.f32 %v2466, 0.0
    %v2543 = vmax.f32 %v2471, 0.0
    %v2544 = vmax.f32 %v2474, 0.0
    %v2545 = vmax.f32 %v2479, 0.0
    %v2546 = vmax.f32 %v2482, 0.0
    %v2547 = vmax.f32 %v2487, 0.0
    %v2548 = vmax.f32 %v2490, 0.0
    %v2549 = vmax.f32 %v2495, 0.0
    %v2550 = vmax.f32 %v2498, 0.0
    %v2551 = vmax.f32 %v2503, 0.0
    %v2552 = vmax.f32 %v2506, 0.0
    %v2553 = vmax.f32 %v2511, 0.0
    %v2554 = vmax.f32 %v2514, 0.0
    %v2555 = vmax.f32 %v2519, 0.0
    %v2556 = vmax.f32 %v2522, 0.0
    %v2558 = vlaneseq
    %v2559 = vshrl.u32 %v2558, 7
    %v2560 = vsub.s32 0, %v2559
    %v2561 = vrot.slane %v2018, %v2560
    %v2564 = vsel %vm848, %v2525, 0
    %v2567 = vsel %vm848, %v2526, 0
    %v2570 = vsel %vm848, %v2527, 0
    %v2573 = vsel %vm848, %v2528, 0
    %v2576 = vsel %vm848, %v2529, 0
    %v2579 = vsel %vm848, %v2530, 0
    %v2582 = vsel %vm848, %v2531, 0
    %v2585 = vsel %vm848, %v2532, 0
    %v2588 = vsel %vm848, %v2533, 0
    %v2591 = vsel %vm848, %v2534, 0
    %v2594 = vsel %vm848, %v2535, 0
    %v2597 = vsel %vm848, %v2536, 0
    %v2600 = vsel %vm848, %v2537, 0
    %v2603 = vsel %vm848, %v2538, 0
    %v2606 = vsel %vm848, %v2539, 0
    %v2609 = vsel %vm848, %v2540, 0
    %v2612 = vsel %vm848, %v2541, 0
    %v2615 = vsel %vm848, %v2542, 0
    %v2618 = vsel %vm848, %v2543, 0
    %v2621 = vsel %vm848, %v2544, 0
    %v2624 = vsel %vm848, %v2545, 0
    %v2627 = vsel %vm848, %v2546, 0
    %v2630 = vsel %vm848, %v2547, 0
    %v2633 = vsel %vm848, %v2548, 0
    %v2636 = vsel %vm848, %v2549, 0
    %v2639 = vsel %vm848, %v2550, 0
    %v2642 = vsel %vm848, %v2551, 0
    %v2645 = vsel %vm848, %v2552, 0
    %v2648 = vsel %vm848, %v2553, 0
    %v2651 = vsel %vm848, %v2554, 0
    %v2654 = vsel %vm848, %v2555, 0
    %v2657 = vsel %vm848, %v2556, 0
    %2659 = vmatprep.subr.mxu0 0.0
    %2660 = vmatpush1.msra.mxu0 %v2014
    %2661 = vmatprep.subr.mxu0 0.0
    %2662 = vmatpush1.msra.mxu0 %v2015
    %2663 = vmatprep.subr.mxu0 0.0
    %2664 = vmatpush1.msra.mxu0 %v2016
    %2665 = vmatprep.subr.mxu0 0.0
    %2666 = vmatpush1.msra.mxu0 %v2017
    %2667 = vmatprep.subr.mxu0 0.0
    %2668 = vmatpush1.msra.mxu0 0.0
    %2669 = vmatprep.subr.mxu0 0.0
    %2670 = vmatpush1.msra.mxu0 0.0
    %2671 = vmatprep.subr.mxu0 0.0
    %2672 = vmatpush1.msra.mxu0 0.0
    %2673 = vmatprep.subr.mxu0 0.0
    %2674 = vmatpush1.msra.mxu0 0.0
    %2675 = vmatprep.subr.mxu0 0.0
    %2676 = vmatpush1.msra.mxu0 0.0
    %2677 = vmatprep.subr.mxu0 0.0
    %2678 = vmatpush1.msra.mxu0 0.0
    %2679 = vmatprep.subr.mxu0 0.0
    %2680 = vmatpush1.msra.mxu0 0.0
    %2681 = vmatprep.subr.mxu0 0.0
    %2682 = vmatpush1.msra.mxu0 0.0
    %2683 = vmatprep.subr.mxu0 0.0
    %2684 = vmatpush1.msra.mxu0 0.0
    %2685 = vmatprep.subr.mxu0 0.0
    %2686 = vmatpush1.msra.mxu0 0.0
    %2687 = vmatprep.subr.mxu0 0.0
    %2688 = vmatpush1.msra.mxu0 0.0
    %2689 = vmatprep.subr.mxu0 0.0
    %2690 = vmatpush1.msra.mxu0 0.0
    %2691 = vmatprep.subr.mxu0 0.0
    %2692 = vmatpush1.msra.mxu0 0.0
    %2693 = vmatprep.subr.mxu0 0.0
    %2694 = vmatpush1.msra.mxu0 0.0
    %2695 = vmatprep.subr.mxu0 0.0
    %2696 = vmatpush1.msra.mxu0 0.0
    %2697 = vmatprep.subr.mxu0 0.0
    %2698 = vmatpush1.msra.mxu0 0.0
    %2699 = vmatprep.subr.mxu0 0.0
    %2700 = vmatpush1.msra.mxu0 0.0
    %2701 = vmatprep.subr.mxu0 0.0
    %2702 = vmatpush1.msra.mxu0 0.0
    %2703 = vmatprep.subr.mxu0 0.0
    %2704 = vmatpush1.msra.mxu0 0.0
    %2705 = vmatprep.subr.mxu0 0.0
    %2706 = vmatpush1.msra.mxu0 0.0
    %2707 = vmatprep.subr.mxu0 0.0
    %2708 = vmatpush1.msra.mxu0 0.0
    %2709 = vmatprep.subr.mxu0 0.0
    %2710 = vmatpush1.msra.mxu0 0.0
    %2711 = vmatprep.subr.mxu0 0.0
    %2712 = vmatpush1.msra.mxu0 0.0
    %2713 = vmatprep.subr.mxu0 0.0
    %2714 = vmatpush1.msra.mxu0 0.0
    %2715 = vmatprep.subr.mxu0 0.0
    %2716 = vmatpush1.msra.mxu0 0.0
    %2717 = vmatprep.subr.mxu0 0.0
    %2718 = vmatpush1.msra.mxu0 0.0
    %2719 = vmatprep.subr.mxu0 0.0
    %2720 = vmatpush1.msra.mxu0 0.0
    %2721 = vmatprep.subr.mxu0 0.0
    %2722 = vmatpush1.msra.mxu0 0.0
    %2723 = vmatprep.mubr.f32.mxu0 0.0
    %2724 = vmatmul.mubr.f32.gmra.mrb[0].mxu0 %v2564
    %v2725 = vpop.f32.mrb[0].mxu0
    %v2726 = vadd.f32 %v2561, %v2725
    %v2727 = vpop.f32.mrb[0].mxu0
    %2728 = vmatprep.mubr.f32.mxu0 0.0
    %2729 = vmatmul.mubr.f32.gmra.mrb[0].mxu0 %v2567
    %v2730 = vpop.f32.mrb[0].mxu0
    %v2731 = vadd.f32 %v2561, %v2730
    %v2732 = vpop.f32.mrb[0].mxu0
    %2733 = vmatprep.mubr.f32.mxu0 0.0
    %2734 = vmatmul.mubr.f32.gmra.mrb[0].mxu0 %v2570
    %v2735 = vpop.f32.mrb[0].mxu0
    %v2736 = vadd.f32 %v2561, %v2735
    %v2737 = vpop.f32.mrb[0].mxu0
    %2738 = vmatprep.mubr.f32.mxu0 0.0
    %2739 = vmatmul.mubr.f32.gmra.mrb[0].mxu0 %v2573
    %v2740 = vpop.f32.mrb[0].mxu0
    %v2741 = vadd.f32 %v2561, %v2740
    %v2742 = vpop.f32.mrb[0].mxu0
    %2743 = vmatprep.mubr.f32.mxu0 0.0
    %2744 = vmatmul.mubr.f32.gmra.mrb[0].mxu0 %v2576
    %v2745 = vpop.f32.mrb[0].mxu0
    %v2746 = vadd.f32 %v2561, %v2745
    %v2747 = vpop.f32.mrb[0].mxu0
    %2748 = vmatprep.mubr.f32.mxu0 0.0
    %2749 = vmatmul.mubr.f32.gmra.mrb[0].mxu0 %v2579
    %v2750 = vpop.f32.mrb[0].mxu0
    %v2751 = vadd.f32 %v2561, %v2750
    %v2752 = vpop.f32.mrb[0].mxu0
    %2753 = vmatprep.mubr.f32.mxu0 0.0
    %2754 = vmatmul.mubr.f32.gmra.mrb[0].mxu0 %v2582
    %v2755 = vpop.f32.mrb[0].mxu0
    %v2756 = vadd.f32 %v2561, %v2755
    %v2757 = vpop.f32.mrb[0].mxu0
    %2758 = vmatprep.mubr.f32.mxu0 0.0
    %2759 = vmatmul.mubr.f32.gmra.mrb[0].mxu0 %v2585
    %v2760 = vpop.f32.mrb[0].mxu0
    %v2761 = vadd.f32 %v2561, %v2760
    %v2762 = vpop.f32.mrb[0].mxu0
    %2763 = vmatprep.mubr.f32.mxu0 0.0
    %2764 = vmatmul.mubr.f32.gmra.mrb[0].mxu0 %v2588
    %v2765 = vpop.f32.mrb[0].mxu0
    %v2766 = vadd.f32 %v2561, %v2765
    %v2767 = vpop.f32.mrb[0].mxu0
    %2768 = vmatprep.mubr.f32.mxu0 0.0
    %2769 = vmatmul.mubr.f32.gmra.mrb[0].mxu0 %v2591
    %v2770 = vpop.f32.mrb[0].mxu0
    %v2771 = vadd.f32 %v2561, %v2770
    %v2772 = vpop.f32.mrb[0].mxu0
    %2773 = vmatprep.mubr.f32.mxu0 0.0
    %2774 = vmatmul.mubr.f32.gmra.mrb[0].mxu0 %v2594
    %v2775 = vpop.f32.mrb[0].mxu0
    %v2776 = vadd.f32 %v2561, %v2775
    %v2777 = vpop.f32.mrb[0].mxu0
    %2778 = vmatprep.mubr.f32.mxu0 0.0
    %2779 = vmatmul.mubr.f32.gmra.mrb[0].mxu0 %v2597
    %v2780 = vpop.f32.mrb[0].mxu0
    %v2781 = vadd.f32 %v2561, %v2780
    %v2782 = vpop.f32.mrb[0].mxu0
    %2783 = vmatprep.mubr.f32.mxu0 0.0
    %2784 = vmatmul.mubr.f32.gmra.mrb[0].mxu0 %v2600
    %v2785 = vpop.f32.mrb[0].mxu0
    %v2786 = vadd.f32 %v2561, %v2785
    %v2787 = vpop.f32.mrb[0].mxu0
    %2788 = vmatprep.mubr.f32.mxu0 0.0
    %2789 = vmatmul.mubr.f32.gmra.mrb[0].mxu0 %v2603
    %v2790 = vpop.f32.mrb[0].mxu0
    %v2791 = vadd.f32 %v2561, %v2790
    %v2792 = vpop.f32.mrb[0].mxu0
    %2793 = vmatprep.mubr.f32.mxu0 0.0
    %2794 = vmatmul.mubr.f32.gmra.mrb[0].mxu0 %v2606
    %v2795 = vpop.f32.mrb[0].mxu0
    %v2796 = vadd.f32 %v2561, %v2795
    %v2797 = vpop.f32.mrb[0].mxu0
    %2798 = vmatprep.mubr.f32.mxu0 0.0
    %2799 = vmatmul.mubr.f32.gmra.mrb[0].mxu0 %v2609
    %v2800 = vpop.f32.mrb[0].mxu0
    %v2801 = vadd.f32 %v2561, %v2800
    %v2802 = vpop.f32.mrb[0].mxu0
    %2803 = vmatprep.mubr.f32.mxu0 0.0
    %2804 = vmatmul.mubr.f32.gmra.mrb[0].mxu0 %v2612
    %v2805 = vpop.f32.mrb[0].mxu0
    %v2806 = vadd.f32 %v2561, %v2805
    %v2807 = vpop.f32.mrb[0].mxu0
    %2808 = vmatprep.mubr.f32.mxu0 0.0
    %2809 = vmatmul.mubr.f32.gmra.mrb[0].mxu0 %v2615
    %v2810 = vpop.f32.mrb[0].mxu0
    %v2811 = vadd.f32 %v2561, %v2810
    %v2812 = vpop.f32.mrb[0].mxu0
    %2813 = vmatprep.mubr.f32.mxu0 0.0
    %2814 = vmatmul.mubr.f32.gmra.mrb[0].mxu0 %v2618
    %v2815 = vpop.f32.mrb[0].mxu0
    %v2816 = vadd.f32 %v2561, %v2815
    %v2817 = vpop.f32.mrb[0].mxu0
    %2818 = vmatprep.mubr.f32.mxu0 0.0
    %2819 = vmatmul.mubr.f32.gmra.mrb[0].mxu0 %v2621
    %v2820 = vpop.f32.mrb[0].mxu0
    %v2821 = vadd.f32 %v2561, %v2820
    %v2822 = vpop.f32.mrb[0].mxu0
    %2823 = vmatprep.mubr.f32.mxu0 0.0
    %2824 = vmatmul.mubr.f32.gmra.mrb[0].mxu0 %v2624
    %v2825 = vpop.f32.mrb[0].mxu0
    %v2826 = vadd.f32 %v2561, %v2825
    %v2827 = vpop.f32.mrb[0].mxu0
    %2828 = vmatprep.mubr.f32.mxu0 0.0
    %2829 = vmatmul.mubr.f32.gmra.mrb[0].mxu0 %v2627
    %v2830 = vpop.f32.mrb[0].mxu0
    %v2831 = vadd.f32 %v2561, %v2830
    %v2832 = vpop.f32.mrb[0].mxu0
    %2833 = vmatprep.mubr.f32.mxu0 0.0
    %2834 = vmatmul.mubr.f32.gmra.mrb[0].mxu0 %v2630
    %v2835 = vpop.f32.mrb[0].mxu0
    %v2836 = vadd.f32 %v2561, %v2835
    %v2837 = vpop.f32.mrb[0].mxu0
    %2838 = vmatprep.mubr.f32.mxu0 0.0
    %2839 = vmatmul.mubr.f32.gmra.mrb[0].mxu0 %v2633
    %v2840 = vpop.f32.mrb[0].mxu0
    %v2841 = vadd.f32 %v2561, %v2840
    %v2842 = vpop.f32.mrb[0].mxu0
    %2843 = vmatprep.mubr.f32.mxu0 0.0
    %2844 = vmatmul.mubr.f32.gmra.mrb[0].mxu0 %v2636
    %v2845 = vpop.f32.mrb[0].mxu0
    %v2846 = vadd.f32 %v2561, %v2845
    %v2847 = vpop.f32.mrb[0].mxu0
    %2848 = vmatprep.mubr.f32.mxu0 0.0
    %2849 = vmatmul.mubr.f32.gmra.mrb[0].mxu0 %v2639
    %v2850 = vpop.f32.mrb[0].mxu0
    %v2851 = vadd.f32 %v2561, %v2850
    %v2852 = vpop.f32.mrb[0].mxu0
    %2853 = vmatprep.mubr.f32.mxu0 0.0
    %2854 = vmatmul.mubr.f32.gmra.mrb[0].mxu0 %v2642
    %v2855 = vpop.f32.mrb[0].mxu0
    %v2856 = vadd.f32 %v2561, %v2855
    %v2857 = vpop.f32.mrb[0].mxu0
    %2858 = vmatprep.mubr.f32.mxu0 0.0
    %2859 = vmatmul.mubr.f32.gmra.mrb[0].mxu0 %v2645
    %v2860 = vpop.f32.mrb[0].mxu0
    %v2861 = vadd.f32 %v2561, %v2860
    %v2862 = vpop.f32.mrb[0].mxu0
    %2863 = vmatprep.mubr.f32.mxu0 0.0
    %2864 = vmatmul.mubr.f32.gmra.mrb[0].mxu0 %v2648
    %v2865 = vpop.f32.mrb[0].mxu0
    %v2866 = vadd.f32 %v2561, %v2865
    %v2867 = vpop.f32.mrb[0].mxu0
    %2868 = vmatprep.mubr.f32.mxu0 0.0
    %2869 = vmatmul.mubr.f32.gmra.mrb[0].mxu0 %v2651
    %v2870 = vpop.f32.mrb[0].mxu0
    %v2871 = vadd.f32 %v2561, %v2870
    %v2872 = vpop.f32.mrb[0].mxu0
    %2873 = vmatprep.mubr.f32.mxu0 0.0
    %2874 = vmatmul.mubr.f32.gmra.mrb[0].mxu0 %v2654
    %v2875 = vpop.f32.mrb[0].mxu0
    %v2876 = vadd.f32 %v2561, %v2875
    %v2877 = vpop.f32.mrb[0].mxu0
    %2878 = vmatprep.mubr.f32.mxu0 0.0
    %2879 = vmatmul.mubr.f32.gmra.mrb[0].mxu0 %v2657
    %v2880 = vpop.f32.mrb[0].mxu0
    %v2881 = vadd.f32 %v2561, %v2880
    %v2882 = vpop.f32.mrb[0].mxu0
    %2883 = vdwg.mxu0
    %v2884 = vmax.f32 %v2726, 0.0
    %v2885 = vmax.f32 %v2731, 0.0
    %v2886 = vmax.f32 %v2736, 0.0
    %v2887 = vmax.f32 %v2741, 0.0
    %v2888 = vmax.f32 %v2746, 0.0
    %v2889 = vmax.f32 %v2751, 0.0
    %v2890 = vmax.f32 %v2756, 0.0
    %v2891 = vmax.f32 %v2761, 0.0
    %v2892 = vmax.f32 %v2766, 0.0
    %v2893 = vmax.f32 %v2771, 0.0
    %v2894 = vmax.f32 %v2776, 0.0
    %v2895 = vmax.f32 %v2781, 0.0
    %v2896 = vmax.f32 %v2786, 0.0
    %v2897 = vmax.f32 %v2791, 0.0
    %v2898 = vmax.f32 %v2796, 0.0
    %v2899 = vmax.f32 %v2801, 0.0
    %v2900 = vmax.f32 %v2806, 0.0
    %v2901 = vmax.f32 %v2811, 0.0
    %v2902 = vmax.f32 %v2816, 0.0
    %v2903 = vmax.f32 %v2821, 0.0
    %v2904 = vmax.f32 %v2826, 0.0
    %v2905 = vmax.f32 %v2831, 0.0
    %v2906 = vmax.f32 %v2836, 0.0
    %v2907 = vmax.f32 %v2841, 0.0
    %v2908 = vmax.f32 %v2846, 0.0
    %v2909 = vmax.f32 %v2851, 0.0
    %v2910 = vmax.f32 %v2856, 0.0
    %v2911 = vmax.f32 %v2861, 0.0
    %v2912 = vmax.f32 %v2866, 0.0
    %v2913 = vmax.f32 %v2871, 0.0
    %v2914 = vmax.f32 %v2876, 0.0
    %v2915 = vmax.f32 %v2881, 0.0
    %v2916 = vsel %vm848, %v2884, 0.0
    %v2917 = vsel %vm848, %v2885, 0.0
    %v2918 = vadd.f32 %v2916, %v2917
    %v2919 = vsel %vm848, %v2886, 0.0
    %v2920 = vadd.f32 %v2918, %v2919
    %v2921 = vsel %vm848, %v2887, 0.0
    %v2922 = vadd.f32 %v2920, %v2921
    %v2923 = vsel %vm848, %v2888, 0.0
    %v2924 = vadd.f32 %v2922, %v2923
    %v2925 = vsel %vm848, %v2889, 0.0
    %v2926 = vadd.f32 %v2924, %v2925
    %v2927 = vsel %vm848, %v2890, 0.0
    %v2928 = vadd.f32 %v2926, %v2927
    %v2929 = vsel %vm848, %v2891, 0.0
    %v2930 = vadd.f32 %v2928, %v2929
    %v2931 = vsel %vm848, %v2892, 0.0
    %v2932 = vadd.f32 %v2930, %v2931
    %v2933 = vsel %vm848, %v2893, 0.0
    %v2934 = vadd.f32 %v2932, %v2933
    %v2935 = vsel %vm848, %v2894, 0.0
    %v2936 = vadd.f32 %v2934, %v2935
    %v2937 = vsel %vm848, %v2895, 0.0
    %v2938 = vadd.f32 %v2936, %v2937
    %v2939 = vsel %vm848, %v2896, 0.0
    %v2940 = vadd.f32 %v2938, %v2939
    %v2941 = vsel %vm848, %v2897, 0.0
    %v2942 = vadd.f32 %v2940, %v2941
    %v2943 = vsel %vm848, %v2898, 0.0
    %v2944 = vadd.f32 %v2942, %v2943
    %v2945 = vsel %vm848, %v2899, 0.0
    %v2946 = vadd.f32 %v2944, %v2945
    %v2947 = vsel %vm848, %v2900, 0.0
    %v2948 = vadd.f32 %v2946, %v2947
    %v2949 = vsel %vm848, %v2901, 0.0
    %v2950 = vadd.f32 %v2948, %v2949
    %v2951 = vsel %vm848, %v2902, 0.0
    %v2952 = vadd.f32 %v2950, %v2951
    %v2953 = vsel %vm848, %v2903, 0.0
    %v2954 = vadd.f32 %v2952, %v2953
    %v2955 = vsel %vm848, %v2904, 0.0
    %v2956 = vadd.f32 %v2954, %v2955
    %v2957 = vsel %vm848, %v2905, 0.0
    %v2958 = vadd.f32 %v2956, %v2957
    %v2959 = vsel %vm848, %v2906, 0.0
    %v2960 = vadd.f32 %v2958, %v2959
    %v2961 = vsel %vm848, %v2907, 0.0
    %v2962 = vadd.f32 %v2960, %v2961
    %v2963 = vsel %vm848, %v2908, 0.0
    %v2964 = vadd.f32 %v2962, %v2963
    %v2965 = vsel %vm848, %v2909, 0.0
    %v2966 = vadd.f32 %v2964, %v2965
    %v2967 = vsel %vm848, %v2910, 0.0
    %v2968 = vadd.f32 %v2966, %v2967
    %v2969 = vsel %vm848, %v2911, 0.0
    %v2970 = vadd.f32 %v2968, %v2969
    %v2971 = vsel %vm848, %v2912, 0.0
    %v2972 = vadd.f32 %v2970, %v2971
    %v2973 = vsel %vm848, %v2913, 0.0
    %v2974 = vadd.f32 %v2972, %v2973
    %v2975 = vsel %vm848, %v2914, 0.0
    %v2976 = vadd.f32 %v2974, %v2975
    %v2977 = vsel %vm848, %v2915, 0.0
    %v2978 = vadd.f32 %v2976, %v2977
    %v2979 = vrot.slane %v2978, 4
    %v2980 = vadd.f32 %v2978, %v2979
    %v2981 = vrot.slane %v2980, 2
    %v2982 = vadd.f32 %v2980, %v2981
    %v2983 = vrot.slane %v2982, 1
    %v2984 = vadd.f32 %v2982, %v2983
    %v2985 = vmul.f32 %v2984, 0.00390625
    %v2986 = vsub.f32 %v2884, %v2985
    %v2987 = vsub.f32 %v2885, %v2985
    %v2988 = vsub.f32 %v2886, %v2985
    %v2989 = vsub.f32 %v2887, %v2985
    %v2990 = vsub.f32 %v2888, %v2985
    %v2991 = vsub.f32 %v2889, %v2985
    %v2992 = vsub.f32 %v2890, %v2985
    %v2993 = vsub.f32 %v2891, %v2985
    %v2994 = vsub.f32 %v2892, %v2985
    %v2995 = vsub.f32 %v2893, %v2985
    %v2996 = vsub.f32 %v2894, %v2985
    %v2997 = vsub.f32 %v2895, %v2985
    %v2998 = vsub.f32 %v2896, %v2985
    %v2999 = vsub.f32 %v2897, %v2985
    %v3000 = vsub.f32 %v2898, %v2985
    %v3001 = vsub.f32 %v2899, %v2985
    %v3002 = vsub.f32 %v2900, %v2985
    %v3003 = vsub.f32 %v2901, %v2985
    %v3004 = vsub.f32 %v2902, %v2985
    %v3005 = vsub.f32 %v2903, %v2985
    %v3006 = vsub.f32 %v2904, %v2985
    %v3007 = vsub.f32 %v2905, %v2985
    %v3008 = vsub.f32 %v2906, %v2985
    %v3009 = vsub.f32 %v2907, %v2985
    %v3010 = vsub.f32 %v2908, %v2985
    %v3011 = vsub.f32 %v2909, %v2985
    %v3012 = vsub.f32 %v2910, %v2985
    %v3013 = vsub.f32 %v2911, %v2985
    %v3014 = vsub.f32 %v2912, %v2985
    %v3015 = vsub.f32 %v2913, %v2985
    %v3016 = vsub.f32 %v2914, %v2985
    %v3017 = vsub.f32 %v2915, %v2985
    %v3018 = vmul.f32 %v2986, %v2986
    %v3019 = vmul.f32 %v2987, %v2987
    %v3020 = vmul.f32 %v2988, %v2988
    %v3021 = vmul.f32 %v2989, %v2989
    %v3022 = vmul.f32 %v2990, %v2990
    %v3023 = vmul.f32 %v2991, %v2991
    %v3024 = vmul.f32 %v2992, %v2992
    %v3025 = vmul.f32 %v2993, %v2993
    %v3026 = vmul.f32 %v2994, %v2994
    %v3027 = vmul.f32 %v2995, %v2995
    %v3028 = vmul.f32 %v2996, %v2996
    %v3029 = vmul.f32 %v2997, %v2997
    %v3030 = vmul.f32 %v2998, %v2998
    %v3031 = vmul.f32 %v2999, %v2999
    %v3032 = vmul.f32 %v3000, %v3000
    %v3033 = vmul.f32 %v3001, %v3001
    %v3034 = vmul.f32 %v3002, %v3002
    %v3035 = vmul.f32 %v3003, %v3003
    %v3036 = vmul.f32 %v3004, %v3004
    %v3037 = vmul.f32 %v3005, %v3005
    %v3038 = vmul.f32 %v3006, %v3006
    %v3039 = vmul.f32 %v3007, %v3007
    %v3040 = vmul.f32 %v3008, %v3008
    %v3041 = vmul.f32 %v3009, %v3009
    %v3042 = vmul.f32 %v3010, %v3010
    %v3043 = vmul.f32 %v3011, %v3011
    %v3044 = vmul.f32 %v3012, %v3012
    %v3045 = vmul.f32 %v3013, %v3013
    %v3046 = vmul.f32 %v3014, %v3014
    %v3047 = vmul.f32 %v3015, %v3015
    %v3048 = vmul.f32 %v3016, %v3016
    %v3049 = vmul.f32 %v3017, %v3017
    %v3050 = vsel %vm848, %v3018, 0.0
    %v3051 = vsel %vm848, %v3019, 0.0
    %v3052 = vadd.f32 %v3050, %v3051
    %v3053 = vsel %vm848, %v3020, 0.0
    %v3054 = vadd.f32 %v3052, %v3053
    %v3055 = vsel %vm848, %v3021, 0.0
    %v3056 = vadd.f32 %v3054, %v3055
    %v3057 = vsel %vm848, %v3022, 0.0
    %v3058 = vadd.f32 %v3056, %v3057
    %v3059 = vsel %vm848, %v3023, 0.0
    %v3060 = vadd.f32 %v3058, %v3059
    %v3061 = vsel %vm848, %v3024, 0.0
    %v3062 = vadd.f32 %v3060, %v3061
    %v3063 = vsel %vm848, %v3025, 0.0
    %v3064 = vadd.f32 %v3062, %v3063
    %v3065 = vsel %vm848, %v3026, 0.0
    %v3066 = vadd.f32 %v3064, %v3065
    %v3067 = vsel %vm848, %v3027, 0.0
    %v3068 = vadd.f32 %v3066, %v3067
    %v3069 = vsel %vm848, %v3028, 0.0
    %v3070 = vadd.f32 %v3068, %v3069
    %v3071 = vsel %vm848, %v3029, 0.0
    %v3072 = vadd.f32 %v3070, %v3071
    %v3073 = vsel %vm848, %v3030, 0.0
    %v3074 = vadd.f32 %v3072, %v3073
    %v3075 = vsel %vm848, %v3031, 0.0
    %v3076 = vadd.f32 %v3074, %v3075
    %v3077 = vsel %vm848, %v3032, 0.0
    %v3078 = vadd.f32 %v3076, %v3077
    %v3079 = vsel %vm848, %v3033, 0.0
    %v3080 = vadd.f32 %v3078, %v3079
    %v3081 = vsel %vm848, %v3034, 0.0
    %v3082 = vadd.f32 %v3080, %v3081
    %v3083 = vsel %vm848, %v3035, 0.0
    %v3084 = vadd.f32 %v3082, %v3083
    %v3085 = vsel %vm848, %v3036, 0.0
    %v3086 = vadd.f32 %v3084, %v3085
    %v3087 = vsel %vm848, %v3037, 0.0
    %v3088 = vadd.f32 %v3086, %v3087
    %v3089 = vsel %vm848, %v3038, 0.0
    %v3090 = vadd.f32 %v3088, %v3089
    %v3091 = vsel %vm848, %v3039, 0.0
    %v3092 = vadd.f32 %v3090, %v3091
    %v3093 = vsel %vm848, %v3040, 0.0
    %v3094 = vadd.f32 %v3092, %v3093
    %v3095 = vsel %vm848, %v3041, 0.0
    %v3096 = vadd.f32 %v3094, %v3095
    %v3097 = vsel %vm848, %v3042, 0.0
    %v3098 = vadd.f32 %v3096, %v3097
    %v3099 = vsel %vm848, %v3043, 0.0
    %v3100 = vadd.f32 %v3098, %v3099
    %v3101 = vsel %vm848, %v3044, 0.0
    %v3102 = vadd.f32 %v3100, %v3101
    %v3103 = vsel %vm848, %v3045, 0.0
    %v3104 = vadd.f32 %v3102, %v3103
    %v3105 = vsel %vm848, %v3046, 0.0
    %v3106 = vadd.f32 %v3104, %v3105
    %v3107 = vsel %vm848, %v3047, 0.0
    %v3108 = vadd.f32 %v3106, %v3107
    %v3109 = vsel %vm848, %v3048, 0.0
    %v3110 = vadd.f32 %v3108, %v3109
    %v3111 = vsel %vm848, %v3049, 0.0
    %v3112 = vadd.f32 %v3110, %v3111
    %v3113 = vrot.slane %v3112, 4
    %v3114 = vadd.f32 %v3112, %v3113
    %v3115 = vrot.slane %v3114, 2
    %v3116 = vadd.f32 %v3114, %v3115
    %v3117 = vrot.slane %v3116, 1
    %v3118 = vadd.f32 %v3116, %v3117
    %v3119 = vmul.f32 %v3118, 0.00390625
    %v3120 = vadd.f32 %v3119, 1e-05
    %v3121 = vrsqrt.pop %v3120
    %v3122 = vmul.f32 %v2019, %v3121
    %v3124 = vlaneseq
    %v3125 = vshrl.u32 %v3124, 7
    %v3126 = vsub.s32 0, %v3125
    %v3127 = vrot.slane %v3122, %v3126
    %v3129 = vmul.f32 %v2986, %v3127
    %v3130 = vmul.f32 %v2987, %v3127
    %v3131 = vmul.f32 %v2988, %v3127
    %v3132 = vmul.f32 %v2989, %v3127
    %v3133 = vmul.f32 %v2990, %v3127
    %v3134 = vmul.f32 %v2991, %v3127
    %v3135 = vmul.f32 %v2992, %v3127
    %v3136 = vmul.f32 %v2993, %v3127
    %v3137 = vmul.f32 %v2994, %v3127
    %v3138 = vmul.f32 %v2995, %v3127
    %v3139 = vmul.f32 %v2996, %v3127
    %v3140 = vmul.f32 %v2997, %v3127
    %v3141 = vmul.f32 %v2998, %v3127
    %v3142 = vmul.f32 %v2999, %v3127
    %v3143 = vmul.f32 %v3000, %v3127
    %v3144 = vmul.f32 %v3001, %v3127
    %v3145 = vmul.f32 %v3002, %v3127
    %v3146 = vmul.f32 %v3003, %v3127
    %v3147 = vmul.f32 %v3004, %v3127
    %v3148 = vmul.f32 %v3005, %v3127
    %v3149 = vmul.f32 %v3006, %v3127
    %v3150 = vmul.f32 %v3007, %v3127
    %v3151 = vmul.f32 %v3008, %v3127
    %v3152 = vmul.f32 %v3009, %v3127
    %v3153 = vmul.f32 %v3010, %v3127
    %v3154 = vmul.f32 %v3011, %v3127
    %v3155 = vmul.f32 %v3012, %v3127
    %v3156 = vmul.f32 %v3013, %v3127
    %v3157 = vmul.f32 %v3014, %v3127
    %v3158 = vmul.f32 %v3015, %v3127
    %v3159 = vmul.f32 %v3016, %v3127
    %v3160 = vmul.f32 %v3017, %v3127
    %v3162 = vlaneseq
    %v3163 = vshrl.u32 %v3162, 7
    %v3164 = vsub.s32 0, %v3163
    %v3165 = vrot.slane %v2020, %v3164
    %v3167 = vadd.f32 %v3129, %v3165
    %v3168 = vadd.f32 %v3130, %v3165
    %v3169 = vadd.f32 %v3131, %v3165
    %v3170 = vadd.f32 %v3132, %v3165
    %v3171 = vadd.f32 %v3133, %v3165
    %v3172 = vadd.f32 %v3134, %v3165
    %v3173 = vadd.f32 %v3135, %v3165
    %v3174 = vadd.f32 %v3136, %v3165
    %v3175 = vadd.f32 %v3137, %v3165
    %v3176 = vadd.f32 %v3138, %v3165
    %v3177 = vadd.f32 %v3139, %v3165
    %v3178 = vadd.f32 %v3140, %v3165
    %v3179 = vadd.f32 %v3141, %v3165
    %v3180 = vadd.f32 %v3142, %v3165
    %v3181 = vadd.f32 %v3143, %v3165
    %v3182 = vadd.f32 %v3144, %v3165
    %v3183 = vadd.f32 %v3145, %v3165
    %v3184 = vadd.f32 %v3146, %v3165
    %v3185 = vadd.f32 %v3147, %v3165
    %v3186 = vadd.f32 %v3148, %v3165
    %v3187 = vadd.f32 %v3149, %v3165
    %v3188 = vadd.f32 %v3150, %v3165
    %v3189 = vadd.f32 %v3151, %v3165
    %v3190 = vadd.f32 %v3152, %v3165
    %v3191 = vadd.f32 %v3153, %v3165
    %v3192 = vadd.f32 %v3154, %v3165
    %v3193 = vadd.f32 %v3155, %v3165
    %v3194 = vadd.f32 %v3156, %v3165
    %v3195 = vadd.f32 %v3157, %v3165
    %v3196 = vadd.f32 %v3158, %v3165
    %v3197 = vadd.f32 %v3159, %v3165
    %v3198 = vadd.f32 %v3160, %v3165
    %v3199 = vmul.f32 %v3167, %v1520
    %v3200 = vmul.f32 %v3168, %v1525
    %v3201 = vmul.f32 %v3169, %v1530
    %v3202 = vmul.f32 %v3170, %v1535
    %v3203 = vmul.f32 %v3171, %v1540
    %v3204 = vmul.f32 %v3172, %v1545
    %v3205 = vmul.f32 %v3173, %v1550
    %v3206 = vmul.f32 %v3174, %v1555
    %v3207 = vmul.f32 %v3175, %v1560
    %v3208 = vmul.f32 %v3176, %v1565
    %v3209 = vmul.f32 %v3177, %v1570
    %v3210 = vmul.f32 %v3178, %v1575
    %v3211 = vmul.f32 %v3179, %v1580
    %v3212 = vmul.f32 %v3180, %v1585
    %v3213 = vmul.f32 %v3181, %v1590
    %v3214 = vmul.f32 %v3182, %v1595
    %v3215 = vmul.f32 %v3183, %v1600
    %v3216 = vmul.f32 %v3184, %v1605
    %v3217 = vmul.f32 %v3185, %v1610
    %v3218 = vmul.f32 %v3186, %v1615
    %v3219 = vmul.f32 %v3187, %v1620
    %v3220 = vmul.f32 %v3188, %v1625
    %v3221 = vmul.f32 %v3189, %v1630
    %v3222 = vmul.f32 %v3190, %v1635
    %v3223 = vmul.f32 %v3191, %v1640
    %v3224 = vmul.f32 %v3192, %v1645
    %v3225 = vmul.f32 %v3193, %v1650
    %v3226 = vmul.f32 %v3194, %v1655
    %v3227 = vmul.f32 %v3195, %v1660
    %v3228 = vmul.f32 %v3196, %v1665
    %v3229 = vmul.f32 %v3197, %v1670
    %v3230 = vmul.f32 %v3198, %v1675
    %v3231 = vsel %vm848, %v3199, 0.0
    %v3232 = vsel %vm848, %v3200, 0.0
    %v3233 = vadd.f32 %v3231, %v3232
    %v3234 = vsel %vm848, %v3201, 0.0
    %v3235 = vadd.f32 %v3233, %v3234
    %v3236 = vsel %vm848, %v3202, 0.0
    %v3237 = vadd.f32 %v3235, %v3236
    %v3238 = vsel %vm848, %v3203, 0.0
    %v3239 = vadd.f32 %v3237, %v3238
    %v3240 = vsel %vm848, %v3204, 0.0
    %v3241 = vadd.f32 %v3239, %v3240
    %v3242 = vsel %vm848, %v3205, 0.0
    %v3243 = vadd.f32 %v3241, %v3242
    %v3244 = vsel %vm848, %v3206, 0.0
    %v3245 = vadd.f32 %v3243, %v3244
    %v3246 = vsel %vm848, %v3207, 0.0
    %v3247 = vadd.f32 %v3245, %v3246
    %v3248 = vsel %vm848, %v3208, 0.0
    %v3249 = vadd.f32 %v3247, %v3248
    %v3250 = vsel %vm848, %v3209, 0.0
    %v3251 = vadd.f32 %v3249, %v3250
    %v3252 = vsel %vm848, %v3210, 0.0
    %v3253 = vadd.f32 %v3251, %v3252
    %v3254 = vsel %vm848, %v3211, 0.0
    %v3255 = vadd.f32 %v3253, %v3254
    %v3256 = vsel %vm848, %v3212, 0.0
    %v3257 = vadd.f32 %v3255, %v3256
    %v3258 = vsel %vm848, %v3213, 0.0
    %v3259 = vadd.f32 %v3257, %v3258
    %v3260 = vsel %vm848, %v3214, 0.0
    %v3261 = vadd.f32 %v3259, %v3260
    %v3262 = vsel %vm848, %v3215, 0.0
    %v3263 = vadd.f32 %v3261, %v3262
    %v3264 = vsel %vm848, %v3216, 0.0
    %v3265 = vadd.f32 %v3263, %v3264
    %v3266 = vsel %vm848, %v3217, 0.0
    %v3267 = vadd.f32 %v3265, %v3266
    %v3268 = vsel %vm848, %v3218, 0.0
    %v3269 = vadd.f32 %v3267, %v3268
    %v3270 = vsel %vm848, %v3219, 0.0
    %v3271 = vadd.f32 %v3269, %v3270
    %v3272 = vsel %vm848, %v3220, 0.0
    %v3273 = vadd.f32 %v3271, %v3272
    %v3274 = vsel %vm848, %v3221, 0.0
    %v3275 = vadd.f32 %v3273, %v3274
    %v3276 = vsel %vm848, %v3222, 0.0
    %v3277 = vadd.f32 %v3275, %v3276
    %v3278 = vsel %vm848, %v3223, 0.0
    %v3279 = vadd.f32 %v3277, %v3278
    %v3280 = vsel %vm848, %v3224, 0.0
    %v3281 = vadd.f32 %v3279, %v3280
    %v3282 = vsel %vm848, %v3225, 0.0
    %v3283 = vadd.f32 %v3281, %v3282
    %v3284 = vsel %vm848, %v3226, 0.0
    %v3285 = vadd.f32 %v3283, %v3284
    %v3286 = vsel %vm848, %v3227, 0.0
    %v3287 = vadd.f32 %v3285, %v3286
    %v3288 = vsel %vm848, %v3228, 0.0
    %v3289 = vadd.f32 %v3287, %v3288
    %v3290 = vsel %vm848, %v3229, 0.0
    %v3291 = vadd.f32 %v3289, %v3290
    %v3292 = vsel %vm848, %v3230, 0.0
    %v3293 = vadd.f32 %v3291, %v3292
    %v3294 = vrot.slane %v3293, 4
    %v3295 = vadd.f32 %v3293, %v3294
    %v3296 = vrot.slane %v3295, 2
    %v3297 = vadd.f32 %v3295, %v3296
    %v3298 = vrot.slane %v3297, 1
    %v3299 = vadd.f32 %v3297, %v3298
    %v3300 = vmul.f32 %v3167, %v1780
    %v3301 = vmul.f32 %v3168, %v1784
    %v3302 = vmul.f32 %v3169, %v1788
    %v3303 = vmul.f32 %v3170, %v1792
    %v3304 = vmul.f32 %v3171, %v1796
    %v3305 = vmul.f32 %v3172, %v1800
    %v3306 = vmul.f32 %v3173, %v1804
    %v3307 = vmul.f32 %v3174, %v1808
    %v3308 = vmul.f32 %v3175, %v1812
    %v3309 = vmul.f32 %v3176, %v1816
    %v3310 = vmul.f32 %v3177, %v1820
    %v3311 = vmul.f32 %v3178, %v1824
    %v3312 = vmul.f32 %v3179, %v1828
    %v3313 = vmul.f32 %v3180, %v1832
    %v3314 = vmul.f32 %v3181, %v1836
    %v3315 = vmul.f32 %v3182, %v1840
    %v3316 = vmul.f32 %v3183, %v1844
    %v3317 = vmul.f32 %v3184, %v1848
    %v3318 = vmul.f32 %v3185, %v1852
    %v3319 = vmul.f32 %v3186, %v1856
    %v3320 = vmul.f32 %v3187, %v1860
    %v3321 = vmul.f32 %v3188, %v1864
    %v3322 = vmul.f32 %v3189, %v1868
    %v3323 = vmul.f32 %v3190, %v1872
    %v3324 = vmul.f32 %v3191, %v1876
    %v3325 = vmul.f32 %v3192, %v1880
    %v3326 = vmul.f32 %v3193, %v1884
    %v3327 = vmul.f32 %v3194, %v1888
    %v3328 = vmul.f32 %v3195, %v1892
    %v3329 = vmul.f32 %v3196, %v1896
    %v3330 = vmul.f32 %v3197, %v1900
    %v3331 = vmul.f32 %v3198, %v1904
    %v3332 = vsel %vm848, %v3300, 0.0
    %v3333 = vsel %vm848, %v3301, 0.0
    %v3334 = vadd.f32 %v3332, %v3333
    %v3335 = vsel %vm848, %v3302, 0.0
    %v3336 = vadd.f32 %v3334, %v3335
    %v3337 = vsel %vm848, %v3303, 0.0
    %v3338 = vadd.f32 %v3336, %v3337
    %v3339 = vsel %vm848, %v3304, 0.0
    %v3340 = vadd.f32 %v3338, %v3339
    %v3341 = vsel %vm848, %v3305, 0.0
    %v3342 = vadd.f32 %v3340, %v3341
    %v3343 = vsel %vm848, %v3306, 0.0
    %v3344 = vadd.f32 %v3342, %v3343
    %v3345 = vsel %vm848, %v3307, 0.0
    %v3346 = vadd.f32 %v3344, %v3345
    %v3347 = vsel %vm848, %v3308, 0.0
    %v3348 = vadd.f32 %v3346, %v3347
    %v3349 = vsel %vm848, %v3309, 0.0
    %v3350 = vadd.f32 %v3348, %v3349
    %v3351 = vsel %vm848, %v3310, 0.0
    %v3352 = vadd.f32 %v3350, %v3351
    %v3353 = vsel %vm848, %v3311, 0.0
    %v3354 = vadd.f32 %v3352, %v3353
    %v3355 = vsel %vm848, %v3312, 0.0
    %v3356 = vadd.f32 %v3354, %v3355
    %v3357 = vsel %vm848, %v3313, 0.0
    %v3358 = vadd.f32 %v3356, %v3357
    %v3359 = vsel %vm848, %v3314, 0.0
    %v3360 = vadd.f32 %v3358, %v3359
    %v3361 = vsel %vm848, %v3315, 0.0
    %v3362 = vadd.f32 %v3360, %v3361
    %v3363 = vsel %vm848, %v3316, 0.0
    %v3364 = vadd.f32 %v3362, %v3363
    %v3365 = vsel %vm848, %v3317, 0.0
    %v3366 = vadd.f32 %v3364, %v3365
    %v3367 = vsel %vm848, %v3318, 0.0
    %v3368 = vadd.f32 %v3366, %v3367
    %v3369 = vsel %vm848, %v3319, 0.0
    %v3370 = vadd.f32 %v3368, %v3369
    %v3371 = vsel %vm848, %v3320, 0.0
    %v3372 = vadd.f32 %v3370, %v3371
    %v3373 = vsel %vm848, %v3321, 0.0
    %v3374 = vadd.f32 %v3372, %v3373
    %v3375 = vsel %vm848, %v3322, 0.0
    %v3376 = vadd.f32 %v3374, %v3375
    %v3377 = vsel %vm848, %v3323, 0.0
    %v3378 = vadd.f32 %v3376, %v3377
    %v3379 = vsel %vm848, %v3324, 0.0
    %v3380 = vadd.f32 %v3378, %v3379
    %v3381 = vsel %vm848, %v3325, 0.0
    %v3382 = vadd.f32 %v3380, %v3381
    %v3383 = vsel %vm848, %v3326, 0.0
    %v3384 = vadd.f32 %v3382, %v3383
    %v3385 = vsel %vm848, %v3327, 0.0
    %v3386 = vadd.f32 %v3384, %v3385
    %v3387 = vsel %vm848, %v3328, 0.0
    %v3388 = vadd.f32 %v3386, %v3387
    %v3389 = vsel %vm848, %v3329, 0.0
    %v3390 = vadd.f32 %v3388, %v3389
    %v3391 = vsel %vm848, %v3330, 0.0
    %v3392 = vadd.f32 %v3390, %v3391
    %v3393 = vsel %vm848, %v3331, 0.0
    %v3394 = vadd.f32 %v3392, %v3393
    %v3395 = vrot.slane %v3394, 4
    %v3396 = vadd.f32 %v3394, %v3395
    %v3397 = vrot.slane %v3396, 2
    %v3398 = vadd.f32 %v3396, %v3397
    %v3399 = vrot.slane %v3398, 1
    %v3400 = vadd.f32 %v3398, %v3399
    %v3401 = vsel %vm2007, %v3299, %v3400
    %v3402 = vld [vmem:[%s15] sm:$0xff]
    %v3403 = vld [vmem:[%s15 + $0x8] sm:$0xff]
    %v3404 = vld [vmem:[%s15 + $0x10] sm:$0xff]
    %v3405 = vld [vmem:[%s15 + $0x18] sm:$0xff]
    %v3406 = vld [vmem:[%s16] sm:$0x1]
    %v3407 = vld [vmem:[%s17] sm:$0xff]
    %v3408 = vld [vmem:[%s17 + $0x8] sm:$0xff]
    %v3409 = vld [vmem:[%s17 + $0x10] sm:$0xff]
    %v3410 = vld [vmem:[%s17 + $0x18] sm:$0xff]
    %v3411 = vld [vmem:[%s18] sm:$0x1]
    %v3412 = vld [vmem:[%s19] sm:$0x1]
    %v3413 = vld [vmem:[%s20] sm:$0x1]
    %v3415 = vsel %vm848, %v3167, 0
    %v3418 = vsel %vm848, %v3168, 0
    %v3421 = vsel %vm848, %v3169, 0
    %v3424 = vsel %vm848, %v3170, 0
    %v3427 = vsel %vm848, %v3171, 0
    %v3430 = vsel %vm848, %v3172, 0
    %v3433 = vsel %vm848, %v3173, 0
    %v3436 = vsel %vm848, %v3174, 0
    %v3439 = vsel %vm848, %v3175, 0
    %v3442 = vsel %vm848, %v3176, 0
    %v3445 = vsel %vm848, %v3177, 0
    %v3448 = vsel %vm848, %v3178, 0
    %v3451 = vsel %vm848, %v3179, 0
    %v3454 = vsel %vm848, %v3180, 0
    %v3457 = vsel %vm848, %v3181, 0
    %v3460 = vsel %vm848, %v3182, 0
    %v3463 = vsel %vm848, %v3183, 0
    %v3466 = vsel %vm848, %v3184, 0
    %v3469 = vsel %vm848, %v3185, 0
    %v3472 = vsel %vm848, %v3186, 0
    %v3475 = vsel %vm848, %v3187, 0
    %v3478 = vsel %vm848, %v3188, 0
    %v3481 = vsel %vm848, %v3189, 0
    %v3484 = vsel %vm848, %v3190, 0
    %v3487 = vsel %vm848, %v3191, 0
    %v3490 = vsel %vm848, %v3192, 0
    %v3493 = vsel %vm848, %v3193, 0
    %v3496 = vsel %vm848, %v3194, 0
    %v3499 = vsel %vm848, %v3195, 0
    %v3502 = vsel %vm848, %v3196, 0
    %v3505 = vsel %vm848, %v3197, 0
    %v3508 = vsel %vm848, %v3198, 0
    %3510 = vmatprep.subr.mxu0 0.0
    %3511 = vmatpush1.msra.mxu0 %v3402
    %3512 = vmatprep.subr.mxu0 0.0
    %3513 = vmatpush1.msra.mxu0 %v3403
    %3514 = vmatprep.subr.mxu0 0.0
    %3515 = vmatpush1.msra.mxu0 %v3404
    %3516 = vmatprep.subr.mxu0 0.0
    %3517 = vmatpush1.msra.mxu0 %v3405
    %3518 = vmatprep.subr.mxu0 0.0
    %3519 = vmatpush1.msra.mxu0 0.0
    %3520 = vmatprep.subr.mxu0 0.0
    %3521 = vmatpush1.msra.mxu0 0.0
    %3522 = vmatprep.subr.mxu0 0.0
    %3523 = vmatpush1.msra.mxu0 0.0
    %3524 = vmatprep.subr.mxu0 0.0
    %3525 = vmatpush1.msra.mxu0 0.0
    %3526 = vmatprep.subr.mxu0 0.0
    %3527 = vmatpush1.msra.mxu0 0.0
    %3528 = vmatprep.subr.mxu0 0.0
    %3529 = vmatpush1.msra.mxu0 0.0
    %3530 = vmatprep.subr.mxu0 0.0
    %3531 = vmatpush1.msra.mxu0 0.0
    %3532 = vmatprep.subr.mxu0 0.0
    %3533 = vmatpush1.msra.mxu0 0.0
    %3534 = vmatprep.subr.mxu0 0.0
    %3535 = vmatpush1.msra.mxu0 0.0
    %3536 = vmatprep.subr.mxu0 0.0
    %3537 = vmatpush1.msra.mxu0 0.0
    %3538 = vmatprep.subr.mxu0 0.0
    %3539 = vmatpush1.msra.mxu0 0.0
    %3540 = vmatprep.subr.mxu0 0.0
    %3541 = vmatpush1.msra.mxu0 0.0
    %3542 = vmatprep.subr.mxu0 0.0
    %3543 = vmatpush1.msra.mxu0 0.0
    %3544 = vmatprep.subr.mxu0 0.0
    %3545 = vmatpush1.msra.mxu0 0.0
    %3546 = vmatprep.subr.mxu0 0.0
    %3547 = vmatpush1.msra.mxu0 0.0
    %3548 = vmatprep.subr.mxu0 0.0
    %3549 = vmatpush1.msra.mxu0 0.0
    %3550 = vmatprep.subr.mxu0 0.0
    %3551 = vmatpush1.msra.mxu0 0.0
    %3552 = vmatprep.subr.mxu0 0.0
    %3553 = vmatpush1.msra.mxu0 0.0
    %3554 = vmatprep.subr.mxu0 0.0
    %3555 = vmatpush1.msra.mxu0 0.0
    %3556 = vmatprep.subr.mxu0 0.0
    %3557 = vmatpush1.msra.mxu0 0.0
    %3558 = vmatprep.subr.mxu0 0.0
    %3559 = vmatpush1.msra.mxu0 0.0
    %3560 = vmatprep.subr.mxu0 0.0
    %3561 = vmatpush1.msra.mxu0 0.0
    %3562 = vmatprep.subr.mxu0 0.0
    %3563 = vmatpush1.msra.mxu0 0.0
    %3564 = vmatprep.subr.mxu0 0.0
    %3565 = vmatpush1.msra.mxu0 0.0
    %3566 = vmatprep.subr.mxu0 0.0
    %3567 = vmatpush1.msra.mxu0 0.0
    %3568 = vmatprep.subr.mxu0 0.0
    %3569 = vmatpush1.msra.mxu0 0.0
    %3570 = vmatprep.subr.mxu0 0.0
    %3571 = vmatpush1.msra.mxu0 0.0
    %3572 = vmatprep.subr.mxu0 0.0
    %3573 = vmatpush1.msra.mxu0 0.0
    %3574 = vmatprep.mubr.f32.mxu0 0.0
    %3575 = vmatmul.mubr.f32.gmra.mrb[0].mxu0 %v3415
    %v3576 = vpop.f32.mrb[0].mxu0
    %v3577 = vadd.f32 0.0, %v3576
    %v3578 = vpop.f32.mrb[0].mxu0
    %3579 = vmatprep.mubr.f32.mxu0 0.0
    %3580 = vmatmul.mubr.f32.gmra.mrb[0].mxu0 %v3418
    %v3581 = vpop.f32.mrb[0].mxu0
    %v3582 = vadd.f32 0.0, %v3581
    %v3583 = vpop.f32.mrb[0].mxu0
    %3584 = vmatprep.mubr.f32.mxu0 0.0
    %3585 = vmatmul.mubr.f32.gmra.mrb[0].mxu0 %v3421
    %v3586 = vpop.f32.mrb[0].mxu0
    %v3587 = vadd.f32 0.0, %v3586
    %v3588 = vpop.f32.mrb[0].mxu0
    %3589 = vmatprep.mubr.f32.mxu0 0.0
    %3590 = vmatmul.mubr.f32.gmra.mrb[0].mxu0 %v3424
    %v3591 = vpop.f32.mrb[0].mxu0
    %v3592 = vadd.f32 0.0, %v3591
    %v3593 = vpop.f32.mrb[0].mxu0
    %3594 = vmatprep.mubr.f32.mxu0 0.0
    %3595 = vmatmul.mubr.f32.gmra.mrb[0].mxu0 %v3427
    %v3596 = vpop.f32.mrb[0].mxu0
    %v3597 = vadd.f32 0.0, %v3596
    %v3598 = vpop.f32.mrb[0].mxu0
    %3599 = vmatprep.mubr.f32.mxu0 0.0
    %3600 = vmatmul.mubr.f32.gmra.mrb[0].mxu0 %v3430
    %v3601 = vpop.f32.mrb[0].mxu0
    %v3602 = vadd.f32 0.0, %v3601
    %v3603 = vpop.f32.mrb[0].mxu0
    %3604 = vmatprep.mubr.f32.mxu0 0.0
    %3605 = vmatmul.mubr.f32.gmra.mrb[0].mxu0 %v3433
    %v3606 = vpop.f32.mrb[0].mxu0
    %v3607 = vadd.f32 0.0, %v3606
    %v3608 = vpop.f32.mrb[0].mxu0
    %3609 = vmatprep.mubr.f32.mxu0 0.0
    %3610 = vmatmul.mubr.f32.gmra.mrb[0].mxu0 %v3436
    %v3611 = vpop.f32.mrb[0].mxu0
    %v3612 = vadd.f32 0.0, %v3611
    %v3613 = vpop.f32.mrb[0].mxu0
    %3614 = vmatprep.mubr.f32.mxu0 0.0
    %3615 = vmatmul.mubr.f32.gmra.mrb[0].mxu0 %v3439
    %v3616 = vpop.f32.mrb[0].mxu0
    %v3617 = vadd.f32 0.0, %v3616
    %v3618 = vpop.f32.mrb[0].mxu0
    %3619 = vmatprep.mubr.f32.mxu0 0.0
    %3620 = vmatmul.mubr.f32.gmra.mrb[0].mxu0 %v3442
    %v3621 = vpop.f32.mrb[0].mxu0
    %v3622 = vadd.f32 0.0, %v3621
    %v3623 = vpop.f32.mrb[0].mxu0
    %3624 = vmatprep.mubr.f32.mxu0 0.0
    %3625 = vmatmul.mubr.f32.gmra.mrb[0].mxu0 %v3445
    %v3626 = vpop.f32.mrb[0].mxu0
    %v3627 = vadd.f32 0.0, %v3626
    %v3628 = vpop.f32.mrb[0].mxu0
    %3629 = vmatprep.mubr.f32.mxu0 0.0
    %3630 = vmatmul.mubr.f32.gmra.mrb[0].mxu0 %v3448
    %v3631 = vpop.f32.mrb[0].mxu0
    %v3632 = vadd.f32 0.0, %v3631
    %v3633 = vpop.f32.mrb[0].mxu0
    %3634 = vmatprep.mubr.f32.mxu0 0.0
    %3635 = vmatmul.mubr.f32.gmra.mrb[0].mxu0 %v3451
    %v3636 = vpop.f32.mrb[0].mxu0
    %v3637 = vadd.f32 0.0, %v3636
    %v3638 = vpop.f32.mrb[0].mxu0
    %3639 = vmatprep.mubr.f32.mxu0 0.0
    %3640 = vmatmul.mubr.f32.gmra.mrb[0].mxu0 %v3454
    %v3641 = vpop.f32.mrb[0].mxu0
    %v3642 = vadd.f32 0.0, %v3641
    %v3643 = vpop.f32.mrb[0].mxu0
    %3644 = vmatprep.mubr.f32.mxu0 0.0
    %3645 = vmatmul.mubr.f32.gmra.mrb[0].mxu0 %v3457
    %v3646 = vpop.f32.mrb[0].mxu0
    %v3647 = vadd.f32 0.0, %v3646
    %v3648 = vpop.f32.mrb[0].mxu0
    %3649 = vmatprep.mubr.f32.mxu0 0.0
    %3650 = vmatmul.mubr.f32.gmra.mrb[0].mxu0 %v3460
    %v3651 = vpop.f32.mrb[0].mxu0
    %v3652 = vadd.f32 0.0, %v3651
    %v3653 = vpop.f32.mrb[0].mxu0
    %3654 = vmatprep.mubr.f32.mxu0 0.0
    %3655 = vmatmul.mubr.f32.gmra.mrb[0].mxu0 %v3463
    %v3656 = vpop.f32.mrb[0].mxu0
    %v3657 = vadd.f32 0.0, %v3656
    %v3658 = vpop.f32.mrb[0].mxu0
    %3659 = vmatprep.mubr.f32.mxu0 0.0
    %3660 = vmatmul.mubr.f32.gmra.mrb[0].mxu0 %v3466
    %v3661 = vpop.f32.mrb[0].mxu0
    %v3662 = vadd.f32 0.0, %v3661
    %v3663 = vpop.f32.mrb[0].mxu0
    %3664 = vmatprep.mubr.f32.mxu0 0.0
    %3665 = vmatmul.mubr.f32.gmra.mrb[0].mxu0 %v3469
    %v3666 = vpop.f32.mrb[0].mxu0
    %v3667 = vadd.f32 0.0, %v3666
    %v3668 = vpop.f32.mrb[0].mxu0
    %3669 = vmatprep.mubr.f32.mxu0 0.0
    %3670 = vmatmul.mubr.f32.gmra.mrb[0].mxu0 %v3472
    %v3671 = vpop.f32.mrb[0].mxu0
    %v3672 = vadd.f32 0.0, %v3671
    %v3673 = vpop.f32.mrb[0].mxu0
    %3674 = vmatprep.mubr.f32.mxu0 0.0
    %3675 = vmatmul.mubr.f32.gmra.mrb[0].mxu0 %v3475
    %v3676 = vpop.f32.mrb[0].mxu0
    %v3677 = vadd.f32 0.0, %v3676
    %v3678 = vpop.f32.mrb[0].mxu0
    %3679 = vmatprep.mubr.f32.mxu0 0.0
    %3680 = vmatmul.mubr.f32.gmra.mrb[0].mxu0 %v3478
    %v3681 = vpop.f32.mrb[0].mxu0
    %v3682 = vadd.f32 0.0, %v3681
    %v3683 = vpop.f32.mrb[0].mxu0
    %3684 = vmatprep.mubr.f32.mxu0 0.0
    %3685 = vmatmul.mubr.f32.gmra.mrb[0].mxu0 %v3481
    %v3686 = vpop.f32.mrb[0].mxu0
    %v3687 = vadd.f32 0.0, %v3686
    %v3688 = vpop.f32.mrb[0].mxu0
    %3689 = vmatprep.mubr.f32.mxu0 0.0
    %3690 = vmatmul.mubr.f32.gmra.mrb[0].mxu0 %v3484
    %v3691 = vpop.f32.mrb[0].mxu0
    %v3692 = vadd.f32 0.0, %v3691
    %v3693 = vpop.f32.mrb[0].mxu0
    %3694 = vmatprep.mubr.f32.mxu0 0.0
    %3695 = vmatmul.mubr.f32.gmra.mrb[0].mxu0 %v3487
    %v3696 = vpop.f32.mrb[0].mxu0
    %v3697 = vadd.f32 0.0, %v3696
    %v3698 = vpop.f32.mrb[0].mxu0
    %3699 = vmatprep.mubr.f32.mxu0 0.0
    %3700 = vmatmul.mubr.f32.gmra.mrb[0].mxu0 %v3490
    %v3701 = vpop.f32.mrb[0].mxu0
    %v3702 = vadd.f32 0.0, %v3701
    %v3703 = vpop.f32.mrb[0].mxu0
    %3704 = vmatprep.mubr.f32.mxu0 0.0
    %3705 = vmatmul.mubr.f32.gmra.mrb[0].mxu0 %v3493
    %v3706 = vpop.f32.mrb[0].mxu0
    %v3707 = vadd.f32 0.0, %v3706
    %v3708 = vpop.f32.mrb[0].mxu0
    %3709 = vmatprep.mubr.f32.mxu0 0.0
    %3710 = vmatmul.mubr.f32.gmra.mrb[0].mxu0 %v3496
    %v3711 = vpop.f32.mrb[0].mxu0
    %v3712 = vadd.f32 0.0, %v3711
    %v3713 = vpop.f32.mrb[0].mxu0
    %3714 = vmatprep.mubr.f32.mxu0 0.0
    %3715 = vmatmul.mubr.f32.gmra.mrb[0].mxu0 %v3499
    %v3716 = vpop.f32.mrb[0].mxu0
    %v3717 = vadd.f32 0.0, %v3716
    %v3718 = vpop.f32.mrb[0].mxu0
    %3719 = vmatprep.mubr.f32.mxu0 0.0
    %3720 = vmatmul.mubr.f32.gmra.mrb[0].mxu0 %v3502
    %v3721 = vpop.f32.mrb[0].mxu0
    %v3722 = vadd.f32 0.0, %v3721
    %v3723 = vpop.f32.mrb[0].mxu0
    %3724 = vmatprep.mubr.f32.mxu0 0.0
    %3725 = vmatmul.mubr.f32.gmra.mrb[0].mxu0 %v3505
    %v3726 = vpop.f32.mrb[0].mxu0
    %v3727 = vadd.f32 0.0, %v3726
    %v3728 = vpop.f32.mrb[0].mxu0
    %3729 = vmatprep.mubr.f32.mxu0 0.0
    %3730 = vmatmul.mubr.f32.gmra.mrb[0].mxu0 %v3508
    %v3731 = vpop.f32.mrb[0].mxu0
    %v3732 = vadd.f32 0.0, %v3731
    %v3733 = vpop.f32.mrb[0].mxu0
    %3734 = vdwg.mxu0
    %v3735 = vpack.c.bf16 %v3582, %v3577
    %v3736 = vpack.c.bf16 %v3592, %v3587
    %v3737 = vpack.c.bf16 %v3602, %v3597
    %v3738 = vpack.c.bf16 %v3612, %v3607
    %v3739 = vpack.c.bf16 %v3622, %v3617
    %v3740 = vpack.c.bf16 %v3632, %v3627
    %v3741 = vpack.c.bf16 %v3642, %v3637
    %v3742 = vpack.c.bf16 %v3652, %v3647
    %v3743 = vpack.c.bf16 %v3662, %v3657
    %v3744 = vpack.c.bf16 %v3672, %v3667
    %v3745 = vpack.c.bf16 %v3682, %v3677
    %v3746 = vpack.c.bf16 %v3692, %v3687
    %v3747 = vpack.c.bf16 %v3702, %v3697
    %v3748 = vpack.c.bf16 %v3712, %v3707
    %v3749 = vpack.c.bf16 %v3722, %v3717
    %v3750 = vpack.c.bf16 %v3732, %v3727
    %v3752 = vlaneseq
    %v3753 = vshrl.u32 %v3752, 7
    %v3754 = vsub.s32 0, %v3753
    %v3755 = vrot.slane %v3406, %v3754
    %3757 = vmatprep.subr.bf16.mxu0 0
    %3758 = vmatpush1.bf16.msra.mxu0 %v3735
    %3759 = vmatprep.subr.bf16.mxu0 0
    %3760 = vmatpush1.bf16.msra.mxu0 %v3736
    %3761 = vmatprep.subr.bf16.mxu0 0
    %3762 = vmatpush1.bf16.msra.mxu0 %v3737
    %3763 = vmatprep.subr.bf16.mxu0 0
    %3764 = vmatpush1.bf16.msra.mxu0 %v3738
    %3765 = vmatprep.subr.bf16.mxu0 0
    %3766 = vmatpush1.bf16.msra.mxu0 %v3739
    %3767 = vmatprep.subr.bf16.mxu0 0
    %3768 = vmatpush1.bf16.msra.mxu0 %v3740
    %3769 = vmatprep.subr.bf16.mxu0 0
    %3770 = vmatpush1.bf16.msra.mxu0 %v3741
    %3771 = vmatprep.subr.bf16.mxu0 0
    %3772 = vmatpush1.bf16.msra.mxu0 %v3742
    %3773 = vmatprep.subr.bf16.mxu0 0
    %3774 = vmatpush1.bf16.msra.mxu0 %v3743
    %3775 = vmatprep.subr.bf16.mxu0 0
    %3776 = vmatpush1.bf16.msra.mxu0 %v3744
    %3777 = vmatprep.subr.bf16.mxu0 0
    %3778 = vmatpush1.bf16.msra.mxu0 %v3745
    %3779 = vmatprep.subr.bf16.mxu0 0
    %3780 = vmatpush1.bf16.msra.mxu0 %v3746
    %3781 = vmatprep.subr.bf16.mxu0 0
    %3782 = vmatpush1.bf16.msra.mxu0 %v3747
    %3783 = vmatprep.subr.bf16.mxu0 0
    %3784 = vmatpush1.bf16.msra.mxu0 %v3748
    %3785 = vmatprep.subr.bf16.mxu0 0
    %3786 = vmatpush1.bf16.msra.mxu0 %v3749
    %3787 = vmatprep.subr.bf16.mxu0 0
    %3788 = vmatpush1.bf16.msra.mxu0 %v3750
    %3789 = vmatprep.mubr.bf16.mxu0 %v586
    %3790 = vmatmul.mubr.bf16.gmra.mrb[0].mxu0 %v585
    %v3791 = vpop.f32.mrb[0].mxu0
    %v3792 = vadd.f32 %v3755, %v3791
    %v3793 = vpop.f32.mrb[0].mxu0
    %v3794 = vpop.f32.mrb[0].mxu0
    %v3795 = vadd.f32 %v3755, %v3794
    %v3796 = vpop.f32.mrb[0].mxu0
    %3797 = vmatprep.mubr.bf16.mxu0 %v588
    %3798 = vmatmul.mubr.bf16.gmra.mrb[0].mxu0 %v587
    %v3799 = vpop.f32.mrb[0].mxu0
    %v3800 = vadd.f32 %v3755, %v3799
    %v3801 = vpop.f32.mrb[0].mxu0
    %v3802 = vpop.f32.mrb[0].mxu0
    %v3803 = vadd.f32 %v3755, %v3802
    %v3804 = vpop.f32.mrb[0].mxu0
    %3805 = vmatprep.mubr.bf16.mxu0 %v590
    %3806 = vmatmul.mubr.bf16.gmra.mrb[0].mxu0 %v589
    %v3807 = vpop.f32.mrb[0].mxu0
    %v3808 = vadd.f32 %v3755, %v3807
    %v3809 = vpop.f32.mrb[0].mxu0
    %v3810 = vpop.f32.mrb[0].mxu0
    %v3811 = vadd.f32 %v3755, %v3810
    %v3812 = vpop.f32.mrb[0].mxu0
    %3813 = vmatprep.mubr.bf16.mxu0 %v592
    %3814 = vmatmul.mubr.bf16.gmra.mrb[0].mxu0 %v591
    %v3815 = vpop.f32.mrb[0].mxu0
    %v3816 = vadd.f32 %v3755, %v3815
    %v3817 = vpop.f32.mrb[0].mxu0
    %v3818 = vpop.f32.mrb[0].mxu0
    %v3819 = vadd.f32 %v3755, %v3818
    %v3820 = vpop.f32.mrb[0].mxu0
    %3821 = vmatprep.mubr.bf16.mxu0 %v594
    %3822 = vmatmul.mubr.bf16.gmra.mrb[0].mxu0 %v593
    %v3823 = vpop.f32.mrb[0].mxu0
    %v3824 = vadd.f32 %v3755, %v3823
    %v3825 = vpop.f32.mrb[0].mxu0
    %v3826 = vpop.f32.mrb[0].mxu0
    %v3827 = vadd.f32 %v3755, %v3826
    %v3828 = vpop.f32.mrb[0].mxu0
    %3829 = vmatprep.mubr.bf16.mxu0 %v596
    %3830 = vmatmul.mubr.bf16.gmra.mrb[0].mxu0 %v595
    %v3831 = vpop.f32.mrb[0].mxu0
    %v3832 = vadd.f32 %v3755, %v3831
    %v3833 = vpop.f32.mrb[0].mxu0
    %v3834 = vpop.f32.mrb[0].mxu0
    %v3835 = vadd.f32 %v3755, %v3834
    %v3836 = vpop.f32.mrb[0].mxu0
    %3837 = vmatprep.mubr.bf16.mxu0 %v598
    %3838 = vmatmul.mubr.bf16.gmra.mrb[0].mxu0 %v597
    %v3839 = vpop.f32.mrb[0].mxu0
    %v3840 = vadd.f32 %v3755, %v3839
    %v3841 = vpop.f32.mrb[0].mxu0
    %v3842 = vpop.f32.mrb[0].mxu0
    %v3843 = vadd.f32 %v3755, %v3842
    %v3844 = vpop.f32.mrb[0].mxu0
    %3845 = vmatprep.mubr.bf16.mxu0 %v600
    %3846 = vmatmul.mubr.bf16.gmra.mrb[0].mxu0 %v599
    %v3847 = vpop.f32.mrb[0].mxu0
    %v3848 = vadd.f32 %v3755, %v3847
    %v3849 = vpop.f32.mrb[0].mxu0
    %v3850 = vpop.f32.mrb[0].mxu0
    %v3851 = vadd.f32 %v3755, %v3850
    %v3852 = vpop.f32.mrb[0].mxu0
    %3853 = vmatprep.mubr.bf16.mxu0 %v602
    %3854 = vmatmul.mubr.bf16.gmra.mrb[0].mxu0 %v601
    %v3855 = vpop.f32.mrb[0].mxu0
    %v3856 = vadd.f32 %v3755, %v3855
    %v3857 = vpop.f32.mrb[0].mxu0
    %v3858 = vpop.f32.mrb[0].mxu0
    %v3859 = vadd.f32 %v3755, %v3858
    %v3860 = vpop.f32.mrb[0].mxu0
    %3861 = vmatprep.mubr.bf16.mxu0 %v604
    %3862 = vmatmul.mubr.bf16.gmra.mrb[0].mxu0 %v603
    %v3863 = vpop.f32.mrb[0].mxu0
    %v3864 = vadd.f32 %v3755, %v3863
    %v3865 = vpop.f32.mrb[0].mxu0
    %v3866 = vpop.f32.mrb[0].mxu0
    %v3867 = vadd.f32 %v3755, %v3866
    %v3868 = vpop.f32.mrb[0].mxu0
    %3869 = vmatprep.mubr.bf16.mxu0 %v606
    %3870 = vmatmul.mubr.bf16.gmra.mrb[0].mxu0 %v605
    %v3871 = vpop.f32.mrb[0].mxu0
    %v3872 = vadd.f32 %v3755, %v3871
    %v3873 = vpop.f32.mrb[0].mxu0
    %v3874 = vpop.f32.mrb[0].mxu0
    %v3875 = vadd.f32 %v3755, %v3874
    %v3876 = vpop.f32.mrb[0].mxu0
    %3877 = vmatprep.mubr.bf16.mxu0 %v608
    %3878 = vmatmul.mubr.bf16.gmra.mrb[0].mxu0 %v607
    %v3879 = vpop.f32.mrb[0].mxu0
    %v3880 = vadd.f32 %v3755, %v3879
    %v3881 = vpop.f32.mrb[0].mxu0
    %v3882 = vpop.f32.mrb[0].mxu0
    %v3883 = vadd.f32 %v3755, %v3882
    %v3884 = vpop.f32.mrb[0].mxu0
    %3885 = vmatprep.mubr.bf16.mxu0 %v610
    %3886 = vmatmul.mubr.bf16.gmra.mrb[0].mxu0 %v609
    %v3887 = vpop.f32.mrb[0].mxu0
    %v3888 = vadd.f32 %v3755, %v3887
    %v3889 = vpop.f32.mrb[0].mxu0
    %v3890 = vpop.f32.mrb[0].mxu0
    %v3891 = vadd.f32 %v3755, %v3890
    %v3892 = vpop.f32.mrb[0].mxu0
    %3893 = vmatprep.mubr.bf16.mxu0 %v612
    %3894 = vmatmul.mubr.bf16.gmra.mrb[0].mxu0 %v611
    %v3895 = vpop.f32.mrb[0].mxu0
    %v3896 = vadd.f32 %v3755, %v3895
    %v3897 = vpop.f32.mrb[0].mxu0
    %v3898 = vpop.f32.mrb[0].mxu0
    %v3899 = vadd.f32 %v3755, %v3898
    %v3900 = vpop.f32.mrb[0].mxu0
    %3901 = vmatprep.mubr.bf16.mxu0 %v614
    %3902 = vmatmul.mubr.bf16.gmra.mrb[0].mxu0 %v613
    %v3903 = vpop.f32.mrb[0].mxu0
    %v3904 = vadd.f32 %v3755, %v3903
    %v3905 = vpop.f32.mrb[0].mxu0
    %v3906 = vpop.f32.mrb[0].mxu0
    %v3907 = vadd.f32 %v3755, %v3906
    %v3908 = vpop.f32.mrb[0].mxu0
    %3909 = vmatprep.mubr.bf16.mxu0 %v616
    %3910 = vmatmul.mubr.bf16.gmra.mrb[0].mxu0 %v615
    %v3911 = vpop.f32.mrb[0].mxu0
    %v3912 = vadd.f32 %v3755, %v3911
    %v3913 = vpop.f32.mrb[0].mxu0
    %v3914 = vpop.f32.mrb[0].mxu0
    %v3915 = vadd.f32 %v3755, %v3914
    %v3916 = vpop.f32.mrb[0].mxu0
    %3917 = vdwg.mxu0
    %v3918 = vmax.f32 %v3792, 0.0
    %v3919 = vmax.f32 %v3795, 0.0
    %v3920 = vmax.f32 %v3800, 0.0
    %v3921 = vmax.f32 %v3803, 0.0
    %v3922 = vmax.f32 %v3808, 0.0
    %v3923 = vmax.f32 %v3811, 0.0
    %v3924 = vmax.f32 %v3816, 0.0
    %v3925 = vmax.f32 %v3819, 0.0
    %v3926 = vmax.f32 %v3824, 0.0
    %v3927 = vmax.f32 %v3827, 0.0
    %v3928 = vmax.f32 %v3832, 0.0
    %v3929 = vmax.f32 %v3835, 0.0
    %v3930 = vmax.f32 %v3840, 0.0
    %v3931 = vmax.f32 %v3843, 0.0
    %v3932 = vmax.f32 %v3848, 0.0
    %v3933 = vmax.f32 %v3851, 0.0
    %v3934 = vmax.f32 %v3856, 0.0
    %v3935 = vmax.f32 %v3859, 0.0
    %v3936 = vmax.f32 %v3864, 0.0
    %v3937 = vmax.f32 %v3867, 0.0
    %v3938 = vmax.f32 %v3872, 0.0
    %v3939 = vmax.f32 %v3875, 0.0
    %v3940 = vmax.f32 %v3880, 0.0
    %v3941 = vmax.f32 %v3883, 0.0
    %v3942 = vmax.f32 %v3888, 0.0
    %v3943 = vmax.f32 %v3891, 0.0
    %v3944 = vmax.f32 %v3896, 0.0
    %v3945 = vmax.f32 %v3899, 0.0
    %v3946 = vmax.f32 %v3904, 0.0
    %v3947 = vmax.f32 %v3907, 0.0
    %v3948 = vmax.f32 %v3912, 0.0
    %v3949 = vmax.f32 %v3915, 0.0
    %v3951 = vlaneseq
    %v3952 = vshrl.u32 %v3951, 7
    %v3953 = vsub.s32 0, %v3952
    %v3954 = vrot.slane %v3411, %v3953
    %v3957 = vsel %vm848, %v3918, 0
    %v3960 = vsel %vm848, %v3919, 0
    %v3963 = vsel %vm848, %v3920, 0
    %v3966 = vsel %vm848, %v3921, 0
    %v3969 = vsel %vm848, %v3922, 0
    %v3972 = vsel %vm848, %v3923, 0
    %v3975 = vsel %vm848, %v3924, 0
    %v3978 = vsel %vm848, %v3925, 0
    %v3981 = vsel %vm848, %v3926, 0
    %v3984 = vsel %vm848, %v3927, 0
    %v3987 = vsel %vm848, %v3928, 0
    %v3990 = vsel %vm848, %v3929, 0
    %v3993 = vsel %vm848, %v3930, 0
    %v3996 = vsel %vm848, %v3931, 0
    %v3999 = vsel %vm848, %v3932, 0
    %v4002 = vsel %vm848, %v3933, 0
    %v4005 = vsel %vm848, %v3934, 0
    %v4008 = vsel %vm848, %v3935, 0
    %v4011 = vsel %vm848, %v3936, 0
    %v4014 = vsel %vm848, %v3937, 0
    %v4017 = vsel %vm848, %v3938, 0
    %v4020 = vsel %vm848, %v3939, 0
    %v4023 = vsel %vm848, %v3940, 0
    %v4026 = vsel %vm848, %v3941, 0
    %v4029 = vsel %vm848, %v3942, 0
    %v4032 = vsel %vm848, %v3943, 0
    %v4035 = vsel %vm848, %v3944, 0
    %v4038 = vsel %vm848, %v3945, 0
    %v4041 = vsel %vm848, %v3946, 0
    %v4044 = vsel %vm848, %v3947, 0
    %v4047 = vsel %vm848, %v3948, 0
    %v4050 = vsel %vm848, %v3949, 0
    %4052 = vmatprep.subr.mxu0 0.0
    %4053 = vmatpush1.msra.mxu0 %v3407
    %4054 = vmatprep.subr.mxu0 0.0
    %4055 = vmatpush1.msra.mxu0 %v3408
    %4056 = vmatprep.subr.mxu0 0.0
    %4057 = vmatpush1.msra.mxu0 %v3409
    %4058 = vmatprep.subr.mxu0 0.0
    %4059 = vmatpush1.msra.mxu0 %v3410
    %4060 = vmatprep.subr.mxu0 0.0
    %4061 = vmatpush1.msra.mxu0 0.0
    %4062 = vmatprep.subr.mxu0 0.0
    %4063 = vmatpush1.msra.mxu0 0.0
    %4064 = vmatprep.subr.mxu0 0.0
    %4065 = vmatpush1.msra.mxu0 0.0
    %4066 = vmatprep.subr.mxu0 0.0
    %4067 = vmatpush1.msra.mxu0 0.0
    %4068 = vmatprep.subr.mxu0 0.0
    %4069 = vmatpush1.msra.mxu0 0.0
    %4070 = vmatprep.subr.mxu0 0.0
    %4071 = vmatpush1.msra.mxu0 0.0
    %4072 = vmatprep.subr.mxu0 0.0
    %4073 = vmatpush1.msra.mxu0 0.0
    %4074 = vmatprep.subr.mxu0 0.0
    %4075 = vmatpush1.msra.mxu0 0.0
    %4076 = vmatprep.subr.mxu0 0.0
    %4077 = vmatpush1.msra.mxu0 0.0
    %4078 = vmatprep.subr.mxu0 0.0
    %4079 = vmatpush1.msra.mxu0 0.0
    %4080 = vmatprep.subr.mxu0 0.0
    %4081 = vmatpush1.msra.mxu0 0.0
    %4082 = vmatprep.subr.mxu0 0.0
    %4083 = vmatpush1.msra.mxu0 0.0
    %4084 = vmatprep.subr.mxu0 0.0
    %4085 = vmatpush1.msra.mxu0 0.0
    %4086 = vmatprep.subr.mxu0 0.0
    %4087 = vmatpush1.msra.mxu0 0.0
    %4088 = vmatprep.subr.mxu0 0.0
    %4089 = vmatpush1.msra.mxu0 0.0
    %4090 = vmatprep.subr.mxu0 0.0
    %4091 = vmatpush1.msra.mxu0 0.0
    %4092 = vmatprep.subr.mxu0 0.0
    %4093 = vmatpush1.msra.mxu0 0.0
    %4094 = vmatprep.subr.mxu0 0.0
    %4095 = vmatpush1.msra.mxu0 0.0
    %4096 = vmatprep.subr.mxu0 0.0
    %4097 = vmatpush1.msra.mxu0 0.0
    %4098 = vmatprep.subr.mxu0 0.0
    %4099 = vmatpush1.msra.mxu0 0.0
    %4100 = vmatprep.subr.mxu0 0.0
    %4101 = vmatpush1.msra.mxu0 0.0
    %4102 = vmatprep.subr.mxu0 0.0
    %4103 = vmatpush1.msra.mxu0 0.0
    %4104 = vmatprep.subr.mxu0 0.0
    %4105 = vmatpush1.msra.mxu0 0.0
    %4106 = vmatprep.subr.mxu0 0.0
    %4107 = vmatpush1.msra.mxu0 0.0
    %4108 = vmatprep.subr.mxu0 0.0
    %4109 = vmatpush1.msra.mxu0 0.0
    %4110 = vmatprep.subr.mxu0 0.0
    %4111 = vmatpush1.msra.mxu0 0.0
    %4112 = vmatprep.subr.mxu0 0.0
    %4113 = vmatpush1.msra.mxu0 0.0
    %4114 = vmatprep.subr.mxu0 0.0
    %4115 = vmatpush1.msra.mxu0 0.0
    %4116 = vmatprep.mubr.f32.mxu0 0.0
    %4117 = vmatmul.mubr.f32.gmra.mrb[0].mxu0 %v3957
    %v4118 = vpop.f32.mrb[0].mxu0
    %v4119 = vadd.f32 %v3954, %v4118
    %v4120 = vpop.f32.mrb[0].mxu0
    %4121 = vmatprep.mubr.f32.mxu0 0.0
    %4122 = vmatmul.mubr.f32.gmra.mrb[0].mxu0 %v3960
    %v4123 = vpop.f32.mrb[0].mxu0
    %v4124 = vadd.f32 %v3954, %v4123
    %v4125 = vpop.f32.mrb[0].mxu0
    %4126 = vmatprep.mubr.f32.mxu0 0.0
    %4127 = vmatmul.mubr.f32.gmra.mrb[0].mxu0 %v3963
    %v4128 = vpop.f32.mrb[0].mxu0
    %v4129 = vadd.f32 %v3954, %v4128
    %v4130 = vpop.f32.mrb[0].mxu0
    %4131 = vmatprep.mubr.f32.mxu0 0.0
    %4132 = vmatmul.mubr.f32.gmra.mrb[0].mxu0 %v3966
    %v4133 = vpop.f32.mrb[0].mxu0
    %v4134 = vadd.f32 %v3954, %v4133
    %v4135 = vpop.f32.mrb[0].mxu0
    %4136 = vmatprep.mubr.f32.mxu0 0.0
    %4137 = vmatmul.mubr.f32.gmra.mrb[0].mxu0 %v3969
    %v4138 = vpop.f32.mrb[0].mxu0
    %v4139 = vadd.f32 %v3954, %v4138
    %v4140 = vpop.f32.mrb[0].mxu0
    %4141 = vmatprep.mubr.f32.mxu0 0.0
    %4142 = vmatmul.mubr.f32.gmra.mrb[0].mxu0 %v3972
    %v4143 = vpop.f32.mrb[0].mxu0
    %v4144 = vadd.f32 %v3954, %v4143
    %v4145 = vpop.f32.mrb[0].mxu0
    %4146 = vmatprep.mubr.f32.mxu0 0.0
    %4147 = vmatmul.mubr.f32.gmra.mrb[0].mxu0 %v3975
    %v4148 = vpop.f32.mrb[0].mxu0
    %v4149 = vadd.f32 %v3954, %v4148
    %v4150 = vpop.f32.mrb[0].mxu0
    %4151 = vmatprep.mubr.f32.mxu0 0.0
    %4152 = vmatmul.mubr.f32.gmra.mrb[0].mxu0 %v3978
    %v4153 = vpop.f32.mrb[0].mxu0
    %v4154 = vadd.f32 %v3954, %v4153
    %v4155 = vpop.f32.mrb[0].mxu0
    %4156 = vmatprep.mubr.f32.mxu0 0.0
    %4157 = vmatmul.mubr.f32.gmra.mrb[0].mxu0 %v3981
    %v4158 = vpop.f32.mrb[0].mxu0
    %v4159 = vadd.f32 %v3954, %v4158
    %v4160 = vpop.f32.mrb[0].mxu0
    %4161 = vmatprep.mubr.f32.mxu0 0.0
    %4162 = vmatmul.mubr.f32.gmra.mrb[0].mxu0 %v3984
    %v4163 = vpop.f32.mrb[0].mxu0
    %v4164 = vadd.f32 %v3954, %v4163
    %v4165 = vpop.f32.mrb[0].mxu0
    %4166 = vmatprep.mubr.f32.mxu0 0.0
    %4167 = vmatmul.mubr.f32.gmra.mrb[0].mxu0 %v3987
    %v4168 = vpop.f32.mrb[0].mxu0
    %v4169 = vadd.f32 %v3954, %v4168
    %v4170 = vpop.f32.mrb[0].mxu0
    %4171 = vmatprep.mubr.f32.mxu0 0.0
    %4172 = vmatmul.mubr.f32.gmra.mrb[0].mxu0 %v3990
    %v4173 = vpop.f32.mrb[0].mxu0
    %v4174 = vadd.f32 %v3954, %v4173
    %v4175 = vpop.f32.mrb[0].mxu0
    %4176 = vmatprep.mubr.f32.mxu0 0.0
    %4177 = vmatmul.mubr.f32.gmra.mrb[0].mxu0 %v3993
    %v4178 = vpop.f32.mrb[0].mxu0
    %v4179 = vadd.f32 %v3954, %v4178
    %v4180 = vpop.f32.mrb[0].mxu0
    %4181 = vmatprep.mubr.f32.mxu0 0.0
    %4182 = vmatmul.mubr.f32.gmra.mrb[0].mxu0 %v3996
    %v4183 = vpop.f32.mrb[0].mxu0
    %v4184 = vadd.f32 %v3954, %v4183
    %v4185 = vpop.f32.mrb[0].mxu0
    %4186 = vmatprep.mubr.f32.mxu0 0.0
    %4187 = vmatmul.mubr.f32.gmra.mrb[0].mxu0 %v3999
    %v4188 = vpop.f32.mrb[0].mxu0
    %v4189 = vadd.f32 %v3954, %v4188
    %v4190 = vpop.f32.mrb[0].mxu0
    %4191 = vmatprep.mubr.f32.mxu0 0.0
    %4192 = vmatmul.mubr.f32.gmra.mrb[0].mxu0 %v4002
    %v4193 = vpop.f32.mrb[0].mxu0
    %v4194 = vadd.f32 %v3954, %v4193
    %v4195 = vpop.f32.mrb[0].mxu0
    %4196 = vmatprep.mubr.f32.mxu0 0.0
    %4197 = vmatmul.mubr.f32.gmra.mrb[0].mxu0 %v4005
    %v4198 = vpop.f32.mrb[0].mxu0
    %v4199 = vadd.f32 %v3954, %v4198
    %v4200 = vpop.f32.mrb[0].mxu0
    %4201 = vmatprep.mubr.f32.mxu0 0.0
    %4202 = vmatmul.mubr.f32.gmra.mrb[0].mxu0 %v4008
    %v4203 = vpop.f32.mrb[0].mxu0
    %v4204 = vadd.f32 %v3954, %v4203
    %v4205 = vpop.f32.mrb[0].mxu0
    %4206 = vmatprep.mubr.f32.mxu0 0.0
    %4207 = vmatmul.mubr.f32.gmra.mrb[0].mxu0 %v4011
    %v4208 = vpop.f32.mrb[0].mxu0
    %v4209 = vadd.f32 %v3954, %v4208
    %v4210 = vpop.f32.mrb[0].mxu0
    %4211 = vmatprep.mubr.f32.mxu0 0.0
    %4212 = vmatmul.mubr.f32.gmra.mrb[0].mxu0 %v4014
    %v4213 = vpop.f32.mrb[0].mxu0
    %v4214 = vadd.f32 %v3954, %v4213
    %v4215 = vpop.f32.mrb[0].mxu0
    %4216 = vmatprep.mubr.f32.mxu0 0.0
    %4217 = vmatmul.mubr.f32.gmra.mrb[0].mxu0 %v4017
    %v4218 = vpop.f32.mrb[0].mxu0
    %v4219 = vadd.f32 %v3954, %v4218
    %v4220 = vpop.f32.mrb[0].mxu0
    %4221 = vmatprep.mubr.f32.mxu0 0.0
    %4222 = vmatmul.mubr.f32.gmra.mrb[0].mxu0 %v4020
    %v4223 = vpop.f32.mrb[0].mxu0
    %v4224 = vadd.f32 %v3954, %v4223
    %v4225 = vpop.f32.mrb[0].mxu0
    %4226 = vmatprep.mubr.f32.mxu0 0.0
    %4227 = vmatmul.mubr.f32.gmra.mrb[0].mxu0 %v4023
    %v4228 = vpop.f32.mrb[0].mxu0
    %v4229 = vadd.f32 %v3954, %v4228
    %v4230 = vpop.f32.mrb[0].mxu0
    %4231 = vmatprep.mubr.f32.mxu0 0.0
    %4232 = vmatmul.mubr.f32.gmra.mrb[0].mxu0 %v4026
    %v4233 = vpop.f32.mrb[0].mxu0
    %v4234 = vadd.f32 %v3954, %v4233
    %v4235 = vpop.f32.mrb[0].mxu0
    %4236 = vmatprep.mubr.f32.mxu0 0.0
    %4237 = vmatmul.mubr.f32.gmra.mrb[0].mxu0 %v4029
    %v4238 = vpop.f32.mrb[0].mxu0
    %v4239 = vadd.f32 %v3954, %v4238
    %v4240 = vpop.f32.mrb[0].mxu0
    %4241 = vmatprep.mubr.f32.mxu0 0.0
    %4242 = vmatmul.mubr.f32.gmra.mrb[0].mxu0 %v4032
    %v4243 = vpop.f32.mrb[0].mxu0
    %v4244 = vadd.f32 %v3954, %v4243
    %v4245 = vpop.f32.mrb[0].mxu0
    %4246 = vmatprep.mubr.f32.mxu0 0.0
    %4247 = vmatmul.mubr.f32.gmra.mrb[0].mxu0 %v4035
    %v4248 = vpop.f32.mrb[0].mxu0
    %v4249 = vadd.f32 %v3954, %v4248
    %v4250 = vpop.f32.mrb[0].mxu0
    %4251 = vmatprep.mubr.f32.mxu0 0.0
    %4252 = vmatmul.mubr.f32.gmra.mrb[0].mxu0 %v4038
    %v4253 = vpop.f32.mrb[0].mxu0
    %v4254 = vadd.f32 %v3954, %v4253
    %v4255 = vpop.f32.mrb[0].mxu0
    %4256 = vmatprep.mubr.f32.mxu0 0.0
    %4257 = vmatmul.mubr.f32.gmra.mrb[0].mxu0 %v4041
    %v4258 = vpop.f32.mrb[0].mxu0
    %v4259 = vadd.f32 %v3954, %v4258
    %v4260 = vpop.f32.mrb[0].mxu0
    %4261 = vmatprep.mubr.f32.mxu0 0.0
    %4262 = vmatmul.mubr.f32.gmra.mrb[0].mxu0 %v4044
    %v4263 = vpop.f32.mrb[0].mxu0
    %v4264 = vadd.f32 %v3954, %v4263
    %v4265 = vpop.f32.mrb[0].mxu0
    %4266 = vmatprep.mubr.f32.mxu0 0.0
    %4267 = vmatmul.mubr.f32.gmra.mrb[0].mxu0 %v4047
    %v4268 = vpop.f32.mrb[0].mxu0
    %v4269 = vadd.f32 %v3954, %v4268
    %v4270 = vpop.f32.mrb[0].mxu0
    %4271 = vmatprep.mubr.f32.mxu0 0.0
    %4272 = vmatmul.mubr.f32.gmra.mrb[0].mxu0 %v4050
    %v4273 = vpop.f32.mrb[0].mxu0
    %v4274 = vadd.f32 %v3954, %v4273
    %v4275 = vpop.f32.mrb[0].mxu0
    %4276 = vdwg.mxu0
    %v4277 = vmax.f32 %v4119, 0.0
    %v4278 = vmax.f32 %v4124, 0.0
    %v4279 = vmax.f32 %v4129, 0.0
    %v4280 = vmax.f32 %v4134, 0.0
    %v4281 = vmax.f32 %v4139, 0.0
    %v4282 = vmax.f32 %v4144, 0.0
    %v4283 = vmax.f32 %v4149, 0.0
    %v4284 = vmax.f32 %v4154, 0.0
    %v4285 = vmax.f32 %v4159, 0.0
    %v4286 = vmax.f32 %v4164, 0.0
    %v4287 = vmax.f32 %v4169, 0.0
    %v4288 = vmax.f32 %v4174, 0.0
    %v4289 = vmax.f32 %v4179, 0.0
    %v4290 = vmax.f32 %v4184, 0.0
    %v4291 = vmax.f32 %v4189, 0.0
    %v4292 = vmax.f32 %v4194, 0.0
    %v4293 = vmax.f32 %v4199, 0.0
    %v4294 = vmax.f32 %v4204, 0.0
    %v4295 = vmax.f32 %v4209, 0.0
    %v4296 = vmax.f32 %v4214, 0.0
    %v4297 = vmax.f32 %v4219, 0.0
    %v4298 = vmax.f32 %v4224, 0.0
    %v4299 = vmax.f32 %v4229, 0.0
    %v4300 = vmax.f32 %v4234, 0.0
    %v4301 = vmax.f32 %v4239, 0.0
    %v4302 = vmax.f32 %v4244, 0.0
    %v4303 = vmax.f32 %v4249, 0.0
    %v4304 = vmax.f32 %v4254, 0.0
    %v4305 = vmax.f32 %v4259, 0.0
    %v4306 = vmax.f32 %v4264, 0.0
    %v4307 = vmax.f32 %v4269, 0.0
    %v4308 = vmax.f32 %v4274, 0.0
    %v4309 = vsel %vm848, %v4277, 0.0
    %v4310 = vsel %vm848, %v4278, 0.0
    %v4311 = vadd.f32 %v4309, %v4310
    %v4312 = vsel %vm848, %v4279, 0.0
    %v4313 = vadd.f32 %v4311, %v4312
    %v4314 = vsel %vm848, %v4280, 0.0
    %v4315 = vadd.f32 %v4313, %v4314
    %v4316 = vsel %vm848, %v4281, 0.0
    %v4317 = vadd.f32 %v4315, %v4316
    %v4318 = vsel %vm848, %v4282, 0.0
    %v4319 = vadd.f32 %v4317, %v4318
    %v4320 = vsel %vm848, %v4283, 0.0
    %v4321 = vadd.f32 %v4319, %v4320
    %v4322 = vsel %vm848, %v4284, 0.0
    %v4323 = vadd.f32 %v4321, %v4322
    %v4324 = vsel %vm848, %v4285, 0.0
    %v4325 = vadd.f32 %v4323, %v4324
    %v4326 = vsel %vm848, %v4286, 0.0
    %v4327 = vadd.f32 %v4325, %v4326
    %v4328 = vsel %vm848, %v4287, 0.0
    %v4329 = vadd.f32 %v4327, %v4328
    %v4330 = vsel %vm848, %v4288, 0.0
    %v4331 = vadd.f32 %v4329, %v4330
    %v4332 = vsel %vm848, %v4289, 0.0
    %v4333 = vadd.f32 %v4331, %v4332
    %v4334 = vsel %vm848, %v4290, 0.0
    %v4335 = vadd.f32 %v4333, %v4334
    %v4336 = vsel %vm848, %v4291, 0.0
    %v4337 = vadd.f32 %v4335, %v4336
    %v4338 = vsel %vm848, %v4292, 0.0
    %v4339 = vadd.f32 %v4337, %v4338
    %v4340 = vsel %vm848, %v4293, 0.0
    %v4341 = vadd.f32 %v4339, %v4340
    %v4342 = vsel %vm848, %v4294, 0.0
    %v4343 = vadd.f32 %v4341, %v4342
    %v4344 = vsel %vm848, %v4295, 0.0
    %v4345 = vadd.f32 %v4343, %v4344
    %v4346 = vsel %vm848, %v4296, 0.0
    %v4347 = vadd.f32 %v4345, %v4346
    %v4348 = vsel %vm848, %v4297, 0.0
    %v4349 = vadd.f32 %v4347, %v4348
    %v4350 = vsel %vm848, %v4298, 0.0
    %v4351 = vadd.f32 %v4349, %v4350
    %v4352 = vsel %vm848, %v4299, 0.0
    %v4353 = vadd.f32 %v4351, %v4352
    %v4354 = vsel %vm848, %v4300, 0.0
    %v4355 = vadd.f32 %v4353, %v4354
    %v4356 = vsel %vm848, %v4301, 0.0
    %v4357 = vadd.f32 %v4355, %v4356
    %v4358 = vsel %vm848, %v4302, 0.0
    %v4359 = vadd.f32 %v4357, %v4358
    %v4360 = vsel %vm848, %v4303, 0.0
    %v4361 = vadd.f32 %v4359, %v4360
    %v4362 = vsel %vm848, %v4304, 0.0
    %v4363 = vadd.f32 %v4361, %v4362
    %v4364 = vsel %vm848, %v4305, 0.0
    %v4365 = vadd.f32 %v4363, %v4364
    %v4366 = vsel %vm848, %v4306, 0.0
    %v4367 = vadd.f32 %v4365, %v4366
    %v4368 = vsel %vm848, %v4307, 0.0
    %v4369 = vadd.f32 %v4367, %v4368
    %v4370 = vsel %vm848, %v4308, 0.0
    %v4371 = vadd.f32 %v4369, %v4370
    %v4372 = vrot.slane %v4371, 4
    %v4373 = vadd.f32 %v4371, %v4372
    %v4374 = vrot.slane %v4373, 2
    %v4375 = vadd.f32 %v4373, %v4374
    %v4376 = vrot.slane %v4375, 1
    %v4377 = vadd.f32 %v4375, %v4376
    %v4378 = vmul.f32 %v4377, 0.00390625
    %v4379 = vsub.f32 %v4277, %v4378
    %v4380 = vsub.f32 %v4278, %v4378
    %v4381 = vsub.f32 %v4279, %v4378
    %v4382 = vsub.f32 %v4280, %v4378
    %v4383 = vsub.f32 %v4281, %v4378
    %v4384 = vsub.f32 %v4282, %v4378
    %v4385 = vsub.f32 %v4283, %v4378
    %v4386 = vsub.f32 %v4284, %v4378
    %v4387 = vsub.f32 %v4285, %v4378
    %v4388 = vsub.f32 %v4286, %v4378
    %v4389 = vsub.f32 %v4287, %v4378
    %v4390 = vsub.f32 %v4288, %v4378
    %v4391 = vsub.f32 %v4289, %v4378
    %v4392 = vsub.f32 %v4290, %v4378
    %v4393 = vsub.f32 %v4291, %v4378
    %v4394 = vsub.f32 %v4292, %v4378
    %v4395 = vsub.f32 %v4293, %v4378
    %v4396 = vsub.f32 %v4294, %v4378
    %v4397 = vsub.f32 %v4295, %v4378
    %v4398 = vsub.f32 %v4296, %v4378
    %v4399 = vsub.f32 %v4297, %v4378
    %v4400 = vsub.f32 %v4298, %v4378
    %v4401 = vsub.f32 %v4299, %v4378
    %v4402 = vsub.f32 %v4300, %v4378
    %v4403 = vsub.f32 %v4301, %v4378
    %v4404 = vsub.f32 %v4302, %v4378
    %v4405 = vsub.f32 %v4303, %v4378
    %v4406 = vsub.f32 %v4304, %v4378
    %v4407 = vsub.f32 %v4305, %v4378
    %v4408 = vsub.f32 %v4306, %v4378
    %v4409 = vsub.f32 %v4307, %v4378
    %v4410 = vsub.f32 %v4308, %v4378
    %v4411 = vmul.f32 %v4379, %v4379
    %v4412 = vmul.f32 %v4380, %v4380
    %v4413 = vmul.f32 %v4381, %v4381
    %v4414 = vmul.f32 %v4382, %v4382
    %v4415 = vmul.f32 %v4383, %v4383
    %v4416 = vmul.f32 %v4384, %v4384
    %v4417 = vmul.f32 %v4385, %v4385
    %v4418 = vmul.f32 %v4386, %v4386
    %v4419 = vmul.f32 %v4387, %v4387
    %v4420 = vmul.f32 %v4388, %v4388
    %v4421 = vmul.f32 %v4389, %v4389
    %v4422 = vmul.f32 %v4390, %v4390
    %v4423 = vmul.f32 %v4391, %v4391
    %v4424 = vmul.f32 %v4392, %v4392
    %v4425 = vmul.f32 %v4393, %v4393
    %v4426 = vmul.f32 %v4394, %v4394
    %v4427 = vmul.f32 %v4395, %v4395
    %v4428 = vmul.f32 %v4396, %v4396
    %v4429 = vmul.f32 %v4397, %v4397
    %v4430 = vmul.f32 %v4398, %v4398
    %v4431 = vmul.f32 %v4399, %v4399
    %v4432 = vmul.f32 %v4400, %v4400
    %v4433 = vmul.f32 %v4401, %v4401
    %v4434 = vmul.f32 %v4402, %v4402
    %v4435 = vmul.f32 %v4403, %v4403
    %v4436 = vmul.f32 %v4404, %v4404
    %v4437 = vmul.f32 %v4405, %v4405
    %v4438 = vmul.f32 %v4406, %v4406
    %v4439 = vmul.f32 %v4407, %v4407
    %v4440 = vmul.f32 %v4408, %v4408
    %v4441 = vmul.f32 %v4409, %v4409
    %v4442 = vmul.f32 %v4410, %v4410
    %v4443 = vsel %vm848, %v4411, 0.0
    %v4444 = vsel %vm848, %v4412, 0.0
    %v4445 = vadd.f32 %v4443, %v4444
    %v4446 = vsel %vm848, %v4413, 0.0
    %v4447 = vadd.f32 %v4445, %v4446
    %v4448 = vsel %vm848, %v4414, 0.0
    %v4449 = vadd.f32 %v4447, %v4448
    %v4450 = vsel %vm848, %v4415, 0.0
    %v4451 = vadd.f32 %v4449, %v4450
    %v4452 = vsel %vm848, %v4416, 0.0
    %v4453 = vadd.f32 %v4451, %v4452
    %v4454 = vsel %vm848, %v4417, 0.0
    %v4455 = vadd.f32 %v4453, %v4454
    %v4456 = vsel %vm848, %v4418, 0.0
    %v4457 = vadd.f32 %v4455, %v4456
    %v4458 = vsel %vm848, %v4419, 0.0
    %v4459 = vadd.f32 %v4457, %v4458
    %v4460 = vsel %vm848, %v4420, 0.0
    %v4461 = vadd.f32 %v4459, %v4460
    %v4462 = vsel %vm848, %v4421, 0.0
    %v4463 = vadd.f32 %v4461, %v4462
    %v4464 = vsel %vm848, %v4422, 0.0
    %v4465 = vadd.f32 %v4463, %v4464
    %v4466 = vsel %vm848, %v4423, 0.0
    %v4467 = vadd.f32 %v4465, %v4466
    %v4468 = vsel %vm848, %v4424, 0.0
    %v4469 = vadd.f32 %v4467, %v4468
    %v4470 = vsel %vm848, %v4425, 0.0
    %v4471 = vadd.f32 %v4469, %v4470
    %v4472 = vsel %vm848, %v4426, 0.0
    %v4473 = vadd.f32 %v4471, %v4472
    %v4474 = vsel %vm848, %v4427, 0.0
    %v4475 = vadd.f32 %v4473, %v4474
    %v4476 = vsel %vm848, %v4428, 0.0
    %v4477 = vadd.f32 %v4475, %v4476
    %v4478 = vsel %vm848, %v4429, 0.0
    %v4479 = vadd.f32 %v4477, %v4478
    %v4480 = vsel %vm848, %v4430, 0.0
    %v4481 = vadd.f32 %v4479, %v4480
    %v4482 = vsel %vm848, %v4431, 0.0
    %v4483 = vadd.f32 %v4481, %v4482
    %v4484 = vsel %vm848, %v4432, 0.0
    %v4485 = vadd.f32 %v4483, %v4484
    %v4486 = vsel %vm848, %v4433, 0.0
    %v4487 = vadd.f32 %v4485, %v4486
    %v4488 = vsel %vm848, %v4434, 0.0
    %v4489 = vadd.f32 %v4487, %v4488
    %v4490 = vsel %vm848, %v4435, 0.0
    %v4491 = vadd.f32 %v4489, %v4490
    %v4492 = vsel %vm848, %v4436, 0.0
    %v4493 = vadd.f32 %v4491, %v4492
    %v4494 = vsel %vm848, %v4437, 0.0
    %v4495 = vadd.f32 %v4493, %v4494
    %v4496 = vsel %vm848, %v4438, 0.0
    %v4497 = vadd.f32 %v4495, %v4496
    %v4498 = vsel %vm848, %v4439, 0.0
    %v4499 = vadd.f32 %v4497, %v4498
    %v4500 = vsel %vm848, %v4440, 0.0
    %v4501 = vadd.f32 %v4499, %v4500
    %v4502 = vsel %vm848, %v4441, 0.0
    %v4503 = vadd.f32 %v4501, %v4502
    %v4504 = vsel %vm848, %v4442, 0.0
    %v4505 = vadd.f32 %v4503, %v4504
    %v4506 = vrot.slane %v4505, 4
    %v4507 = vadd.f32 %v4505, %v4506
    %v4508 = vrot.slane %v4507, 2
    %v4509 = vadd.f32 %v4507, %v4508
    %v4510 = vrot.slane %v4509, 1
    %v4511 = vadd.f32 %v4509, %v4510
    %v4512 = vmul.f32 %v4511, 0.00390625
    %v4513 = vadd.f32 %v4512, 1e-05
    %v4514 = vrsqrt.pop %v4513
    %v4515 = vmul.f32 %v3412, %v4514
    %v4517 = vlaneseq
    %v4518 = vshrl.u32 %v4517, 7
    %v4519 = vsub.s32 0, %v4518
    %v4520 = vrot.slane %v4515, %v4519
    %v4522 = vmul.f32 %v4379, %v4520
    %v4523 = vmul.f32 %v4380, %v4520
    %v4524 = vmul.f32 %v4381, %v4520
    %v4525 = vmul.f32 %v4382, %v4520
    %v4526 = vmul.f32 %v4383, %v4520
    %v4527 = vmul.f32 %v4384, %v4520
    %v4528 = vmul.f32 %v4385, %v4520
    %v4529 = vmul.f32 %v4386, %v4520
    %v4530 = vmul.f32 %v4387, %v4520
    %v4531 = vmul.f32 %v4388, %v4520
    %v4532 = vmul.f32 %v4389, %v4520
    %v4533 = vmul.f32 %v4390, %v4520
    %v4534 = vmul.f32 %v4391, %v4520
    %v4535 = vmul.f32 %v4392, %v4520
    %v4536 = vmul.f32 %v4393, %v4520
    %v4537 = vmul.f32 %v4394, %v4520
    %v4538 = vmul.f32 %v4395, %v4520
    %v4539 = vmul.f32 %v4396, %v4520
    %v4540 = vmul.f32 %v4397, %v4520
    %v4541 = vmul.f32 %v4398, %v4520
    %v4542 = vmul.f32 %v4399, %v4520
    %v4543 = vmul.f32 %v4400, %v4520
    %v4544 = vmul.f32 %v4401, %v4520
    %v4545 = vmul.f32 %v4402, %v4520
    %v4546 = vmul.f32 %v4403, %v4520
    %v4547 = vmul.f32 %v4404, %v4520
    %v4548 = vmul.f32 %v4405, %v4520
    %v4549 = vmul.f32 %v4406, %v4520
    %v4550 = vmul.f32 %v4407, %v4520
    %v4551 = vmul.f32 %v4408, %v4520
    %v4552 = vmul.f32 %v4409, %v4520
    %v4553 = vmul.f32 %v4410, %v4520
    %v4555 = vlaneseq
    %v4556 = vshrl.u32 %v4555, 7
    %v4557 = vsub.s32 0, %v4556
    %v4558 = vrot.slane %v3413, %v4557
    %v4560 = vadd.f32 %v4522, %v4558
    %v4561 = vadd.f32 %v4523, %v4558
    %v4562 = vadd.f32 %v4524, %v4558
    %v4563 = vadd.f32 %v4525, %v4558
    %v4564 = vadd.f32 %v4526, %v4558
    %v4565 = vadd.f32 %v4527, %v4558
    %v4566 = vadd.f32 %v4528, %v4558
    %v4567 = vadd.f32 %v4529, %v4558
    %v4568 = vadd.f32 %v4530, %v4558
    %v4569 = vadd.f32 %v4531, %v4558
    %v4570 = vadd.f32 %v4532, %v4558
    %v4571 = vadd.f32 %v4533, %v4558
    %v4572 = vadd.f32 %v4534, %v4558
    %v4573 = vadd.f32 %v4535, %v4558
    %v4574 = vadd.f32 %v4536, %v4558
    %v4575 = vadd.f32 %v4537, %v4558
    %v4576 = vadd.f32 %v4538, %v4558
    %v4577 = vadd.f32 %v4539, %v4558
    %v4578 = vadd.f32 %v4540, %v4558
    %v4579 = vadd.f32 %v4541, %v4558
    %v4580 = vadd.f32 %v4542, %v4558
    %v4581 = vadd.f32 %v4543, %v4558
    %v4582 = vadd.f32 %v4544, %v4558
    %v4583 = vadd.f32 %v4545, %v4558
    %v4584 = vadd.f32 %v4546, %v4558
    %v4585 = vadd.f32 %v4547, %v4558
    %v4586 = vadd.f32 %v4548, %v4558
    %v4587 = vadd.f32 %v4549, %v4558
    %v4588 = vadd.f32 %v4550, %v4558
    %v4589 = vadd.f32 %v4551, %v4558
    %v4590 = vadd.f32 %v4552, %v4558
    %v4591 = vadd.f32 %v4553, %v4558
    %v4592 = vmul.f32 %v4560, %v1520
    %v4593 = vmul.f32 %v4561, %v1525
    %v4594 = vmul.f32 %v4562, %v1530
    %v4595 = vmul.f32 %v4563, %v1535
    %v4596 = vmul.f32 %v4564, %v1540
    %v4597 = vmul.f32 %v4565, %v1545
    %v4598 = vmul.f32 %v4566, %v1550
    %v4599 = vmul.f32 %v4567, %v1555
    %v4600 = vmul.f32 %v4568, %v1560
    %v4601 = vmul.f32 %v4569, %v1565
    %v4602 = vmul.f32 %v4570, %v1570
    %v4603 = vmul.f32 %v4571, %v1575
    %v4604 = vmul.f32 %v4572, %v1580
    %v4605 = vmul.f32 %v4573, %v1585
    %v4606 = vmul.f32 %v4574, %v1590
    %v4607 = vmul.f32 %v4575, %v1595
    %v4608 = vmul.f32 %v4576, %v1600
    %v4609 = vmul.f32 %v4577, %v1605
    %v4610 = vmul.f32 %v4578, %v1610
    %v4611 = vmul.f32 %v4579, %v1615
    %v4612 = vmul.f32 %v4580, %v1620
    %v4613 = vmul.f32 %v4581, %v1625
    %v4614 = vmul.f32 %v4582, %v1630
    %v4615 = vmul.f32 %v4583, %v1635
    %v4616 = vmul.f32 %v4584, %v1640
    %v4617 = vmul.f32 %v4585, %v1645
    %v4618 = vmul.f32 %v4586, %v1650
    %v4619 = vmul.f32 %v4587, %v1655
    %v4620 = vmul.f32 %v4588, %v1660
    %v4621 = vmul.f32 %v4589, %v1665
    %v4622 = vmul.f32 %v4590, %v1670
    %v4623 = vmul.f32 %v4591, %v1675
    %v4624 = vsel %vm848, %v4592, 0.0
    %v4625 = vsel %vm848, %v4593, 0.0
    %v4626 = vadd.f32 %v4624, %v4625
    %v4627 = vsel %vm848, %v4594, 0.0
    %v4628 = vadd.f32 %v4626, %v4627
    %v4629 = vsel %vm848, %v4595, 0.0
    %v4630 = vadd.f32 %v4628, %v4629
    %v4631 = vsel %vm848, %v4596, 0.0
    %v4632 = vadd.f32 %v4630, %v4631
    %v4633 = vsel %vm848, %v4597, 0.0
    %v4634 = vadd.f32 %v4632, %v4633
    %v4635 = vsel %vm848, %v4598, 0.0
    %v4636 = vadd.f32 %v4634, %v4635
    %v4637 = vsel %vm848, %v4599, 0.0
    %v4638 = vadd.f32 %v4636, %v4637
    %v4639 = vsel %vm848, %v4600, 0.0
    %v4640 = vadd.f32 %v4638, %v4639
    %v4641 = vsel %vm848, %v4601, 0.0
    %v4642 = vadd.f32 %v4640, %v4641
    %v4643 = vsel %vm848, %v4602, 0.0
    %v4644 = vadd.f32 %v4642, %v4643
    %v4645 = vsel %vm848, %v4603, 0.0
    %v4646 = vadd.f32 %v4644, %v4645
    %v4647 = vsel %vm848, %v4604, 0.0
    %v4648 = vadd.f32 %v4646, %v4647
    %v4649 = vsel %vm848, %v4605, 0.0
    %v4650 = vadd.f32 %v4648, %v4649
    %v4651 = vsel %vm848, %v4606, 0.0
    %v4652 = vadd.f32 %v4650, %v4651
    %v4653 = vsel %vm848, %v4607, 0.0
    %v4654 = vadd.f32 %v4652, %v4653
    %v4655 = vsel %vm848, %v4608, 0.0
    %v4656 = vadd.f32 %v4654, %v4655
    %v4657 = vsel %vm848, %v4609, 0.0
    %v4658 = vadd.f32 %v4656, %v4657
    %v4659 = vsel %vm848, %v4610, 0.0
    %v4660 = vadd.f32 %v4658, %v4659
    %v4661 = vsel %vm848, %v4611, 0.0
    %v4662 = vadd.f32 %v4660, %v4661
    %v4663 = vsel %vm848, %v4612, 0.0
    %v4664 = vadd.f32 %v4662, %v4663
    %v4665 = vsel %vm848, %v4613, 0.0
    %v4666 = vadd.f32 %v4664, %v4665
    %v4667 = vsel %vm848, %v4614, 0.0
    %v4668 = vadd.f32 %v4666, %v4667
    %v4669 = vsel %vm848, %v4615, 0.0
    %v4670 = vadd.f32 %v4668, %v4669
    %v4671 = vsel %vm848, %v4616, 0.0
    %v4672 = vadd.f32 %v4670, %v4671
    %v4673 = vsel %vm848, %v4617, 0.0
    %v4674 = vadd.f32 %v4672, %v4673
    %v4675 = vsel %vm848, %v4618, 0.0
    %v4676 = vadd.f32 %v4674, %v4675
    %v4677 = vsel %vm848, %v4619, 0.0
    %v4678 = vadd.f32 %v4676, %v4677
    %v4679 = vsel %vm848, %v4620, 0.0
    %v4680 = vadd.f32 %v4678, %v4679
    %v4681 = vsel %vm848, %v4621, 0.0
    %v4682 = vadd.f32 %v4680, %v4681
    %v4683 = vsel %vm848, %v4622, 0.0
    %v4684 = vadd.f32 %v4682, %v4683
    %v4685 = vsel %vm848, %v4623, 0.0
    %v4686 = vadd.f32 %v4684, %v4685
    %v4687 = vrot.slane %v4686, 4
    %v4688 = vadd.f32 %v4686, %v4687
    %v4689 = vrot.slane %v4688, 2
    %v4690 = vadd.f32 %v4688, %v4689
    %v4691 = vrot.slane %v4690, 1
    %v4692 = vadd.f32 %v4690, %v4691
    %v4693 = vmul.f32 %v4560, %v1780
    %v4694 = vmul.f32 %v4561, %v1784
    %v4695 = vmul.f32 %v4562, %v1788
    %v4696 = vmul.f32 %v4563, %v1792
    %v4697 = vmul.f32 %v4564, %v1796
    %v4698 = vmul.f32 %v4565, %v1800
    %v4699 = vmul.f32 %v4566, %v1804
    %v4700 = vmul.f32 %v4567, %v1808
    %v4701 = vmul.f32 %v4568, %v1812
    %v4702 = vmul.f32 %v4569, %v1816
    %v4703 = vmul.f32 %v4570, %v1820
    %v4704 = vmul.f32 %v4571, %v1824
    %v4705 = vmul.f32 %v4572, %v1828
    %v4706 = vmul.f32 %v4573, %v1832
    %v4707 = vmul.f32 %v4574, %v1836
    %v4708 = vmul.f32 %v4575, %v1840
    %v4709 = vmul.f32 %v4576, %v1844
    %v4710 = vmul.f32 %v4577, %v1848
    %v4711 = vmul.f32 %v4578, %v1852
    %v4712 = vmul.f32 %v4579, %v1856
    %v4713 = vmul.f32 %v4580, %v1860
    %v4714 = vmul.f32 %v4581, %v1864
    %v4715 = vmul.f32 %v4582, %v1868
    %v4716 = vmul.f32 %v4583, %v1872
    %v4717 = vmul.f32 %v4584, %v1876
    %v4718 = vmul.f32 %v4585, %v1880
    %v4719 = vmul.f32 %v4586, %v1884
    %v4720 = vmul.f32 %v4587, %v1888
    %v4721 = vmul.f32 %v4588, %v1892
    %v4722 = vmul.f32 %v4589, %v1896
    %v4723 = vmul.f32 %v4590, %v1900
    %v4724 = vmul.f32 %v4591, %v1904
    %v4725 = vsel %vm848, %v4693, 0.0
    %v4726 = vsel %vm848, %v4694, 0.0
    %v4727 = vadd.f32 %v4725, %v4726
    %v4728 = vsel %vm848, %v4695, 0.0
    %v4729 = vadd.f32 %v4727, %v4728
    %v4730 = vsel %vm848, %v4696, 0.0
    %v4731 = vadd.f32 %v4729, %v4730
    %v4732 = vsel %vm848, %v4697, 0.0
    %v4733 = vadd.f32 %v4731, %v4732
    %v4734 = vsel %vm848, %v4698, 0.0
    %v4735 = vadd.f32 %v4733, %v4734
    %v4736 = vsel %vm848, %v4699, 0.0
    %v4737 = vadd.f32 %v4735, %v4736
    %v4738 = vsel %vm848, %v4700, 0.0
    %v4739 = vadd.f32 %v4737, %v4738
    %v4740 = vsel %vm848, %v4701, 0.0
    %v4741 = vadd.f32 %v4739, %v4740
    %v4742 = vsel %vm848, %v4702, 0.0
    %v4743 = vadd.f32 %v4741, %v4742
    %v4744 = vsel %vm848, %v4703, 0.0
    %v4745 = vadd.f32 %v4743, %v4744
    %v4746 = vsel %vm848, %v4704, 0.0
    %v4747 = vadd.f32 %v4745, %v4746
    %v4748 = vsel %vm848, %v4705, 0.0
    %v4749 = vadd.f32 %v4747, %v4748
    %v4750 = vsel %vm848, %v4706, 0.0
    %v4751 = vadd.f32 %v4749, %v4750
    %v4752 = vsel %vm848, %v4707, 0.0
    %v4753 = vadd.f32 %v4751, %v4752
    %v4754 = vsel %vm848, %v4708, 0.0
    %v4755 = vadd.f32 %v4753, %v4754
    %v4756 = vsel %vm848, %v4709, 0.0
    %v4757 = vadd.f32 %v4755, %v4756
    %v4758 = vsel %vm848, %v4710, 0.0
    %v4759 = vadd.f32 %v4757, %v4758
    %v4760 = vsel %vm848, %v4711, 0.0
    %v4761 = vadd.f32 %v4759, %v4760
    %v4762 = vsel %vm848, %v4712, 0.0
    %v4763 = vadd.f32 %v4761, %v4762
    %v4764 = vsel %vm848, %v4713, 0.0
    %v4765 = vadd.f32 %v4763, %v4764
    %v4766 = vsel %vm848, %v4714, 0.0
    %v4767 = vadd.f32 %v4765, %v4766
    %v4768 = vsel %vm848, %v4715, 0.0
    %v4769 = vadd.f32 %v4767, %v4768
    %v4770 = vsel %vm848, %v4716, 0.0
    %v4771 = vadd.f32 %v4769, %v4770
    %v4772 = vsel %vm848, %v4717, 0.0
    %v4773 = vadd.f32 %v4771, %v4772
    %v4774 = vsel %vm848, %v4718, 0.0
    %v4775 = vadd.f32 %v4773, %v4774
    %v4776 = vsel %vm848, %v4719, 0.0
    %v4777 = vadd.f32 %v4775, %v4776
    %v4778 = vsel %vm848, %v4720, 0.0
    %v4779 = vadd.f32 %v4777, %v4778
    %v4780 = vsel %vm848, %v4721, 0.0
    %v4781 = vadd.f32 %v4779, %v4780
    %v4782 = vsel %vm848, %v4722, 0.0
    %v4783 = vadd.f32 %v4781, %v4782
    %v4784 = vsel %vm848, %v4723, 0.0
    %v4785 = vadd.f32 %v4783, %v4784
    %v4786 = vsel %vm848, %v4724, 0.0
    %v4787 = vadd.f32 %v4785, %v4786
    %v4788 = vrot.slane %v4787, 4
    %v4789 = vadd.f32 %v4787, %v4788
    %v4790 = vrot.slane %v4789, 2
    %v4791 = vadd.f32 %v4789, %v4790
    %v4792 = vrot.slane %v4791, 1
    %v4793 = vadd.f32 %v4791, %v4792
    %v4794 = vsel %vm2007, %v4692, %v4793
    %4795 = vrot.lane.b32.xlu0 %v3167, 32
    %v4796 = vpop.permute.xlu0 %4795
    %4797 = vrot.lane.b32.xlu0 %v3168, 32
    %v4798 = vpop.permute.xlu0 %4797
    %4799 = vrot.lane.b32.xlu0 %v3169, 32
    %v4800 = vpop.permute.xlu0 %4799
    %4801 = vrot.lane.b32.xlu0 %v3170, 32
    %v4802 = vpop.permute.xlu0 %4801
    %4803 = vrot.lane.b32.xlu0 %v3171, 32
    %v4804 = vpop.permute.xlu0 %4803
    %4805 = vrot.lane.b32.xlu0 %v3172, 32
    %v4806 = vpop.permute.xlu0 %4805
    %4807 = vrot.lane.b32.xlu0 %v3173, 32
    %v4808 = vpop.permute.xlu0 %4807
    %4809 = vrot.lane.b32.xlu0 %v3174, 32
    %v4810 = vpop.permute.xlu0 %4809
    %4811 = vrot.lane.b32.xlu0 %v3175, 32
    %v4812 = vpop.permute.xlu0 %4811
    %4813 = vrot.lane.b32.xlu0 %v3176, 32
    %v4814 = vpop.permute.xlu0 %4813
    %4815 = vrot.lane.b32.xlu0 %v3177, 32
    %v4816 = vpop.permute.xlu0 %4815
    %4817 = vrot.lane.b32.xlu0 %v3178, 32
    %v4818 = vpop.permute.xlu0 %4817
    %4819 = vrot.lane.b32.xlu0 %v3179, 32
    %v4820 = vpop.permute.xlu0 %4819
    %4821 = vrot.lane.b32.xlu0 %v3180, 32
    %v4822 = vpop.permute.xlu0 %4821
    %4823 = vrot.lane.b32.xlu0 %v3181, 32
    %v4824 = vpop.permute.xlu0 %4823
    %4825 = vrot.lane.b32.xlu0 %v3182, 32
    %v4826 = vpop.permute.xlu0 %4825
    %4827 = vrot.lane.b32.xlu0 %v3183, 32
    %v4828 = vpop.permute.xlu0 %4827
    %4829 = vrot.lane.b32.xlu0 %v3184, 32
    %v4830 = vpop.permute.xlu0 %4829
    %4831 = vrot.lane.b32.xlu0 %v3185, 32
    %v4832 = vpop.permute.xlu0 %4831
    %4833 = vrot.lane.b32.xlu0 %v3186, 32
    %v4834 = vpop.permute.xlu0 %4833
    %4835 = vrot.lane.b32.xlu0 %v3187, 32
    %v4836 = vpop.permute.xlu0 %4835
    %4837 = vrot.lane.b32.xlu0 %v3188, 32
    %v4838 = vpop.permute.xlu0 %4837
    %4839 = vrot.lane.b32.xlu0 %v3189, 32
    %v4840 = vpop.permute.xlu0 %4839
    %4841 = vrot.lane.b32.xlu0 %v3190, 32
    %v4842 = vpop.permute.xlu0 %4841
    %4843 = vrot.lane.b32.xlu0 %v3191, 32
    %v4844 = vpop.permute.xlu0 %4843
    %4845 = vrot.lane.b32.xlu0 %v3192, 32
    %v4846 = vpop.permute.xlu0 %4845
    %4847 = vrot.lane.b32.xlu0 %v3193, 32
    %v4848 = vpop.permute.xlu0 %4847
    %4849 = vrot.lane.b32.xlu0 %v3194, 32
    %v4850 = vpop.permute.xlu0 %4849
    %4851 = vrot.lane.b32.xlu0 %v3195, 32
    %v4852 = vpop.permute.xlu0 %4851
    %4853 = vrot.lane.b32.xlu0 %v3196, 32
    %v4854 = vpop.permute.xlu0 %4853
    %4855 = vrot.lane.b32.xlu0 %v3197, 32
    %v4856 = vpop.permute.xlu0 %4855
    %4857 = vrot.lane.b32.xlu0 %v3198, 32
    %v4858 = vpop.permute.xlu0 %4857
    %4923 = vrot.lane.b32.xlu0 %v4560, 64
    %v4924 = vpop.permute.xlu0 %4923
    %4925 = vrot.lane.b32.xlu0 %v4561, 64
    %v4926 = vpop.permute.xlu0 %4925
    %4927 = vrot.lane.b32.xlu0 %v4562, 64
    %v4928 = vpop.permute.xlu0 %4927
    %4929 = vrot.lane.b32.xlu0 %v4563, 64
    %v4930 = vpop.permute.xlu0 %4929
    %4931 = vrot.lane.b32.xlu0 %v4564, 64
    %v4932 = vpop.permute.xlu0 %4931
    %4933 = vrot.lane.b32.xlu0 %v4565, 64
    %v4934 = vpop.permute.xlu0 %4933
    %4935 = vrot.lane.b32.xlu0 %v4566, 64
    %v4936 = vpop.permute.xlu0 %4935
    %4937 = vrot.lane.b32.xlu0 %v4567, 64
    %v4938 = vpop.permute.xlu0 %4937
    %4939 = vrot.lane.b32.xlu0 %v4568, 64
    %v4940 = vpop.permute.xlu0 %4939
    %4941 = vrot.lane.b32.xlu0 %v4569, 64
    %v4942 = vpop.permute.xlu0 %4941
    %4943 = vrot.lane.b32.xlu0 %v4570, 64
    %v4944 = vpop.permute.xlu0 %4943
    %4945 = vrot.lane.b32.xlu0 %v4571, 64
    %v4946 = vpop.permute.xlu0 %4945
    %4947 = vrot.lane.b32.xlu0 %v4572, 64
    %v4948 = vpop.permute.xlu0 %4947
    %4949 = vrot.lane.b32.xlu0 %v4573, 64
    %v4950 = vpop.permute.xlu0 %4949
    %4951 = vrot.lane.b32.xlu0 %v4574, 64
    %v4952 = vpop.permute.xlu0 %4951
    %4953 = vrot.lane.b32.xlu0 %v4575, 64
    %v4954 = vpop.permute.xlu0 %4953
    %4955 = vrot.lane.b32.xlu0 %v4576, 64
    %v4956 = vpop.permute.xlu0 %4955
    %4957 = vrot.lane.b32.xlu0 %v4577, 64
    %v4958 = vpop.permute.xlu0 %4957
    %4959 = vrot.lane.b32.xlu0 %v4578, 64
    %v4960 = vpop.permute.xlu0 %4959
    %4961 = vrot.lane.b32.xlu0 %v4579, 64
    %v4962 = vpop.permute.xlu0 %4961
    %4963 = vrot.lane.b32.xlu0 %v4580, 64
    %v4964 = vpop.permute.xlu0 %4963
    %4965 = vrot.lane.b32.xlu0 %v4581, 64
    %v4966 = vpop.permute.xlu0 %4965
    %4967 = vrot.lane.b32.xlu0 %v4582, 64
    %v4968 = vpop.permute.xlu0 %4967
    %4969 = vrot.lane.b32.xlu0 %v4583, 64
    %v4970 = vpop.permute.xlu0 %4969
    %4971 = vrot.lane.b32.xlu0 %v4584, 64
    %v4972 = vpop.permute.xlu0 %4971
    %4973 = vrot.lane.b32.xlu0 %v4585, 64
    %v4974 = vpop.permute.xlu0 %4973
    %4975 = vrot.lane.b32.xlu0 %v4586, 64
    %v4976 = vpop.permute.xlu0 %4975
    %4977 = vrot.lane.b32.xlu0 %v4587, 64
    %v4978 = vpop.permute.xlu0 %4977
    %4979 = vrot.lane.b32.xlu0 %v4588, 64
    %v4980 = vpop.permute.xlu0 %4979
    %4981 = vrot.lane.b32.xlu0 %v4589, 64
    %v4982 = vpop.permute.xlu0 %4981
    %4983 = vrot.lane.b32.xlu0 %v4590, 64
    %v4984 = vpop.permute.xlu0 %4983
    %4985 = vrot.lane.b32.xlu0 %v4591, 64
    %v4986 = vpop.permute.xlu0 %4985
    %v5019 = vsel %vm848, %v1453, %v4796
    %v5020 = vsel %vm848, %v1454, %v4798
    %v5021 = vsel %vm848, %v1455, %v4800
    %v5022 = vsel %vm848, %v1456, %v4802
    %v5023 = vsel %vm848, %v1457, %v4804
    %v5024 = vsel %vm848, %v1458, %v4806
    %v5025 = vsel %vm848, %v1459, %v4808
    %v5026 = vsel %vm848, %v1460, %v4810
    %v5027 = vsel %vm848, %v1461, %v4812
    %v5028 = vsel %vm848, %v1462, %v4814
    %v5029 = vsel %vm848, %v1463, %v4816
    %v5030 = vsel %vm848, %v1464, %v4818
    %v5031 = vsel %vm848, %v1465, %v4820
    %v5032 = vsel %vm848, %v1466, %v4822
    %v5033 = vsel %vm848, %v1467, %v4824
    %v5034 = vsel %vm848, %v1468, %v4826
    %v5035 = vsel %vm848, %v1469, %v4828
    %v5036 = vsel %vm848, %v1470, %v4830
    %v5037 = vsel %vm848, %v1471, %v4832
    %v5038 = vsel %vm848, %v1472, %v4834
    %v5039 = vsel %vm848, %v1473, %v4836
    %v5040 = vsel %vm848, %v1474, %v4838
    %v5041 = vsel %vm848, %v1475, %v4840
    %v5042 = vsel %vm848, %v1476, %v4842
    %v5043 = vsel %vm848, %v1477, %v4844
    %v5044 = vsel %vm848, %v1478, %v4846
    %v5045 = vsel %vm848, %v1479, %v4848
    %v5046 = vsel %vm848, %v1480, %v4850
    %v5047 = vsel %vm848, %v1481, %v4852
    %v5048 = vsel %vm848, %v1482, %v4854
    %v5049 = vsel %vm848, %v1483, %v4856
    %v5050 = vsel %vm848, %v1484, %v4858
    %vm5051 = vcmask 523264
    %v5052 = vsel %vm5051, %v5019, %v4924
    %v5053 = vsel %vm5051, %v5020, %v4926
    %v5054 = vsel %vm5051, %v5021, %v4928
    %v5055 = vsel %vm5051, %v5022, %v4930
    %v5056 = vsel %vm5051, %v5023, %v4932
    %v5057 = vsel %vm5051, %v5024, %v4934
    %v5058 = vsel %vm5051, %v5025, %v4936
    %v5059 = vsel %vm5051, %v5026, %v4938
    %v5060 = vsel %vm5051, %v5027, %v4940
    %v5061 = vsel %vm5051, %v5028, %v4942
    %v5062 = vsel %vm5051, %v5029, %v4944
    %v5063 = vsel %vm5051, %v5030, %v4946
    %v5064 = vsel %vm5051, %v5031, %v4948
    %v5065 = vsel %vm5051, %v5032, %v4950
    %v5066 = vsel %vm5051, %v5033, %v4952
    %v5067 = vsel %vm5051, %v5034, %v4954
    %v5068 = vsel %vm5051, %v5035, %v4956
    %v5069 = vsel %vm5051, %v5036, %v4958
    %v5070 = vsel %vm5051, %v5037, %v4960
    %v5071 = vsel %vm5051, %v5038, %v4962
    %v5072 = vsel %vm5051, %v5039, %v4964
    %v5073 = vsel %vm5051, %v5040, %v4966
    %v5074 = vsel %vm5051, %v5041, %v4968
    %v5075 = vsel %vm5051, %v5042, %v4970
    %v5076 = vsel %vm5051, %v5043, %v4972
    %v5077 = vsel %vm5051, %v5044, %v4974
    %v5078 = vsel %vm5051, %v5045, %v4976
    %v5079 = vsel %vm5051, %v5046, %v4978
    %v5080 = vsel %vm5051, %v5047, %v4980
    %v5081 = vsel %vm5051, %v5048, %v4982
    %v5082 = vsel %vm5051, %v5049, %v4984
    %v5083 = vsel %vm5051, %v5050, %v4986
    %vm5084 = vcmask 785408
    %v5085 = vsel %vm5084, %v5052, 0.0
    %v5086 = vsel %vm5084, %v5053, 0.0
    %v5087 = vsel %vm5084, %v5054, 0.0
    %v5088 = vsel %vm5084, %v5055, 0.0
    %v5089 = vsel %vm5084, %v5056, 0.0
    %v5090 = vsel %vm5084, %v5057, 0.0
    %v5091 = vsel %vm5084, %v5058, 0.0
    %v5092 = vsel %vm5084, %v5059, 0.0
    %v5093 = vsel %vm5084, %v5060, 0.0
    %v5094 = vsel %vm5084, %v5061, 0.0
    %v5095 = vsel %vm5084, %v5062, 0.0
    %v5096 = vsel %vm5084, %v5063, 0.0
    %v5097 = vsel %vm5084, %v5064, 0.0
    %v5098 = vsel %vm5084, %v5065, 0.0
    %v5099 = vsel %vm5084, %v5066, 0.0
    %v5100 = vsel %vm5084, %v5067, 0.0
    %v5101 = vsel %vm5084, %v5068, 0.0
    %v5102 = vsel %vm5084, %v5069, 0.0
    %v5103 = vsel %vm5084, %v5070, 0.0
    %v5104 = vsel %vm5084, %v5071, 0.0
    %v5105 = vsel %vm5084, %v5072, 0.0
    %v5106 = vsel %vm5084, %v5073, 0.0
    %v5107 = vsel %vm5084, %v5074, 0.0
    %v5108 = vsel %vm5084, %v5075, 0.0
    %v5109 = vsel %vm5084, %v5076, 0.0
    %v5110 = vsel %vm5084, %v5077, 0.0
    %v5111 = vsel %vm5084, %v5078, 0.0
    %v5112 = vsel %vm5084, %v5079, 0.0
    %v5113 = vsel %vm5084, %v5080, 0.0
    %v5114 = vsel %vm5084, %v5081, 0.0
    %v5115 = vsel %vm5084, %v5082, 0.0
    %v5116 = vsel %vm5084, %v5083, 0.0
    %5117 = vst [vmem:[%s21] sm:$0xff] %v5085
    %5118 = vst [vmem:[%s21 + $0x8] sm:$0xff] %v5086
    %5119 = vst [vmem:[%s21 + $0x10] sm:$0xff] %v5087
    %5120 = vst [vmem:[%s21 + $0x18] sm:$0xff] %v5088
    %5121 = vst [vmem:[%s21 + $0x20] sm:$0xff] %v5089
    %5122 = vst [vmem:[%s21 + $0x28] sm:$0xff] %v5090
    %5123 = vst [vmem:[%s21 + $0x30] sm:$0xff] %v5091
    %5124 = vst [vmem:[%s21 + $0x38] sm:$0xff] %v5092
    %5125 = vst [vmem:[%s21 + $0x40] sm:$0xff] %v5093
    %5126 = vst [vmem:[%s21 + $0x48] sm:$0xff] %v5094
    %5127 = vst [vmem:[%s21 + $0x50] sm:$0xff] %v5095
    %5128 = vst [vmem:[%s21 + $0x58] sm:$0xff] %v5096
    %5129 = vst [vmem:[%s21 + $0x60] sm:$0xff] %v5097
    %5130 = vst [vmem:[%s21 + $0x68] sm:$0xff] %v5098
    %5131 = vst [vmem:[%s21 + $0x70] sm:$0xff] %v5099
    %5132 = vst [vmem:[%s21 + $0x78] sm:$0xff] %v5100
    %5133 = vst [vmem:[%s21 + $0x80] sm:$0xff] %v5101
    %5134 = vst [vmem:[%s21 + $0x88] sm:$0xff] %v5102
    %5135 = vst [vmem:[%s21 + $0x90] sm:$0xff] %v5103
    %5136 = vst [vmem:[%s21 + $0x98] sm:$0xff] %v5104
    %5137 = vst [vmem:[%s21 + $0xa0] sm:$0xff] %v5105
    %5138 = vst [vmem:[%s21 + $0xa8] sm:$0xff] %v5106
    %5139 = vst [vmem:[%s21 + $0xb0] sm:$0xff] %v5107
    %5140 = vst [vmem:[%s21 + $0xb8] sm:$0xff] %v5108
    %5141 = vst [vmem:[%s21 + $0xc0] sm:$0xff] %v5109
    %5142 = vst [vmem:[%s21 + $0xc8] sm:$0xff] %v5110
    %5143 = vst [vmem:[%s21 + $0xd0] sm:$0xff] %v5111
    %5144 = vst [vmem:[%s21 + $0xd8] sm:$0xff] %v5112
    %5145 = vst [vmem:[%s21 + $0xe0] sm:$0xff] %v5113
    %5146 = vst [vmem:[%s21 + $0xe8] sm:$0xff] %v5114
    %5147 = vst [vmem:[%s21 + $0xf0] sm:$0xff] %v5115
    %5148 = vst [vmem:[%s21 + $0xf8] sm:$0xff] %v5116
    %5150 = vrot.lane.b32.xlu0 %v3401, 32
    %v5151 = vpop.permute.xlu0 %5150
    %5154 = vrot.lane.b32.xlu0 %v4794, 64
    %v5155 = vpop.permute.xlu0 %5154
    %v5157 = vsel %vm848, %v2008, %v5151
    %v5158 = vsel %vm5051, %v5157, %v5155
    %v5159 = vsel %vm5084, %v5158, 0.0
    %5160 = vst [vmem:[#allocation2] sm:$0x3] %v5159
    // Predicated region
    $region86: #{gconv_forward.1} parent=1 // pred_check
      _
    $region87: #{gconv_forward.1} parent=1 // pred_check_branch
      %5162 = sbr.rel (0) target = $region89
    $region88: #{gconv_forward.1} parent=1 // pred_region
      _
    $region89: #{gconv_forward.1} parent=1 // pred_fallthru
      _
    // Predicated region
    $region90: #{gconv_forward.1} parent=1 // pred_check
      _
    $region91: #{gconv_forward.1} parent=1 // pred_check_branch
      %5164 = sbr.rel (0) target = $region93
    $region92: #{gconv_forward.1} parent=1 // pred_region
      %s5166 = ssub.s32 32, 32
      %5167 = vsyncadd [#allocation3], %s5166
      %s5169 = sshll.u32 [#allocation2], 4
      %s5170 = int_to_ptr.vmem [resolvable:$true] %s5169
      %5172 = dma.vmem_to_hbm [thread:$0]  %s5170, 32, %s22, [#allocation3]
    $region93: #{gconv_forward.1} parent=1 // pred_fallthru
      _
    // Predicated region
    $region94: #{gconv_forward.1} parent=1 // pred_check
      _
    $region95: #{gconv_forward.1} parent=1 // pred_check_branch
      %5174 = sbr.rel (0) target = $region97
    $region96: #{gconv_forward.1} parent=1 // pred_region
      _
    $region97: #{gconv_forward.1} parent=1 // pred_fallthru
      _
    // Predicated region
    $region98: #{gconv_forward.1} parent=1 // pred_check
      _
    $region99: #{gconv_forward.1} parent=1 // pred_check_branch
      %5176 = sbr.rel (0) target = $region101
    $region100: #{gconv_forward.1} parent=1 // pred_region
      %5177 = dma.done [#allocation3], 32
    $region101: #{gconv_forward.1} parent=1 // pred_fallthru
      _
    %5178 = vsyncpa [#allocation3], 1

</llo_original>
